<compile_context>
chip_gen: v5e
topology: v5e:2x2
jax: 0.10.0
libtpu: 0.0.40
codegen_flags: <defaults>
</compile_context>

<pallas_src>
import jax
import jax.numpy as jnp
from jax.experimental import pallas as pl
from jax.experimental.pallas import tpu as pltpu

HIDDEN = (1024, 256, 64)


def _round_up(n, m):
    return ((n + m - 1) // m) * m


def _cdiv(a, b):
    return -(-a // b)


def _d1_kernel(x_ref,
               w1_ref, b1_ref,
               w2_ref, b2_ref,
               w3_ref, b3_ref,
               w4_ref, b4_ref,
               o_ref):
    # x arrives f32; cast to bf16 in-kernel (no wrapper-side convert HLO).
    x = x_ref[...].astype(jnp.bfloat16)

    # bf16 x bf16 -> f32 accumulate on the MXU; biases added in f32.
    h = jnp.dot(x, w1_ref[...], preferred_element_type=jnp.float32) + b1_ref[...]
    h = jnp.maximum(h, 0.0).astype(jnp.bfloat16)

    h = jnp.dot(h, w2_ref[...], preferred_element_type=jnp.float32) + b2_ref[...]
    h = jnp.maximum(h, 0.0).astype(jnp.bfloat16)

    h = jnp.dot(h, w3_ref[...], preferred_element_type=jnp.float32) + b3_ref[...]
    h = jnp.maximum(h, 0.0).astype(jnp.bfloat16)

    logits = jnp.dot(h, w4_ref[...], preferred_element_type=jnp.float32) + b4_ref[...]

    # Numerically-stable softmax over dim=1 (feature axis). Exact divide: the
    # 8-wide softmax cost is negligible and rows then sum to 1 to f32 precision.
    m = jnp.max(logits, axis=1, keepdims=True)
    e = jnp.exp(logits - m)
    denom = jnp.sum(e, axis=1, keepdims=True)
    o_ref[...] = (e / denom).astype(o_ref.dtype)


def prepare_params(params):
    """Cast weights to bf16 exactly once (outside the hot path); biases stay f32."""
    return tuple((w.astype(jnp.bfloat16), b.astype(jnp.float32)) for (w, b) in params)


def d1_forward(x, prepared_params, *, tile_b=512):
    """Fused MLP + softmax.

    x: (B, gene_size) float32.  prepared_params: output of prepare_params().
    Returns (B, unit) float32.
    """
    B, gene_size = x.shape
    (w1, b1), (w2, b2), (w3, b3), (w4, b4) = prepared_params
    unit = w4.shape[1]

    # Minimal-padding tiling: pick the step count first, then an 8-aligned tile
    # that just covers the batch.  B <= tile_b collapses to a single grid step
    # (ideal for single-TC v5e/v6e).  For large B on v7x an even step count
    # balances the two TensorCores via dimension_semantics=("parallel",).
    num_steps = _cdiv(B, tile_b)
    tile = _round_up(_cdiv(B, num_steps), 8)
    b_pad = num_steps * tile
    if b_pad != B:
        # <= tile-1 (and usually <= 7) padded rows; padded rows see zero input,
        # produce finite softmax values, and are sliced off below.
        x = jnp.pad(x, ((0, b_pad - B), (0, 0)))

    # Weights/biases are resident: constant index_map -> DMA'd once, reused.
    full = lambda shape: pl.BlockSpec(shape, lambda i: (0,) * len(shape))

    out = pl.pallas_call(
        _d1_kernel,
        out_shape=jax.ShapeDtypeStruct((b_pad, unit), jnp.float32),
        grid_spec=pltpu.PrefetchScalarGridSpec(
            num_scalar_prefetch=0,
            grid=(num_steps,),
            in_specs=[
                pl.BlockSpec((tile, gene_size), lambda i: (i, 0)),
                full(w1.shape), full(b1.shape),
                full(w2.shape), full(b2.shape),
                full(w3.shape), full(b3.shape),
                full(w4.shape), full(b4.shape),
            ],
            out_specs=pl.BlockSpec((tile, unit), lambda i: (i, 0)),
        ),
        compiler_params=pltpu.CompilerParams(
            # Megacore-shard the batch axis on v7x; no-op on single-TC chips.
            dimension_semantics=("parallel",),
        ),
    )(x, w1, b1, w2, b2, w3, b3, w4, b4)

    return out[:B]


def init_params(key, gene_size, unit):
    """Deterministic synthetic init (shapes match the nn.Linear layers of D1)."""
    dims = (gene_size,) + HIDDEN + (unit,)
    params = []
    for li, (din, dout) in enumerate(zip(dims[:-1], dims[1:])):
        kw, kb = jax.random.split(jax.random.fold_in(key, li))
        scale = 1.0 / jnp.sqrt(jnp.float32(din))
        w = jax.random.uniform(kw, (din, dout), jnp.float32, -scale, scale)
        b = jax.random.uniform(kb, (1, dout), jnp.float32, -scale, scale)
        params.append((w, b))
    return params


def d1_reference(x, params):
    h = x
    for (w, b) in params[:-1]:
        h = jnp.maximum(h @ w + b, 0.0)
    w, b = params[-1]
    logits = h @ w + b
    return jax.nn.softmax(logits, axis=1)


if __name__ == "__main__":
    gene_size = 64
    unit = 8
    batch = 300          # not a multiple of 8 -> exercises the padding path

    key = jax.random.PRNGKey(0)
    kx, kp = jax.random.split(key)
    x = jax.random.normal(kx, (batch, gene_size), jnp.float32)
    params = init_params(kp, gene_size, unit)

    prepared = prepare_params(params)          # bf16 weight cast hoisted, done once
    out = d1_forward(x, prepared)              # single grid step (300 <= 512)
    jax.block_until_ready(out)

    ref = d1_reference(x, params)
    assert out.shape == (batch, unit)
    # bf16 MXU operands (f32 accumulation) -> loosened tolerance vs f32 reference.
    assert jnp.allclose(out, ref, atol=2e-2, rtol=2e-2)
    # exact divide in the softmax -> rows sum to 1 to f32 precision
    assert jnp.allclose(jnp.sum(out, axis=1), 1.0, atol=1e-3)

    # Also exercise the multi-step (grid > 1) path.
    out2 = d1_forward(x, prepared, tile_b=128)  # 3 steps, tile=104, pad 12 rows
    jax.block_until_ready(out2)
    assert jnp.allclose(out2, ref, atol=2e-2, rtol=2e-2)
    assert jnp.allclose(jnp.sum(out2, axis=1), 1.0, atol=1e-3)

    print("KERNEL_OK")
</pallas_src>

<mosaic_0001>
module attributes {stable_mosaic.version = 11 : i64} {
  func.func @_d1_kernel(%arg0: i32, %arg1: memref<304x64xf32, #tpu.memory_space<vmem>>, %arg2: memref<64x1024xbf16, #tpu.memory_space<vmem>>, %arg3: memref<1x1024xf32, #tpu.memory_space<vmem>>, %arg4: memref<1024x256xbf16, #tpu.memory_space<vmem>>, %arg5: memref<1x256xf32, #tpu.memory_space<vmem>>, %arg6: memref<256x64xbf16, #tpu.memory_space<vmem>>, %arg7: memref<1x64xf32, #tpu.memory_space<vmem>>, %arg8: memref<64x8xbf16, #tpu.memory_space<vmem>>, %arg9: memref<1x8xf32, #tpu.memory_space<vmem>>, %arg10: memref<304x8xf32, #tpu.memory_space<vmem>>) attributes {dimension_semantics = [#tpu.dimension_semantics<parallel>], iteration_bounds = array<i64: 1>, scalar_prefetch = 0 : i64, scratch_operands = 0 : i64, tpu.core_type = #tpu.core_type<tc>, window_params = [{transform_indices = @transform_0, window_bounds = array<i64: 304, 64>}, {pipeline_mode = #tpu.pipeline_mode<synchronous>, transform_indices = @transform_1, window_bounds = array<i64: 64, 1024>}, {pipeline_mode = #tpu.pipeline_mode<synchronous>, transform_indices = @transform_2, window_bounds = array<i64: 1, 1024>}, {pipeline_mode = #tpu.pipeline_mode<synchronous>, transform_indices = @transform_3, window_bounds = array<i64: 1024, 256>}, {pipeline_mode = #tpu.pipeline_mode<synchronous>, transform_indices = @transform_4, window_bounds = array<i64: 1, 256>}, {pipeline_mode = #tpu.pipeline_mode<synchronous>, transform_indices = @transform_5, window_bounds = array<i64: 256, 64>}, {pipeline_mode = #tpu.pipeline_mode<synchronous>, transform_indices = @transform_6, window_bounds = array<i64: 1, 64>}, {pipeline_mode = #tpu.pipeline_mode<synchronous>, transform_indices = @transform_7, window_bounds = array<i64: 64, 8>}, {pipeline_mode = #tpu.pipeline_mode<synchronous>, transform_indices = @transform_8, window_bounds = array<i64: 1, 8>}, {transform_indices = @transform_9, window_bounds = array<i64: 304, 8>}]} {
    %c0 = arith.constant 0 : index
    %c0_0 = arith.constant 0 : index
    %0 = vector.load %arg1[%c0, %c0_0] : memref<304x64xf32, #tpu.memory_space<vmem>>, vector<304x64xf32>
    %1 = arith.truncf %0 : vector<304x64xf32> to vector<304x64xbf16>
    %c0_1 = arith.constant 0 : index
    %c0_2 = arith.constant 0 : index
    %2 = vector.load %arg2[%c0_1, %c0_2] : memref<64x1024xbf16, #tpu.memory_space<vmem>>, vector<64x1024xbf16>
    %cst = arith.constant dense<0.000000e+00> : vector<304x1024xf32>
    %3 = tpu.matmul %1, %2, %cst {dimension_numbers = #tpu.dot_dimension_numbers<[1], [0], [0], [1], [0, 0, 1, 1], [], []>} : vector<304x64xbf16>, vector<64x1024xbf16>, vector<304x1024xf32> -> vector<304x1024xf32>
    %c0_3 = arith.constant 0 : index
    %c0_4 = arith.constant 0 : index
    %4 = vector.load %arg3[%c0_3, %c0_4] : memref<1x1024xf32, #tpu.memory_space<vmem>>, vector<1x1024xf32>
    %5 = vector.broadcast %4 : vector<1x1024xf32> to vector<304x1024xf32>
    %6 = arith.addf %3, %5 : vector<304x1024xf32>
    %cst_5 = arith.constant 0.000000e+00 : f32
    %7 = vector.broadcast %cst_5 : f32 to vector<304x1024xf32>
    %8 = arith.maximumf %6, %7 : vector<304x1024xf32>
    %9 = arith.truncf %8 : vector<304x1024xf32> to vector<304x1024xbf16>
    %c0_6 = arith.constant 0 : index
    %c0_7 = arith.constant 0 : index
    %10 = vector.load %arg4[%c0_6, %c0_7] : memref<1024x256xbf16, #tpu.memory_space<vmem>>, vector<1024x256xbf16>
    %cst_8 = arith.constant dense<0.000000e+00> : vector<304x256xf32>
    %11 = tpu.matmul %9, %10, %cst_8 {dimension_numbers = #tpu.dot_dimension_numbers<[1], [0], [0], [1], [0, 0, 1, 1], [], []>} : vector<304x1024xbf16>, vector<1024x256xbf16>, vector<304x256xf32> -> vector<304x256xf32>
    %c0_9 = arith.constant 0 : index
    %c0_10 = arith.constant 0 : index
    %12 = vector.load %arg5[%c0_9, %c0_10] : memref<1x256xf32, #tpu.memory_space<vmem>>, vector<1x256xf32>
    %13 = vector.broadcast %12 : vector<1x256xf32> to vector<304x256xf32>
    %14 = arith.addf %11, %13 : vector<304x256xf32>
    %cst_11 = arith.constant 0.000000e+00 : f32
    %15 = vector.broadcast %cst_11 : f32 to vector<304x256xf32>
    %16 = arith.maximumf %14, %15 : vector<304x256xf32>
    %17 = arith.truncf %16 : vector<304x256xf32> to vector<304x256xbf16>
    %c0_12 = arith.constant 0 : index
    %c0_13 = arith.constant 0 : index
    %18 = vector.load %arg6[%c0_12, %c0_13] : memref<256x64xbf16, #tpu.memory_space<vmem>>, vector<256x64xbf16>
    %cst_14 = arith.constant dense<0.000000e+00> : vector<304x64xf32>
    %19 = tpu.matmul %17, %18, %cst_14 {dimension_numbers = #tpu.dot_dimension_numbers<[1], [0], [0], [1], [0, 0, 1, 1], [], []>} : vector<304x256xbf16>, vector<256x64xbf16>, vector<304x64xf32> -> vector<304x64xf32>
    %c0_15 = arith.constant 0 : index
    %c0_16 = arith.constant 0 : index
    %20 = vector.load %arg7[%c0_15, %c0_16] : memref<1x64xf32, #tpu.memory_space<vmem>>, vector<1x64xf32>
    %21 = vector.broadcast %20 : vector<1x64xf32> to vector<304x64xf32>
    %22 = arith.addf %19, %21 : vector<304x64xf32>
    %cst_17 = arith.constant 0.000000e+00 : f32
    %23 = vector.broadcast %cst_17 : f32 to vector<304x64xf32>
    %24 = arith.maximumf %22, %23 : vector<304x64xf32>
    %25 = arith.truncf %24 : vector<304x64xf32> to vector<304x64xbf16>
    %c0_18 = arith.constant 0 : index
    %c0_19 = arith.constant 0 : index
    %26 = vector.load %arg8[%c0_18, %c0_19] : memref<64x8xbf16, #tpu.memory_space<vmem>>, vector<64x8xbf16>
    %cst_20 = arith.constant dense<0.000000e+00> : vector<304x8xf32>
    %27 = tpu.matmul %25, %26, %cst_20 {dimension_numbers = #tpu.dot_dimension_numbers<[1], [0], [0], [1], [0, 0, 1, 1], [], []>} : vector<304x64xbf16>, vector<64x8xbf16>, vector<304x8xf32> -> vector<304x8xf32>
    %c0_21 = arith.constant 0 : index
    %c0_22 = arith.constant 0 : index
    %28 = vector.load %arg9[%c0_21, %c0_22] : memref<1x8xf32, #tpu.memory_space<vmem>>, vector<1x8xf32>
    %29 = vector.broadcast %28 : vector<1x8xf32> to vector<304x8xf32>
    %30 = arith.addf %27, %29 : vector<304x8xf32>
    %cst_23 = arith.constant dense<0xFF800000> : vector<304xf32>
    %31 = vector.multi_reduction <maximumf>, %30, %cst_23 [1] : vector<304x8xf32> to vector<304xf32>
    %32 = vector.shape_cast %31 : vector<304xf32> to vector<304x1xf32>
    %33 = vector.broadcast %32 : vector<304x1xf32> to vector<304x8xf32>
    %34 = arith.subf %30, %33 : vector<304x8xf32>
    %35 = math.exp %34 : vector<304x8xf32>
    %cst_24 = arith.constant dense<0.000000e+00> : vector<304xf32>
    %36 = vector.multi_reduction <add>, %35, %cst_24 [1] : vector<304x8xf32> to vector<304xf32>
    %37 = vector.shape_cast %36 : vector<304xf32> to vector<304x1xf32>
    %38 = vector.broadcast %37 : vector<304x1xf32> to vector<304x8xf32>
    %39 = arith.divf %35, %38 : vector<304x8xf32>
    %c0_25 = arith.constant 0 : index
    %c0_26 = arith.constant 0 : index
    %40 = vector.load %arg10[%c0_25, %c0_26] : memref<304x8xf32, #tpu.memory_space<vmem>>, vector<304x8xf32>
    tpu.vector_store %arg10[%c0_25, %c0_26], %39 {strides = array<i32>} : memref<304x8xf32, #tpu.memory_space<vmem>>, vector<304x8xf32>,
    return
  }
  func.func @transform_0(%arg0: i32) -> (i32, i32) {
    %c0_i32 = arith.constant 0 : i32
    %c0_i32_0 = arith.constant 0 : i32
    return %arg0, %c0_i32 : i32, i32
  }
  func.func @transform_1(%arg0: i32) -> (i32, i32) {
    %c0_i32 = arith.constant 0 : i32
    %c0_i32_0 = arith.constant 0 : i32
    %c0_i32_1 = arith.constant 0 : i32
    return %c0_i32, %c0_i32_0 : i32, i32
  }
  func.func @transform_2(%arg0: i32) -> (i32, i32) {
    %c0_i32 = arith.constant 0 : i32
    %c0_i32_0 = arith.constant 0 : i32
    %c0_i32_1 = arith.constant 0 : i32
    return %c0_i32, %c0_i32_0 : i32, i32
  }
  func.func @transform_3(%arg0: i32) -> (i32, i32) {
    %c0_i32 = arith.constant 0 : i32
    %c0_i32_0 = arith.constant 0 : i32
    %c0_i32_1 = arith.constant 0 : i32
    return %c0_i32, %c0_i32_0 : i32, i32
  }
  func.func @transform_4(%arg0: i32) -> (i32, i32) {
    %c0_i32 = arith.constant 0 : i32
    %c0_i32_0 = arith.constant 0 : i32
    %c0_i32_1 = arith.constant 0 : i32
    return %c0_i32, %c0_i32_0 : i32, i32
  }
  func.func @transform_5(%arg0: i32) -> (i32, i32) {
    %c0_i32 = arith.constant 0 : i32
    %c0_i32_0 = arith.constant 0 : i32
    %c0_i32_1 = arith.constant 0 : i32
    return %c0_i32, %c0_i32_0 : i32, i32
  }
  func.func @transform_6(%arg0: i32) -> (i32, i32) {
    %c0_i32 = arith.constant 0 : i32
    %c0_i32_0 = arith.constant 0 : i32
    %c0_i32_1 = arith.constant 0 : i32
    return %c0_i32, %c0_i32_0 : i32, i32
  }
  func.func @transform_7(%arg0: i32) -> (i32, i32) {
    %c0_i32 = arith.constant 0 : i32
    %c0_i32_0 = arith.constant 0 : i32
    %c0_i32_1 = arith.constant 0 : i32
    return %c0_i32, %c0_i32_0 : i32, i32
  }
  func.func @transform_8(%arg0: i32) -> (i32, i32) {
    %c0_i32 = arith.constant 0 : i32
    %c0_i32_0 = arith.constant 0 : i32
    %c0_i32_1 = arith.constant 0 : i32
    return %c0_i32, %c0_i32_0 : i32, i32
  }
  func.func @transform_9(%arg0: i32) -> (i32, i32) {
    %c0_i32 = arith.constant 0 : i32
    %c0_i32_0 = arith.constant 0 : i32
    return %arg0, %c0_i32 : i32, i32
  }
}

</mosaic_0001>

<llo_original>
// kernel: tpu_custom_call.1
$region0: #{tpu_custom_call.1}
  #allocation0 [shape = 'u32[]', space=smem, size = 0x4, offset = 0x4, fixed_abs, tag = 'smem constant byte address 0x4 - core index']
  #allocation1 [shape = 'u32[72,128]{1,0:T(1,128)}', space=vmem, size = 0x9000, scoped, tag = 'internal scratch']
  %s0 = inlined_call_operand.vmem [shape: f32[304,64], index: 0, kind: input, shape index: {}]
  %s1 = inlined_call_operand.vmem [shape: bf16[64,1024], index: 1, kind: input, shape index: {}]
  %s2 = inlined_call_operand.vmem [shape: f32[1,1024], index: 2, kind: input, shape index: {}]
  %s3 = inlined_call_operand.hbm [shape: bf16[1024,256], index: 3, kind: input, shape index: {}]
  %s4 = inlined_call_operand.vmem [shape: f32[1,256], index: 4, kind: input, shape index: {}]
  %s5 = inlined_call_operand.vmem [shape: bf16[256,64], index: 5, kind: input, shape index: {}]
  %s6 = inlined_call_operand.vmem [shape: f32[1,64], index: 6, kind: input, shape index: {}]
  %s7 = inlined_call_operand.vmem [shape: bf16[64,8], index: 7, kind: input, shape index: {}]
  %s8 = inlined_call_operand.vmem [shape: f32[1,8], index: 8, kind: input, shape index: {}]
  %s9 = inlined_call_operand.vmem [shape: f32[304,8], index: 9, kind: output, shape index: {}]
  %s10 = sld [smem:[#allocation0]]
  $region50: #{tpu_custom_call.1} parent=0
    _
  %s12 = ssub.s32 1, %s10
  %s13 = scalar_select 0, %s12, %s10
  $region1: #{tpu_custom_call.1} parent=0
    #allocation2 [shape = 'u8[524288]{0}', space=vmem, size = 0x80000, scoped, tag = 'input window, operand 3, single buffered']
    #allocation3 [shape = 's32[1]{0}', space=sflag, size = 0x4, scoped, tag = 'scoped memory for tpu_custom_call.1']
    %14 = vsyncpa [#allocation3], 0
    // Predicated region
    $region2: #{tpu_custom_call.1} parent=1 // pred_check
      _
    $region3: #{tpu_custom_call.1} parent=1 // pred_check_branch
      %16 = sbr.rel (0) target = $region5
    $region4: #{tpu_custom_call.1} parent=1 // pred_region
      _
    $region5: #{tpu_custom_call.1} parent=1 // pred_fallthru
      _
    // Predicated region
    $region6: #{tpu_custom_call.1} parent=1 // pred_check
      _
    $region7: #{tpu_custom_call.1} parent=1 // pred_check_branch
      %18 = sbr.rel (0) target = $region9
    $region8: #{tpu_custom_call.1} parent=1 // pred_region
      _
    $region9: #{tpu_custom_call.1} parent=1 // pred_fallthru
      _
    // Predicated region
    $region10: #{tpu_custom_call.1} parent=1 // pred_check
      _
    $region11: #{tpu_custom_call.1} parent=1 // pred_check_branch
      %20 = sbr.rel (0) target = $region13
    $region12: #{tpu_custom_call.1} parent=1 // pred_region
      _
    $region13: #{tpu_custom_call.1} parent=1 // pred_fallthru
      _
    // Predicated region
    $region14: #{tpu_custom_call.1} parent=1 // pred_check
      _
    $region15: #{tpu_custom_call.1} parent=1 // pred_check_branch
      %22 = sbr.rel (0) target = $region17
    $region16: #{tpu_custom_call.1} parent=1 // pred_region
      %24 = vsyncadd [#allocation3], 0
      %s25 = sshll.u32 %s3, 4
      %s26 = int_to_ptr.hbm [resolvable:$true] %s25
      %s27 = sshll.u32 [#allocation2], 4
      %s28 = int_to_ptr.vmem [resolvable:$true] %s27
      %33 = dma.hbm_to_vmem [thread:$0]  %s26, 16384, %s28, [#allocation3], 128, 128, 8
    $region17: #{tpu_custom_call.1} parent=1 // pred_fallthru
      _
    // Predicated region
    $region18: #{tpu_custom_call.1} parent=1 // pred_check
      _
    $region19: #{tpu_custom_call.1} parent=1 // pred_check_branch
      %35 = sbr.rel (0) target = $region21
    $region20: #{tpu_custom_call.1} parent=1 // pred_region
      _
    $region21: #{tpu_custom_call.1} parent=1 // pred_fallthru
      _
    // Predicated region
    $region22: #{tpu_custom_call.1} parent=1 // pred_check
      _
    $region23: #{tpu_custom_call.1} parent=1 // pred_check_branch
      %37 = sbr.rel (0) target = $region25
    $region24: #{tpu_custom_call.1} parent=1 // pred_region
      _
    $region25: #{tpu_custom_call.1} parent=1 // pred_fallthru
      _
    // Predicated region
    $region26: #{tpu_custom_call.1} parent=1 // pred_check
      _
    $region27: #{tpu_custom_call.1} parent=1 // pred_check_branch
      %39 = sbr.rel (0) target = $region29
    $region28: #{tpu_custom_call.1} parent=1 // pred_region
      _
    $region29: #{tpu_custom_call.1} parent=1 // pred_fallthru
      _
    // Predicated region
    $region30: #{tpu_custom_call.1} parent=1 // pred_check
      _
    $region31: #{tpu_custom_call.1} parent=1 // pred_check_branch
      %41 = sbr.rel (0) target = $region33
    $region32: #{tpu_custom_call.1} parent=1 // pred_region
      _
    $region33: #{tpu_custom_call.1} parent=1 // pred_fallthru
      _
    // Predicated region
    $region34: #{tpu_custom_call.1} parent=1 // pred_check
      _
    $region35: #{tpu_custom_call.1} parent=1 // pred_check_branch
      %43 = sbr.rel (0) target = $region37
    $region36: #{tpu_custom_call.1} parent=1 // pred_region
      _
    $region37: #{tpu_custom_call.1} parent=1 // pred_fallthru
      _
    // Predicated region
    $region38: #{tpu_custom_call.1} parent=1 // pred_check
      _
    $region39: #{tpu_custom_call.1} parent=1 // pred_check_branch
      %45 = sbr.rel (0) target = $region41
    $region40: #{tpu_custom_call.1} parent=1 // pred_region
      %47 = dma.done [#allocation3], 16384
    $region41: #{tpu_custom_call.1} parent=1 // pred_fallthru
      _
    %v49 = vld [vmem:[%s0] sm:$0xff]
    %v50 = vld [vmem:[%s0 + $0x8] sm:$0xff]
    %v51 = vld [vmem:[%s0 + $0x10] sm:$0xff]
    %v52 = vld [vmem:[%s0 + $0x18] sm:$0xff]
    %v53 = vld [vmem:[%s0 + $0x20] sm:$0xff]
    %v54 = vld [vmem:[%s0 + $0x28] sm:$0xff]
    %v55 = vld [vmem:[%s0 + $0x30] sm:$0xff]
    %v56 = vld [vmem:[%s0 + $0x38] sm:$0xff]
    %v57 = vld [vmem:[%s0 + $0x40] sm:$0xff]
    %v58 = vld [vmem:[%s0 + $0x48] sm:$0xff]
    %v59 = vld [vmem:[%s0 + $0x50] sm:$0xff]
    %v60 = vld [vmem:[%s0 + $0x58] sm:$0xff]
    %v61 = vld [vmem:[%s0 + $0x60] sm:$0xff]
    %v62 = vld [vmem:[%s0 + $0x68] sm:$0xff]
    %v63 = vld [vmem:[%s0 + $0x70] sm:$0xff]
    %v64 = vld [vmem:[%s0 + $0x78] sm:$0xff]
    %v65 = vld [vmem:[%s0 + $0x80] sm:$0xff]
    %v66 = vld [vmem:[%s0 + $0x88] sm:$0xff]
    %v67 = vld [vmem:[%s0 + $0x90] sm:$0xff]
    %v68 = vld [vmem:[%s0 + $0x98] sm:$0xff]
    %v69 = vld [vmem:[%s0 + $0xa0] sm:$0xff]
    %v70 = vld [vmem:[%s0 + $0xa8] sm:$0xff]
    %v71 = vld [vmem:[%s0 + $0xb0] sm:$0xff]
    %v72 = vld [vmem:[%s0 + $0xb8] sm:$0xff]
    %v73 = vld [vmem:[%s0 + $0xc0] sm:$0xff]
    %v74 = vld [vmem:[%s0 + $0xc8] sm:$0xff]
    %v75 = vld [vmem:[%s0 + $0xd0] sm:$0xff]
    %v76 = vld [vmem:[%s0 + $0xd8] sm:$0xff]
    %v77 = vld [vmem:[%s0 + $0xe0] sm:$0xff]
    %v78 = vld [vmem:[%s0 + $0xe8] sm:$0xff]
    %v79 = vld [vmem:[%s0 + $0xf0] sm:$0xff]
    %v80 = vld [vmem:[%s0 + $0xf8] sm:$0xff]
    %v81 = vld [vmem:[%s0 + $0x100] sm:$0xff]
    %v82 = vld [vmem:[%s0 + $0x108] sm:$0xff]
    %v83 = vld [vmem:[%s0 + $0x110] sm:$0xff]
    %v84 = vld [vmem:[%s0 + $0x118] sm:$0xff]
    %v85 = vld [vmem:[%s0 + $0x120] sm:$0xff]
    %v86 = vld [vmem:[%s0 + $0x128] sm:$0xff]
    %v87 = vpack.c.bf16 %v50, %v49
    %v88 = vpack.c.bf16 %v52, %v51
    %v89 = vpack.c.bf16 %v54, %v53
    %v90 = vpack.c.bf16 %v56, %v55
    %v91 = vpack.c.bf16 %v58, %v57
    %v92 = vpack.c.bf16 %v60, %v59
    %v93 = vpack.c.bf16 %v62, %v61
    %v94 = vpack.c.bf16 %v64, %v63
    %v95 = vpack.c.bf16 %v66, %v65
    %v96 = vpack.c.bf16 %v68, %v67
    %v97 = vpack.c.bf16 %v70, %v69
    %v98 = vpack.c.bf16 %v72, %v71
    %v99 = vpack.c.bf16 %v74, %v73
    %v100 = vpack.c.bf16 %v76, %v75
    %v101 = vpack.c.bf16 %v78, %v77
    %v102 = vpack.c.bf16 %v80, %v79
    %v103 = vpack.c.bf16 %v82, %v81
    %v104 = vpack.c.bf16 %v84, %v83
    %v105 = vpack.c.bf16 %v86, %v85
    %v106 = vld [vmem:[%s1] sm:$0xff]
    %v107 = vld [vmem:[%s1 + $0x8] sm:$0xff]
    %v108 = vld [vmem:[%s1 + $0x10] sm:$0xff]
    %v109 = vld [vmem:[%s1 + $0x18] sm:$0xff]
    %v110 = vld [vmem:[%s1 + $0x20] sm:$0xff]
    %v111 = vld [vmem:[%s1 + $0x28] sm:$0xff]
    %v112 = vld [vmem:[%s1 + $0x30] sm:$0xff]
    %v113 = vld [vmem:[%s1 + $0x38] sm:$0xff]
    %v114 = vld [vmem:[%s1 + $0x40] sm:$0xff]
    %v115 = vld [vmem:[%s1 + $0x48] sm:$0xff]
    %v116 = vld [vmem:[%s1 + $0x50] sm:$0xff]
    %v117 = vld [vmem:[%s1 + $0x58] sm:$0xff]
    %v118 = vld [vmem:[%s1 + $0x60] sm:$0xff]
    %v119 = vld [vmem:[%s1 + $0x68] sm:$0xff]
    %v120 = vld [vmem:[%s1 + $0x70] sm:$0xff]
    %v121 = vld [vmem:[%s1 + $0x78] sm:$0xff]
    %v122 = vld [vmem:[%s1 + $0x80] sm:$0xff]
    %v123 = vld [vmem:[%s1 + $0x88] sm:$0xff]
    %v124 = vld [vmem:[%s1 + $0x90] sm:$0xff]
    %v125 = vld [vmem:[%s1 + $0x98] sm:$0xff]
    %v126 = vld [vmem:[%s1 + $0xa0] sm:$0xff]
    %v127 = vld [vmem:[%s1 + $0xa8] sm:$0xff]
    %v128 = vld [vmem:[%s1 + $0xb0] sm:$0xff]
    %v129 = vld [vmem:[%s1 + $0xb8] sm:$0xff]
    %v130 = vld [vmem:[%s1 + $0xc0] sm:$0xff]
    %v131 = vld [vmem:[%s1 + $0xc8] sm:$0xff]
    %v132 = vld [vmem:[%s1 + $0xd0] sm:$0xff]
    %v133 = vld [vmem:[%s1 + $0xd8] sm:$0xff]
    %v134 = vld [vmem:[%s1 + $0xe0] sm:$0xff]
    %v135 = vld [vmem:[%s1 + $0xe8] sm:$0xff]
    %v136 = vld [vmem:[%s1 + $0xf0] sm:$0xff]
    %v137 = vld [vmem:[%s1 + $0xf8] sm:$0xff]
    %v138 = vld [vmem:[%s2] sm:$0xff]
    %v140 = vperm.slane %v138, 0
    %v141 = vperm.slane %v138, 1
    %v142 = vperm.slane %v138, 2
    %v143 = vperm.slane %v138, 3
    %v144 = vperm.slane %v138, 4
    %v145 = vperm.slane %v138, 5
    %v146 = vperm.slane %v138, 6
    %v147 = vperm.slane %v138, 7
    %v188 = vunpack.c.l.b16 %v106
    %v189 = vunpack.c.h.b16 %v106
    %v190 = vunpack.c.l.b16 %v107
    %v191 = vunpack.c.h.b16 %v107
    %v192 = vunpack.c.l.b16 %v108
    %v193 = vunpack.c.h.b16 %v108
    %v194 = vunpack.c.l.b16 %v109
    %v195 = vunpack.c.h.b16 %v109
    %v196 = vunpack.c.l.b16 %v110
    %v197 = vunpack.c.h.b16 %v110
    %v198 = vunpack.c.l.b16 %v111
    %v199 = vunpack.c.h.b16 %v111
    %v200 = vunpack.c.l.b16 %v112
    %v201 = vunpack.c.h.b16 %v112
    %v202 = vunpack.c.l.b16 %v113
    %v203 = vunpack.c.h.b16 %v113
    %v204 = vunpack.c.l.b16 %v114
    %v205 = vunpack.c.h.b16 %v114
    %v206 = vunpack.c.l.b16 %v115
    %v207 = vunpack.c.h.b16 %v115
    %v208 = vunpack.c.l.b16 %v116
    %v209 = vunpack.c.h.b16 %v116
    %v210 = vunpack.c.l.b16 %v117
    %v211 = vunpack.c.h.b16 %v117
    %v212 = vunpack.c.l.b16 %v118
    %v213 = vunpack.c.h.b16 %v118
    %v214 = vunpack.c.l.b16 %v119
    %v215 = vunpack.c.h.b16 %v119
    %v216 = vunpack.c.l.b16 %v120
    %v217 = vunpack.c.h.b16 %v120
    %v218 = vunpack.c.l.b16 %v121
    %v219 = vunpack.c.h.b16 %v121
    %v220 = vunpack.c.l.b16 %v122
    %v221 = vunpack.c.h.b16 %v122
    %v222 = vunpack.c.l.b16 %v123
    %v223 = vunpack.c.h.b16 %v123
    %v224 = vunpack.c.l.b16 %v124
    %v225 = vunpack.c.h.b16 %v124
    %v226 = vunpack.c.l.b16 %v125
    %v227 = vunpack.c.h.b16 %v125
    %v228 = vunpack.c.l.b16 %v126
    %v229 = vunpack.c.h.b16 %v126
    %v230 = vunpack.c.l.b16 %v127
    %v231 = vunpack.c.h.b16 %v127
    %v232 = vunpack.c.l.b16 %v128
    %v233 = vunpack.c.h.b16 %v128
    %v234 = vunpack.c.l.b16 %v129
    %v235 = vunpack.c.h.b16 %v129
    %v236 = vunpack.c.l.b16 %v130
    %v237 = vunpack.c.h.b16 %v130
    %v238 = vunpack.c.l.b16 %v131
    %v239 = vunpack.c.h.b16 %v131
    %v240 = vunpack.c.l.b16 %v132
    %v241 = vunpack.c.h.b16 %v132
    %v242 = vunpack.c.l.b16 %v133
    %v243 = vunpack.c.h.b16 %v133
    %v244 = vunpack.c.l.b16 %v134
    %v245 = vunpack.c.h.b16 %v134
    %v246 = vunpack.c.l.b16 %v135
    %v247 = vunpack.c.h.b16 %v135
    %v248 = vunpack.c.l.b16 %v136
    %v249 = vunpack.c.h.b16 %v136
    %v250 = vunpack.c.l.b16 %v137
    %v251 = vunpack.c.h.b16 %v137
    %v252 = vpack.c.b16 %v196, %v188
    %v253 = vpack.c.b16 %v197, %v189
    %v254 = vpack.c.b16 %v198, %v190
    %v255 = vpack.c.b16 %v199, %v191
    %v256 = vpack.c.b16 %v200, %v192
    %v257 = vpack.c.b16 %v201, %v193
    %v258 = vpack.c.b16 %v202, %v194
    %v259 = vpack.c.b16 %v203, %v195
    %v260 = vpack.c.b16 %v212, %v204
    %v261 = vpack.c.b16 %v213, %v205
    %v262 = vpack.c.b16 %v214, %v206
    %v263 = vpack.c.b16 %v215, %v207
    %v264 = vpack.c.b16 %v216, %v208
    %v265 = vpack.c.b16 %v217, %v209
    %v266 = vpack.c.b16 %v218, %v210
    %v267 = vpack.c.b16 %v219, %v211
    %v268 = vpack.c.b16 %v228, %v220
    %v269 = vpack.c.b16 %v229, %v221
    %v270 = vpack.c.b16 %v230, %v222
    %v271 = vpack.c.b16 %v231, %v223
    %v272 = vpack.c.b16 %v232, %v224
    %v273 = vpack.c.b16 %v233, %v225
    %v274 = vpack.c.b16 %v234, %v226
    %v275 = vpack.c.b16 %v235, %v227
    %v276 = vpack.c.b16 %v244, %v236
    %v277 = vpack.c.b16 %v245, %v237
    %v278 = vpack.c.b16 %v246, %v238
    %v279 = vpack.c.b16 %v247, %v239
    %v280 = vpack.c.b16 %v248, %v240
    %v281 = vpack.c.b16 %v249, %v241
    %v282 = vpack.c.b16 %v250, %v242
    %v283 = vpack.c.b16 %v251, %v243
    %vm316 = vcmask 523264
    %v318 = vsel %vm316, %v87, 0
    %v321 = vsel %vm316, %v88, 0
    %v324 = vsel %vm316, %v89, 0
    %v327 = vsel %vm316, %v90, 0
    %v330 = vsel %vm316, %v91, 0
    %v333 = vsel %vm316, %v92, 0
    %v336 = vsel %vm316, %v93, 0
    %v339 = vsel %vm316, %v94, 0
    %v342 = vsel %vm316, %v95, 0
    %v345 = vsel %vm316, %v96, 0
    %v348 = vsel %vm316, %v97, 0
    %v351 = vsel %vm316, %v98, 0
    %v354 = vsel %vm316, %v99, 0
    %v357 = vsel %vm316, %v100, 0
    %v360 = vsel %vm316, %v101, 0
    %v363 = vsel %vm316, %v102, 0
    %v366 = vsel %vm316, %v103, 0
    %v369 = vsel %vm316, %v104, 0
    %v372 = vsel %vm316, %v105, 0
    %374 = vmatpush.bf16.msra.mxu0 0
    %375 = vmatpush.bf16.msra.mxu0 0
    %376 = vmatpush.bf16.msra.mxu0 0
    %377 = vmatpush.bf16.msra.mxu0 0
    %378 = vmatpush.bf16.msra.mxu0 %v276
    %379 = vmatpush.bf16.msra.mxu0 %v268
    %380 = vmatpush.bf16.msra.mxu0 %v260
    %381 = vmatpush.bf16.msra.mxu0 %v252
    %382 = vmatmul.bf16.gmra.mxu0 %v318
    %v383 = vpop.f32.mrf.mxu0
    %v384 = vadd.f32 %v140, %v383
    %v385 = vpop.f32.mrf.mxu0
    %v386 = vadd.f32 %v140, %v385
    %387 = vmatmul.bf16.gmra.mxu0 %v321
    %v388 = vpop.f32.mrf.mxu0
    %v389 = vadd.f32 %v140, %v388
    %v390 = vpop.f32.mrf.mxu0
    %v391 = vadd.f32 %v140, %v390
    %392 = vmatmul.bf16.gmra.mxu0 %v324
    %v393 = vpop.f32.mrf.mxu0
    %v394 = vadd.f32 %v140, %v393
    %v395 = vpop.f32.mrf.mxu0
    %v396 = vadd.f32 %v140, %v395
    %397 = vmatmul.bf16.gmra.mxu0 %v327
    %v398 = vpop.f32.mrf.mxu0
    %v399 = vadd.f32 %v140, %v398
    %v400 = vpop.f32.mrf.mxu0
    %v401 = vadd.f32 %v140, %v400
    %402 = vmatmul.bf16.gmra.mxu0 %v330
    %v403 = vpop.f32.mrf.mxu0
    %v404 = vadd.f32 %v140, %v403
    %v405 = vpop.f32.mrf.mxu0
    %v406 = vadd.f32 %v140, %v405
    %407 = vmatmul.bf16.gmra.mxu0 %v333
    %v408 = vpop.f32.mrf.mxu0
    %v409 = vadd.f32 %v140, %v408
    %v410 = vpop.f32.mrf.mxu0
    %v411 = vadd.f32 %v140, %v410
    %412 = vmatmul.bf16.gmra.mxu0 %v336
    %v413 = vpop.f32.mrf.mxu0
    %v414 = vadd.f32 %v140, %v413
    %v415 = vpop.f32.mrf.mxu0
    %v416 = vadd.f32 %v140, %v415
    %417 = vmatmul.bf16.gmra.mxu0 %v339
    %v418 = vpop.f32.mrf.mxu0
    %v419 = vadd.f32 %v140, %v418
    %v420 = vpop.f32.mrf.mxu0
    %v421 = vadd.f32 %v140, %v420
    %422 = vmatmul.bf16.gmra.mxu0 %v342
    %v423 = vpop.f32.mrf.mxu0
    %v424 = vadd.f32 %v140, %v423
    %v425 = vpop.f32.mrf.mxu0
    %v426 = vadd.f32 %v140, %v425
    %427 = vmatmul.bf16.gmra.mxu0 %v345
    %v428 = vpop.f32.mrf.mxu0
    %v429 = vadd.f32 %v140, %v428
    %v430 = vpop.f32.mrf.mxu0
    %v431 = vadd.f32 %v140, %v430
    %432 = vmatmul.bf16.gmra.mxu0 %v348
    %v433 = vpop.f32.mrf.mxu0
    %v434 = vadd.f32 %v140, %v433
    %v435 = vpop.f32.mrf.mxu0
    %v436 = vadd.f32 %v140, %v435
    %437 = vmatmul.bf16.gmra.mxu0 %v351
    %v438 = vpop.f32.mrf.mxu0
    %v439 = vadd.f32 %v140, %v438
    %v440 = vpop.f32.mrf.mxu0
    %v441 = vadd.f32 %v140, %v440
    %442 = vmatmul.bf16.gmra.mxu0 %v354
    %v443 = vpop.f32.mrf.mxu0
    %v444 = vadd.f32 %v140, %v443
    %v445 = vpop.f32.mrf.mxu0
    %v446 = vadd.f32 %v140, %v445
    %447 = vmatmul.bf16.gmra.mxu0 %v357
    %v448 = vpop.f32.mrf.mxu0
    %v449 = vadd.f32 %v140, %v448
    %v450 = vpop.f32.mrf.mxu0
    %v451 = vadd.f32 %v140, %v450
    %452 = vmatmul.bf16.gmra.mxu0 %v360
    %v453 = vpop.f32.mrf.mxu0
    %v454 = vadd.f32 %v140, %v453
    %v455 = vpop.f32.mrf.mxu0
    %v456 = vadd.f32 %v140, %v455
    %457 = vmatmul.bf16.gmra.mxu0 %v363
    %v458 = vpop.f32.mrf.mxu0
    %v459 = vadd.f32 %v140, %v458
    %v460 = vpop.f32.mrf.mxu0
    %v461 = vadd.f32 %v140, %v460
    %462 = vmatmul.bf16.gmra.mxu0 %v366
    %v463 = vpop.f32.mrf.mxu0
    %v464 = vadd.f32 %v140, %v463
    %v465 = vpop.f32.mrf.mxu0
    %v466 = vadd.f32 %v140, %v465
    %467 = vmatmul.bf16.gmra.mxu0 %v369
    %v468 = vpop.f32.mrf.mxu0
    %v469 = vadd.f32 %v140, %v468
    %v470 = vpop.f32.mrf.mxu0
    %v471 = vadd.f32 %v140, %v470
    %472 = vmatmul.bf16.gmra.mxu0 %v372
    %v473 = vpop.f32.mrf.mxu0
    %v474 = vadd.f32 %v140, %v473
    %v475 = vpop.f32.mrf.mxu0
    %v476 = vadd.f32 %v140, %v475
    %477 = vdwg.mxu0
    %478 = vmatpush.bf16.msra.mxu0 0
    %479 = vmatpush.bf16.msra.mxu0 0
    %480 = vmatpush.bf16.msra.mxu0 0
    %481 = vmatpush.bf16.msra.mxu0 0
    %482 = vmatpush.bf16.msra.mxu0 %v277
    %483 = vmatpush.bf16.msra.mxu0 %v269
    %484 = vmatpush.bf16.msra.mxu0 %v261
    %485 = vmatpush.bf16.msra.mxu0 %v253
    %486 = vmatmul.bf16.gmra.mxu0 %v318
    %v487 = vpop.f32.mrf.mxu0
    %v488 = vadd.f32 %v141, %v487
    %v489 = vpop.f32.mrf.mxu0
    %v490 = vadd.f32 %v141, %v489
    %491 = vmatmul.bf16.gmra.mxu0 %v321
    %v492 = vpop.f32.mrf.mxu0
    %v493 = vadd.f32 %v141, %v492
    %v494 = vpop.f32.mrf.mxu0
    %v495 = vadd.f32 %v141, %v494
    %496 = vmatmul.bf16.gmra.mxu0 %v324
    %v497 = vpop.f32.mrf.mxu0
    %v498 = vadd.f32 %v141, %v497
    %v499 = vpop.f32.mrf.mxu0
    %v500 = vadd.f32 %v141, %v499
    %501 = vmatmul.bf16.gmra.mxu0 %v327
    %v502 = vpop.f32.mrf.mxu0
    %v503 = vadd.f32 %v141, %v502
    %v504 = vpop.f32.mrf.mxu0
    %v505 = vadd.f32 %v141, %v504
    %506 = vmatmul.bf16.gmra.mxu0 %v330
    %v507 = vpop.f32.mrf.mxu0
    %v508 = vadd.f32 %v141, %v507
    %v509 = vpop.f32.mrf.mxu0
    %v510 = vadd.f32 %v141, %v509
    %511 = vmatmul.bf16.gmra.mxu0 %v333
    %v512 = vpop.f32.mrf.mxu0
    %v513 = vadd.f32 %v141, %v512
    %v514 = vpop.f32.mrf.mxu0
    %v515 = vadd.f32 %v141, %v514
    %516 = vmatmul.bf16.gmra.mxu0 %v336
    %v517 = vpop.f32.mrf.mxu0
    %v518 = vadd.f32 %v141, %v517
    %v519 = vpop.f32.mrf.mxu0
    %v520 = vadd.f32 %v141, %v519
    %521 = vmatmul.bf16.gmra.mxu0 %v339
    %v522 = vpop.f32.mrf.mxu0
    %v523 = vadd.f32 %v141, %v522
    %v524 = vpop.f32.mrf.mxu0
    %v525 = vadd.f32 %v141, %v524
    %526 = vmatmul.bf16.gmra.mxu0 %v342
    %v527 = vpop.f32.mrf.mxu0
    %v528 = vadd.f32 %v141, %v527
    %v529 = vpop.f32.mrf.mxu0
    %v530 = vadd.f32 %v141, %v529
    %531 = vmatmul.bf16.gmra.mxu0 %v345
    %v532 = vpop.f32.mrf.mxu0
    %v533 = vadd.f32 %v141, %v532
    %v534 = vpop.f32.mrf.mxu0
    %v535 = vadd.f32 %v141, %v534
    %536 = vmatmul.bf16.gmra.mxu0 %v348
    %v537 = vpop.f32.mrf.mxu0
    %v538 = vadd.f32 %v141, %v537
    %v539 = vpop.f32.mrf.mxu0
    %v540 = vadd.f32 %v141, %v539
    %541 = vmatmul.bf16.gmra.mxu0 %v351
    %v542 = vpop.f32.mrf.mxu0
    %v543 = vadd.f32 %v141, %v542
    %v544 = vpop.f32.mrf.mxu0
    %v545 = vadd.f32 %v141, %v544
    %546 = vmatmul.bf16.gmra.mxu0 %v354
    %v547 = vpop.f32.mrf.mxu0
    %v548 = vadd.f32 %v141, %v547
    %v549 = vpop.f32.mrf.mxu0
    %v550 = vadd.f32 %v141, %v549
    %551 = vmatmul.bf16.gmra.mxu0 %v357
    %v552 = vpop.f32.mrf.mxu0
    %v553 = vadd.f32 %v141, %v552
    %v554 = vpop.f32.mrf.mxu0
    %v555 = vadd.f32 %v141, %v554
    %556 = vmatmul.bf16.gmra.mxu0 %v360
    %v557 = vpop.f32.mrf.mxu0
    %v558 = vadd.f32 %v141, %v557
    %v559 = vpop.f32.mrf.mxu0
    %v560 = vadd.f32 %v141, %v559
    %561 = vmatmul.bf16.gmra.mxu0 %v363
    %v562 = vpop.f32.mrf.mxu0
    %v563 = vadd.f32 %v141, %v562
    %v564 = vpop.f32.mrf.mxu0
    %v565 = vadd.f32 %v141, %v564
    %566 = vmatmul.bf16.gmra.mxu0 %v366
    %v567 = vpop.f32.mrf.mxu0
    %v568 = vadd.f32 %v141, %v567
    %v569 = vpop.f32.mrf.mxu0
    %v570 = vadd.f32 %v141, %v569
    %571 = vmatmul.bf16.gmra.mxu0 %v369
    %v572 = vpop.f32.mrf.mxu0
    %v573 = vadd.f32 %v141, %v572
    %v574 = vpop.f32.mrf.mxu0
    %v575 = vadd.f32 %v141, %v574
    %576 = vmatmul.bf16.gmra.mxu0 %v372
    %v577 = vpop.f32.mrf.mxu0
    %v578 = vadd.f32 %v141, %v577
    %v579 = vpop.f32.mrf.mxu0
    %v580 = vadd.f32 %v141, %v579
    %581 = vdwg.mxu0
    %582 = vmatpush.bf16.msra.mxu0 0
    %583 = vmatpush.bf16.msra.mxu0 0
    %584 = vmatpush.bf16.msra.mxu0 0
    %585 = vmatpush.bf16.msra.mxu0 0
    %586 = vmatpush.bf16.msra.mxu0 %v278
    %587 = vmatpush.bf16.msra.mxu0 %v270
    %588 = vmatpush.bf16.msra.mxu0 %v262
    %589 = vmatpush.bf16.msra.mxu0 %v254
    %590 = vmatmul.bf16.gmra.mxu0 %v318
    %v591 = vpop.f32.mrf.mxu0
    %v592 = vadd.f32 %v142, %v591
    %v593 = vpop.f32.mrf.mxu0
    %v594 = vadd.f32 %v142, %v593
    %595 = vmatmul.bf16.gmra.mxu0 %v321
    %v596 = vpop.f32.mrf.mxu0
    %v597 = vadd.f32 %v142, %v596
    %v598 = vpop.f32.mrf.mxu0
    %v599 = vadd.f32 %v142, %v598
    %600 = vmatmul.bf16.gmra.mxu0 %v324
    %v601 = vpop.f32.mrf.mxu0
    %v602 = vadd.f32 %v142, %v601
    %v603 = vpop.f32.mrf.mxu0
    %v604 = vadd.f32 %v142, %v603
    %605 = vmatmul.bf16.gmra.mxu0 %v327
    %v606 = vpop.f32.mrf.mxu0
    %v607 = vadd.f32 %v142, %v606
    %v608 = vpop.f32.mrf.mxu0
    %v609 = vadd.f32 %v142, %v608
    %610 = vmatmul.bf16.gmra.mxu0 %v330
    %v611 = vpop.f32.mrf.mxu0
    %v612 = vadd.f32 %v142, %v611
    %v613 = vpop.f32.mrf.mxu0
    %v614 = vadd.f32 %v142, %v613
    %615 = vmatmul.bf16.gmra.mxu0 %v333
    %v616 = vpop.f32.mrf.mxu0
    %v617 = vadd.f32 %v142, %v616
    %v618 = vpop.f32.mrf.mxu0
    %v619 = vadd.f32 %v142, %v618
    %620 = vmatmul.bf16.gmra.mxu0 %v336
    %v621 = vpop.f32.mrf.mxu0
    %v622 = vadd.f32 %v142, %v621
    %v623 = vpop.f32.mrf.mxu0
    %v624 = vadd.f32 %v142, %v623
    %625 = vmatmul.bf16.gmra.mxu0 %v339
    %v626 = vpop.f32.mrf.mxu0
    %v627 = vadd.f32 %v142, %v626
    %v628 = vpop.f32.mrf.mxu0
    %v629 = vadd.f32 %v142, %v628
    %630 = vmatmul.bf16.gmra.mxu0 %v342
    %v631 = vpop.f32.mrf.mxu0
    %v632 = vadd.f32 %v142, %v631
    %v633 = vpop.f32.mrf.mxu0
    %v634 = vadd.f32 %v142, %v633
    %635 = vmatmul.bf16.gmra.mxu0 %v345
    %v636 = vpop.f32.mrf.mxu0
    %v637 = vadd.f32 %v142, %v636
    %v638 = vpop.f32.mrf.mxu0
    %v639 = vadd.f32 %v142, %v638
    %640 = vmatmul.bf16.gmra.mxu0 %v348
    %v641 = vpop.f32.mrf.mxu0
    %v642 = vadd.f32 %v142, %v641
    %v643 = vpop.f32.mrf.mxu0
    %v644 = vadd.f32 %v142, %v643
    %645 = vmatmul.bf16.gmra.mxu0 %v351
    %v646 = vpop.f32.mrf.mxu0
    %v647 = vadd.f32 %v142, %v646
    %v648 = vpop.f32.mrf.mxu0
    %v649 = vadd.f32 %v142, %v648
    %650 = vmatmul.bf16.gmra.mxu0 %v354
    %v651 = vpop.f32.mrf.mxu0
    %v652 = vadd.f32 %v142, %v651
    %v653 = vpop.f32.mrf.mxu0
    %v654 = vadd.f32 %v142, %v653
    %655 = vmatmul.bf16.gmra.mxu0 %v357
    %v656 = vpop.f32.mrf.mxu0
    %v657 = vadd.f32 %v142, %v656
    %v658 = vpop.f32.mrf.mxu0
    %v659 = vadd.f32 %v142, %v658
    %660 = vmatmul.bf16.gmra.mxu0 %v360
    %v661 = vpop.f32.mrf.mxu0
    %v662 = vadd.f32 %v142, %v661
    %v663 = vpop.f32.mrf.mxu0
    %v664 = vadd.f32 %v142, %v663
    %665 = vmatmul.bf16.gmra.mxu0 %v363
    %v666 = vpop.f32.mrf.mxu0
    %v667 = vadd.f32 %v142, %v666
    %v668 = vpop.f32.mrf.mxu0
    %v669 = vadd.f32 %v142, %v668
    %670 = vmatmul.bf16.gmra.mxu0 %v366
    %v671 = vpop.f32.mrf.mxu0
    %v672 = vadd.f32 %v142, %v671
    %v673 = vpop.f32.mrf.mxu0
    %v674 = vadd.f32 %v142, %v673
    %675 = vmatmul.bf16.gmra.mxu0 %v369
    %v676 = vpop.f32.mrf.mxu0
    %v677 = vadd.f32 %v142, %v676
    %v678 = vpop.f32.mrf.mxu0
    %v679 = vadd.f32 %v142, %v678
    %680 = vmatmul.bf16.gmra.mxu0 %v372
    %v681 = vpop.f32.mrf.mxu0
    %v682 = vadd.f32 %v142, %v681
    %v683 = vpop.f32.mrf.mxu0
    %v684 = vadd.f32 %v142, %v683
    %685 = vdwg.mxu0
    %686 = vmatpush.bf16.msra.mxu0 0
    %687 = vmatpush.bf16.msra.mxu0 0
    %688 = vmatpush.bf16.msra.mxu0 0
    %689 = vmatpush.bf16.msra.mxu0 0
    %690 = vmatpush.bf16.msra.mxu0 %v279
    %691 = vmatpush.bf16.msra.mxu0 %v271
    %692 = vmatpush.bf16.msra.mxu0 %v263
    %693 = vmatpush.bf16.msra.mxu0 %v255
    %694 = vmatmul.bf16.gmra.mxu0 %v318
    %v695 = vpop.f32.mrf.mxu0
    %v696 = vadd.f32 %v143, %v695
    %v697 = vpop.f32.mrf.mxu0
    %v698 = vadd.f32 %v143, %v697
    %699 = vmatmul.bf16.gmra.mxu0 %v321
    %v700 = vpop.f32.mrf.mxu0
    %v701 = vadd.f32 %v143, %v700
    %v702 = vpop.f32.mrf.mxu0
    %v703 = vadd.f32 %v143, %v702
    %704 = vmatmul.bf16.gmra.mxu0 %v324
    %v705 = vpop.f32.mrf.mxu0
    %v706 = vadd.f32 %v143, %v705
    %v707 = vpop.f32.mrf.mxu0
    %v708 = vadd.f32 %v143, %v707
    %709 = vmatmul.bf16.gmra.mxu0 %v327
    %v710 = vpop.f32.mrf.mxu0
    %v711 = vadd.f32 %v143, %v710
    %v712 = vpop.f32.mrf.mxu0
    %v713 = vadd.f32 %v143, %v712
    %714 = vmatmul.bf16.gmra.mxu0 %v330
    %v715 = vpop.f32.mrf.mxu0
    %v716 = vadd.f32 %v143, %v715
    %v717 = vpop.f32.mrf.mxu0
    %v718 = vadd.f32 %v143, %v717
    %719 = vmatmul.bf16.gmra.mxu0 %v333
    %v720 = vpop.f32.mrf.mxu0
    %v721 = vadd.f32 %v143, %v720
    %v722 = vpop.f32.mrf.mxu0
    %v723 = vadd.f32 %v143, %v722
    %724 = vmatmul.bf16.gmra.mxu0 %v336
    %v725 = vpop.f32.mrf.mxu0
    %v726 = vadd.f32 %v143, %v725
    %v727 = vpop.f32.mrf.mxu0
    %v728 = vadd.f32 %v143, %v727
    %729 = vmatmul.bf16.gmra.mxu0 %v339
    %v730 = vpop.f32.mrf.mxu0
    %v731 = vadd.f32 %v143, %v730
    %v732 = vpop.f32.mrf.mxu0
    %v733 = vadd.f32 %v143, %v732
    %734 = vmatmul.bf16.gmra.mxu0 %v342
    %v735 = vpop.f32.mrf.mxu0
    %v736 = vadd.f32 %v143, %v735
    %v737 = vpop.f32.mrf.mxu0
    %v738 = vadd.f32 %v143, %v737
    %739 = vmatmul.bf16.gmra.mxu0 %v345
    %v740 = vpop.f32.mrf.mxu0
    %v741 = vadd.f32 %v143, %v740
    %v742 = vpop.f32.mrf.mxu0
    %v743 = vadd.f32 %v143, %v742
    %744 = vmatmul.bf16.gmra.mxu0 %v348
    %v745 = vpop.f32.mrf.mxu0
    %v746 = vadd.f32 %v143, %v745
    %v747 = vpop.f32.mrf.mxu0
    %v748 = vadd.f32 %v143, %v747
    %749 = vmatmul.bf16.gmra.mxu0 %v351
    %v750 = vpop.f32.mrf.mxu0
    %v751 = vadd.f32 %v143, %v750
    %v752 = vpop.f32.mrf.mxu0
    %v753 = vadd.f32 %v143, %v752
    %754 = vmatmul.bf16.gmra.mxu0 %v354
    %v755 = vpop.f32.mrf.mxu0
    %v756 = vadd.f32 %v143, %v755
    %v757 = vpop.f32.mrf.mxu0
    %v758 = vadd.f32 %v143, %v757
    %759 = vmatmul.bf16.gmra.mxu0 %v357
    %v760 = vpop.f32.mrf.mxu0
    %v761 = vadd.f32 %v143, %v760
    %v762 = vpop.f32.mrf.mxu0
    %v763 = vadd.f32 %v143, %v762
    %764 = vmatmul.bf16.gmra.mxu0 %v360
    %v765 = vpop.f32.mrf.mxu0
    %v766 = vadd.f32 %v143, %v765
    %v767 = vpop.f32.mrf.mxu0
    %v768 = vadd.f32 %v143, %v767
    %769 = vmatmul.bf16.gmra.mxu0 %v363
    %v770 = vpop.f32.mrf.mxu0
    %v771 = vadd.f32 %v143, %v770
    %v772 = vpop.f32.mrf.mxu0
    %v773 = vadd.f32 %v143, %v772
    %774 = vmatmul.bf16.gmra.mxu0 %v366
    %v775 = vpop.f32.mrf.mxu0
    %v776 = vadd.f32 %v143, %v775
    %v777 = vpop.f32.mrf.mxu0
    %v778 = vadd.f32 %v143, %v777
    %779 = vmatmul.bf16.gmra.mxu0 %v369
    %v780 = vpop.f32.mrf.mxu0
    %v781 = vadd.f32 %v143, %v780
    %v782 = vpop.f32.mrf.mxu0
    %v783 = vadd.f32 %v143, %v782
    %784 = vmatmul.bf16.gmra.mxu0 %v372
    %v785 = vpop.f32.mrf.mxu0
    %v786 = vadd.f32 %v143, %v785
    %v787 = vpop.f32.mrf.mxu0
    %v788 = vadd.f32 %v143, %v787
    %789 = vdwg.mxu0
    %790 = vmatpush.bf16.msra.mxu0 0
    %791 = vmatpush.bf16.msra.mxu0 0
    %792 = vmatpush.bf16.msra.mxu0 0
    %793 = vmatpush.bf16.msra.mxu0 0
    %794 = vmatpush.bf16.msra.mxu0 %v280
    %795 = vmatpush.bf16.msra.mxu0 %v272
    %796 = vmatpush.bf16.msra.mxu0 %v264
    %797 = vmatpush.bf16.msra.mxu0 %v256
    %798 = vmatmul.bf16.gmra.mxu0 %v318
    %v799 = vpop.f32.mrf.mxu0
    %v800 = vadd.f32 %v144, %v799
    %v801 = vpop.f32.mrf.mxu0
    %v802 = vadd.f32 %v144, %v801
    %803 = vmatmul.bf16.gmra.mxu0 %v321
    %v804 = vpop.f32.mrf.mxu0
    %v805 = vadd.f32 %v144, %v804
    %v806 = vpop.f32.mrf.mxu0
    %v807 = vadd.f32 %v144, %v806
    %808 = vmatmul.bf16.gmra.mxu0 %v324
    %v809 = vpop.f32.mrf.mxu0
    %v810 = vadd.f32 %v144, %v809
    %v811 = vpop.f32.mrf.mxu0
    %v812 = vadd.f32 %v144, %v811
    %813 = vmatmul.bf16.gmra.mxu0 %v327
    %v814 = vpop.f32.mrf.mxu0
    %v815 = vadd.f32 %v144, %v814
    %v816 = vpop.f32.mrf.mxu0
    %v817 = vadd.f32 %v144, %v816
    %818 = vmatmul.bf16.gmra.mxu0 %v330
    %v819 = vpop.f32.mrf.mxu0
    %v820 = vadd.f32 %v144, %v819
    %v821 = vpop.f32.mrf.mxu0
    %v822 = vadd.f32 %v144, %v821
    %823 = vmatmul.bf16.gmra.mxu0 %v333
    %v824 = vpop.f32.mrf.mxu0
    %v825 = vadd.f32 %v144, %v824
    %v826 = vpop.f32.mrf.mxu0
    %v827 = vadd.f32 %v144, %v826
    %828 = vmatmul.bf16.gmra.mxu0 %v336
    %v829 = vpop.f32.mrf.mxu0
    %v830 = vadd.f32 %v144, %v829
    %v831 = vpop.f32.mrf.mxu0
    %v832 = vadd.f32 %v144, %v831
    %833 = vmatmul.bf16.gmra.mxu0 %v339
    %v834 = vpop.f32.mrf.mxu0
    %v835 = vadd.f32 %v144, %v834
    %v836 = vpop.f32.mrf.mxu0
    %v837 = vadd.f32 %v144, %v836
    %838 = vmatmul.bf16.gmra.mxu0 %v342
    %v839 = vpop.f32.mrf.mxu0
    %v840 = vadd.f32 %v144, %v839
    %v841 = vpop.f32.mrf.mxu0
    %v842 = vadd.f32 %v144, %v841
    %843 = vmatmul.bf16.gmra.mxu0 %v345
    %v844 = vpop.f32.mrf.mxu0
    %v845 = vadd.f32 %v144, %v844
    %v846 = vpop.f32.mrf.mxu0
    %v847 = vadd.f32 %v144, %v846
    %848 = vmatmul.bf16.gmra.mxu0 %v348
    %v849 = vpop.f32.mrf.mxu0
    %v850 = vadd.f32 %v144, %v849
    %v851 = vpop.f32.mrf.mxu0
    %v852 = vadd.f32 %v144, %v851
    %853 = vmatmul.bf16.gmra.mxu0 %v351
    %v854 = vpop.f32.mrf.mxu0
    %v855 = vadd.f32 %v144, %v854
    %v856 = vpop.f32.mrf.mxu0
    %v857 = vadd.f32 %v144, %v856
    %858 = vmatmul.bf16.gmra.mxu0 %v354
    %v859 = vpop.f32.mrf.mxu0
    %v860 = vadd.f32 %v144, %v859
    %v861 = vpop.f32.mrf.mxu0
    %v862 = vadd.f32 %v144, %v861
    %863 = vmatmul.bf16.gmra.mxu0 %v357
    %v864 = vpop.f32.mrf.mxu0
    %v865 = vadd.f32 %v144, %v864
    %v866 = vpop.f32.mrf.mxu0
    %v867 = vadd.f32 %v144, %v866
    %868 = vmatmul.bf16.gmra.mxu0 %v360
    %v869 = vpop.f32.mrf.mxu0
    %v870 = vadd.f32 %v144, %v869
    %v871 = vpop.f32.mrf.mxu0
    %v872 = vadd.f32 %v144, %v871
    %873 = vmatmul.bf16.gmra.mxu0 %v363
    %v874 = vpop.f32.mrf.mxu0
    %v875 = vadd.f32 %v144, %v874
    %v876 = vpop.f32.mrf.mxu0
    %v877 = vadd.f32 %v144, %v876
    %878 = vmatmul.bf16.gmra.mxu0 %v366
    %v879 = vpop.f32.mrf.mxu0
    %v880 = vadd.f32 %v144, %v879
    %v881 = vpop.f32.mrf.mxu0
    %v882 = vadd.f32 %v144, %v881
    %883 = vmatmul.bf16.gmra.mxu0 %v369
    %v884 = vpop.f32.mrf.mxu0
    %v885 = vadd.f32 %v144, %v884
    %v886 = vpop.f32.mrf.mxu0
    %v887 = vadd.f32 %v144, %v886
    %888 = vmatmul.bf16.gmra.mxu0 %v372
    %v889 = vpop.f32.mrf.mxu0
    %v890 = vadd.f32 %v144, %v889
    %v891 = vpop.f32.mrf.mxu0
    %v892 = vadd.f32 %v144, %v891
    %893 = vdwg.mxu0
    %894 = vmatpush.bf16.msra.mxu0 0
    %895 = vmatpush.bf16.msra.mxu0 0
    %896 = vmatpush.bf16.msra.mxu0 0
    %897 = vmatpush.bf16.msra.mxu0 0
    %898 = vmatpush.bf16.msra.mxu0 %v281
    %899 = vmatpush.bf16.msra.mxu0 %v273
    %900 = vmatpush.bf16.msra.mxu0 %v265
    %901 = vmatpush.bf16.msra.mxu0 %v257
    %902 = vmatmul.bf16.gmra.mxu0 %v318
    %v903 = vpop.f32.mrf.mxu0
    %v904 = vadd.f32 %v145, %v903
    %v905 = vpop.f32.mrf.mxu0
    %v906 = vadd.f32 %v145, %v905
    %907 = vmatmul.bf16.gmra.mxu0 %v321
    %v908 = vpop.f32.mrf.mxu0
    %v909 = vadd.f32 %v145, %v908
    %v910 = vpop.f32.mrf.mxu0
    %v911 = vadd.f32 %v145, %v910
    %912 = vmatmul.bf16.gmra.mxu0 %v324
    %v913 = vpop.f32.mrf.mxu0
    %v914 = vadd.f32 %v145, %v913
    %v915 = vpop.f32.mrf.mxu0
    %v916 = vadd.f32 %v145, %v915
    %917 = vmatmul.bf16.gmra.mxu0 %v327
    %v918 = vpop.f32.mrf.mxu0
    %v919 = vadd.f32 %v145, %v918
    %v920 = vpop.f32.mrf.mxu0
    %v921 = vadd.f32 %v145, %v920
    %922 = vmatmul.bf16.gmra.mxu0 %v330
    %v923 = vpop.f32.mrf.mxu0
    %v924 = vadd.f32 %v145, %v923
    %v925 = vpop.f32.mrf.mxu0
    %v926 = vadd.f32 %v145, %v925
    %927 = vmatmul.bf16.gmra.mxu0 %v333
    %v928 = vpop.f32.mrf.mxu0
    %v929 = vadd.f32 %v145, %v928
    %v930 = vpop.f32.mrf.mxu0
    %v931 = vadd.f32 %v145, %v930
    %932 = vmatmul.bf16.gmra.mxu0 %v336
    %v933 = vpop.f32.mrf.mxu0
    %v934 = vadd.f32 %v145, %v933
    %v935 = vpop.f32.mrf.mxu0
    %v936 = vadd.f32 %v145, %v935
    %937 = vmatmul.bf16.gmra.mxu0 %v339
    %v938 = vpop.f32.mrf.mxu0
    %v939 = vadd.f32 %v145, %v938
    %v940 = vpop.f32.mrf.mxu0
    %v941 = vadd.f32 %v145, %v940
    %942 = vmatmul.bf16.gmra.mxu0 %v342
    %v943 = vpop.f32.mrf.mxu0
    %v944 = vadd.f32 %v145, %v943
    %v945 = vpop.f32.mrf.mxu0
    %v946 = vadd.f32 %v145, %v945
    %947 = vmatmul.bf16.gmra.mxu0 %v345
    %v948 = vpop.f32.mrf.mxu0
    %v949 = vadd.f32 %v145, %v948
    %v950 = vpop.f32.mrf.mxu0
    %v951 = vadd.f32 %v145, %v950
    %952 = vmatmul.bf16.gmra.mxu0 %v348
    %v953 = vpop.f32.mrf.mxu0
    %v954 = vadd.f32 %v145, %v953
    %v955 = vpop.f32.mrf.mxu0
    %v956 = vadd.f32 %v145, %v955
    %957 = vmatmul.bf16.gmra.mxu0 %v351
    %v958 = vpop.f32.mrf.mxu0
    %v959 = vadd.f32 %v145, %v958
    %v960 = vpop.f32.mrf.mxu0
    %v961 = vadd.f32 %v145, %v960
    %962 = vmatmul.bf16.gmra.mxu0 %v354
    %v963 = vpop.f32.mrf.mxu0
    %v964 = vadd.f32 %v145, %v963
    %v965 = vpop.f32.mrf.mxu0
    %v966 = vadd.f32 %v145, %v965
    %967 = vmatmul.bf16.gmra.mxu0 %v357
    %v968 = vpop.f32.mrf.mxu0
    %v969 = vadd.f32 %v145, %v968
    %v970 = vpop.f32.mrf.mxu0
    %v971 = vadd.f32 %v145, %v970
    %972 = vmatmul.bf16.gmra.mxu0 %v360
    %v973 = vpop.f32.mrf.mxu0
    %v974 = vadd.f32 %v145, %v973
    %v975 = vpop.f32.mrf.mxu0
    %v976 = vadd.f32 %v145, %v975
    %977 = vmatmul.bf16.gmra.mxu0 %v363
    %v978 = vpop.f32.mrf.mxu0
    %v979 = vadd.f32 %v145, %v978
    %v980 = vpop.f32.mrf.mxu0
    %v981 = vadd.f32 %v145, %v980
    %982 = vmatmul.bf16.gmra.mxu0 %v366
    %v983 = vpop.f32.mrf.mxu0
    %v984 = vadd.f32 %v145, %v983
    %v985 = vpop.f32.mrf.mxu0
    %v986 = vadd.f32 %v145, %v985
    %987 = vmatmul.bf16.gmra.mxu0 %v369
    %v988 = vpop.f32.mrf.mxu0
    %v989 = vadd.f32 %v145, %v988
    %v990 = vpop.f32.mrf.mxu0
    %v991 = vadd.f32 %v145, %v990
    %992 = vmatmul.bf16.gmra.mxu0 %v372
    %v993 = vpop.f32.mrf.mxu0
    %v994 = vadd.f32 %v145, %v993
    %v995 = vpop.f32.mrf.mxu0
    %v996 = vadd.f32 %v145, %v995
    %997 = vdwg.mxu0
    %998 = vmatpush.bf16.msra.mxu0 0
    %999 = vmatpush.bf16.msra.mxu0 0
    %1000 = vmatpush.bf16.msra.mxu0 0
    %1001 = vmatpush.bf16.msra.mxu0 0
    %1002 = vmatpush.bf16.msra.mxu0 %v282
    %1003 = vmatpush.bf16.msra.mxu0 %v274
    %1004 = vmatpush.bf16.msra.mxu0 %v266
    %1005 = vmatpush.bf16.msra.mxu0 %v258
    %1006 = vmatmul.bf16.gmra.mxu0 %v318
    %v1007 = vpop.f32.mrf.mxu0
    %v1008 = vadd.f32 %v146, %v1007
    %v1009 = vpop.f32.mrf.mxu0
    %v1010 = vadd.f32 %v146, %v1009
    %1011 = vmatmul.bf16.gmra.mxu0 %v321
    %v1012 = vpop.f32.mrf.mxu0
    %v1013 = vadd.f32 %v146, %v1012
    %v1014 = vpop.f32.mrf.mxu0
    %v1015 = vadd.f32 %v146, %v1014
    %1016 = vmatmul.bf16.gmra.mxu0 %v324
    %v1017 = vpop.f32.mrf.mxu0
    %v1018 = vadd.f32 %v146, %v1017
    %v1019 = vpop.f32.mrf.mxu0
    %v1020 = vadd.f32 %v146, %v1019
    %1021 = vmatmul.bf16.gmra.mxu0 %v327
    %v1022 = vpop.f32.mrf.mxu0
    %v1023 = vadd.f32 %v146, %v1022
    %v1024 = vpop.f32.mrf.mxu0
    %v1025 = vadd.f32 %v146, %v1024
    %1026 = vmatmul.bf16.gmra.mxu0 %v330
    %v1027 = vpop.f32.mrf.mxu0
    %v1028 = vadd.f32 %v146, %v1027
    %v1029 = vpop.f32.mrf.mxu0
    %v1030 = vadd.f32 %v146, %v1029
    %1031 = vmatmul.bf16.gmra.mxu0 %v333
    %v1032 = vpop.f32.mrf.mxu0
    %v1033 = vadd.f32 %v146, %v1032
    %v1034 = vpop.f32.mrf.mxu0
    %v1035 = vadd.f32 %v146, %v1034
    %1036 = vmatmul.bf16.gmra.mxu0 %v336
    %v1037 = vpop.f32.mrf.mxu0
    %v1038 = vadd.f32 %v146, %v1037
    %v1039 = vpop.f32.mrf.mxu0
    %v1040 = vadd.f32 %v146, %v1039
    %1041 = vmatmul.bf16.gmra.mxu0 %v339
    %v1042 = vpop.f32.mrf.mxu0
    %v1043 = vadd.f32 %v146, %v1042
    %v1044 = vpop.f32.mrf.mxu0
    %v1045 = vadd.f32 %v146, %v1044
    %1046 = vmatmul.bf16.gmra.mxu0 %v342
    %v1047 = vpop.f32.mrf.mxu0
    %v1048 = vadd.f32 %v146, %v1047
    %v1049 = vpop.f32.mrf.mxu0
    %v1050 = vadd.f32 %v146, %v1049
    %1051 = vmatmul.bf16.gmra.mxu0 %v345
    %v1052 = vpop.f32.mrf.mxu0
    %v1053 = vadd.f32 %v146, %v1052
    %v1054 = vpop.f32.mrf.mxu0
    %v1055 = vadd.f32 %v146, %v1054
    %1056 = vmatmul.bf16.gmra.mxu0 %v348
    %v1057 = vpop.f32.mrf.mxu0
    %v1058 = vadd.f32 %v146, %v1057
    %v1059 = vpop.f32.mrf.mxu0
    %v1060 = vadd.f32 %v146, %v1059
    %1061 = vmatmul.bf16.gmra.mxu0 %v351
    %v1062 = vpop.f32.mrf.mxu0
    %v1063 = vadd.f32 %v146, %v1062
    %v1064 = vpop.f32.mrf.mxu0
    %v1065 = vadd.f32 %v146, %v1064
    %1066 = vmatmul.bf16.gmra.mxu0 %v354
    %v1067 = vpop.f32.mrf.mxu0
    %v1068 = vadd.f32 %v146, %v1067
    %v1069 = vpop.f32.mrf.mxu0
    %v1070 = vadd.f32 %v146, %v1069
    %1071 = vmatmul.bf16.gmra.mxu0 %v357
    %v1072 = vpop.f32.mrf.mxu0
    %v1073 = vadd.f32 %v146, %v1072
    %v1074 = vpop.f32.mrf.mxu0
    %v1075 = vadd.f32 %v146, %v1074
    %1076 = vmatmul.bf16.gmra.mxu0 %v360
    %v1077 = vpop.f32.mrf.mxu0
    %v1078 = vadd.f32 %v146, %v1077
    %v1079 = vpop.f32.mrf.mxu0
    %v1080 = vadd.f32 %v146, %v1079
    %1081 = vmatmul.bf16.gmra.mxu0 %v363
    %v1082 = vpop.f32.mrf.mxu0
    %v1083 = vadd.f32 %v146, %v1082
    %v1084 = vpop.f32.mrf.mxu0
    %v1085 = vadd.f32 %v146, %v1084
    %1086 = vmatmul.bf16.gmra.mxu0 %v366
    %v1087 = vpop.f32.mrf.mxu0
    %v1088 = vadd.f32 %v146, %v1087
    %v1089 = vpop.f32.mrf.mxu0
    %v1090 = vadd.f32 %v146, %v1089
    %1091 = vmatmul.bf16.gmra.mxu0 %v369
    %v1092 = vpop.f32.mrf.mxu0
    %v1093 = vadd.f32 %v146, %v1092
    %v1094 = vpop.f32.mrf.mxu0
    %v1095 = vadd.f32 %v146, %v1094
    %1096 = vmatmul.bf16.gmra.mxu0 %v372
    %v1097 = vpop.f32.mrf.mxu0
    %v1098 = vadd.f32 %v146, %v1097
    %v1099 = vpop.f32.mrf.mxu0
    %v1100 = vadd.f32 %v146, %v1099
    %1101 = vdwg.mxu0
    %1102 = vmatpush.bf16.msra.mxu0 0
    %1103 = vmatpush.bf16.msra.mxu0 0
    %1104 = vmatpush.bf16.msra.mxu0 0
    %1105 = vmatpush.bf16.msra.mxu0 0
    %1106 = vmatpush.bf16.msra.mxu0 %v283
    %1107 = vmatpush.bf16.msra.mxu0 %v275
    %1108 = vmatpush.bf16.msra.mxu0 %v267
    %1109 = vmatpush.bf16.msra.mxu0 %v259
    %1110 = vmatmul.bf16.gmra.mxu0 %v318
    %v1111 = vpop.f32.mrf.mxu0
    %v1112 = vadd.f32 %v147, %v1111
    %v1113 = vpop.f32.mrf.mxu0
    %v1114 = vadd.f32 %v147, %v1113
    %1115 = vmatmul.bf16.gmra.mxu0 %v321
    %v1116 = vpop.f32.mrf.mxu0
    %v1117 = vadd.f32 %v147, %v1116
    %v1118 = vpop.f32.mrf.mxu0
    %v1119 = vadd.f32 %v147, %v1118
    %1120 = vmatmul.bf16.gmra.mxu0 %v324
    %v1121 = vpop.f32.mrf.mxu0
    %v1122 = vadd.f32 %v147, %v1121
    %v1123 = vpop.f32.mrf.mxu0
    %v1124 = vadd.f32 %v147, %v1123
    %1125 = vmatmul.bf16.gmra.mxu0 %v327
    %v1126 = vpop.f32.mrf.mxu0
    %v1127 = vadd.f32 %v147, %v1126
    %v1128 = vpop.f32.mrf.mxu0
    %v1129 = vadd.f32 %v147, %v1128
    %1130 = vmatmul.bf16.gmra.mxu0 %v330
    %v1131 = vpop.f32.mrf.mxu0
    %v1132 = vadd.f32 %v147, %v1131
    %v1133 = vpop.f32.mrf.mxu0
    %v1134 = vadd.f32 %v147, %v1133
    %1135 = vmatmul.bf16.gmra.mxu0 %v333
    %v1136 = vpop.f32.mrf.mxu0
    %v1137 = vadd.f32 %v147, %v1136
    %v1138 = vpop.f32.mrf.mxu0
    %v1139 = vadd.f32 %v147, %v1138
    %1140 = vmatmul.bf16.gmra.mxu0 %v336
    %v1141 = vpop.f32.mrf.mxu0
    %v1142 = vadd.f32 %v147, %v1141
    %v1143 = vpop.f32.mrf.mxu0
    %v1144 = vadd.f32 %v147, %v1143
    %1145 = vmatmul.bf16.gmra.mxu0 %v339
    %v1146 = vpop.f32.mrf.mxu0
    %v1147 = vadd.f32 %v147, %v1146
    %v1148 = vpop.f32.mrf.mxu0
    %v1149 = vadd.f32 %v147, %v1148
    %1150 = vmatmul.bf16.gmra.mxu0 %v342
    %v1151 = vpop.f32.mrf.mxu0
    %v1152 = vadd.f32 %v147, %v1151
    %v1153 = vpop.f32.mrf.mxu0
    %v1154 = vadd.f32 %v147, %v1153
    %1155 = vmatmul.bf16.gmra.mxu0 %v345
    %v1156 = vpop.f32.mrf.mxu0
    %v1157 = vadd.f32 %v147, %v1156
    %v1158 = vpop.f32.mrf.mxu0
    %v1159 = vadd.f32 %v147, %v1158
    %1160 = vmatmul.bf16.gmra.mxu0 %v348
    %v1161 = vpop.f32.mrf.mxu0
    %v1162 = vadd.f32 %v147, %v1161
    %v1163 = vpop.f32.mrf.mxu0
    %v1164 = vadd.f32 %v147, %v1163
    %1165 = vmatmul.bf16.gmra.mxu0 %v351
    %v1166 = vpop.f32.mrf.mxu0
    %v1167 = vadd.f32 %v147, %v1166
    %v1168 = vpop.f32.mrf.mxu0
    %v1169 = vadd.f32 %v147, %v1168
    %1170 = vmatmul.bf16.gmra.mxu0 %v354
    %v1171 = vpop.f32.mrf.mxu0
    %v1172 = vadd.f32 %v147, %v1171
    %v1173 = vpop.f32.mrf.mxu0
    %v1174 = vadd.f32 %v147, %v1173
    %1175 = vmatmul.bf16.gmra.mxu0 %v357
    %v1176 = vpop.f32.mrf.mxu0
    %v1177 = vadd.f32 %v147, %v1176
    %v1178 = vpop.f32.mrf.mxu0
    %v1179 = vadd.f32 %v147, %v1178
    %1180 = vmatmul.bf16.gmra.mxu0 %v360
    %v1181 = vpop.f32.mrf.mxu0
    %v1182 = vadd.f32 %v147, %v1181
    %v1183 = vpop.f32.mrf.mxu0
    %v1184 = vadd.f32 %v147, %v1183
    %1185 = vmatmul.bf16.gmra.mxu0 %v363
    %v1186 = vpop.f32.mrf.mxu0
    %v1187 = vadd.f32 %v147, %v1186
    %v1188 = vpop.f32.mrf.mxu0
    %v1189 = vadd.f32 %v147, %v1188
    %1190 = vmatmul.bf16.gmra.mxu0 %v366
    %v1191 = vpop.f32.mrf.mxu0
    %v1192 = vadd.f32 %v147, %v1191
    %v1193 = vpop.f32.mrf.mxu0
    %v1194 = vadd.f32 %v147, %v1193
    %1195 = vmatmul.bf16.gmra.mxu0 %v369
    %v1196 = vpop.f32.mrf.mxu0
    %v1197 = vadd.f32 %v147, %v1196
    %v1198 = vpop.f32.mrf.mxu0
    %v1199 = vadd.f32 %v147, %v1198
    %1200 = vmatmul.bf16.gmra.mxu0 %v372
    %v1201 = vpop.f32.mrf.mxu0
    %v1202 = vadd.f32 %v147, %v1201
    %v1203 = vpop.f32.mrf.mxu0
    %v1204 = vadd.f32 %v147, %v1203
    %1205 = vdwg.mxu0
    %v1206 = vmax.f32 %v384, 0.0
    %v1207 = vmax.f32 %v488, 0.0
    %v1208 = vmax.f32 %v592, 0.0
    %v1209 = vmax.f32 %v696, 0.0
    %v1210 = vmax.f32 %v800, 0.0
    %v1211 = vmax.f32 %v904, 0.0
    %v1212 = vmax.f32 %v1008, 0.0
    %v1213 = vmax.f32 %v1112, 0.0
    %v1214 = vmax.f32 %v386, 0.0
    %v1215 = vmax.f32 %v490, 0.0
    %v1216 = vmax.f32 %v594, 0.0
    %v1217 = vmax.f32 %v698, 0.0
    %v1218 = vmax.f32 %v802, 0.0
    %v1219 = vmax.f32 %v906, 0.0
    %v1220 = vmax.f32 %v1010, 0.0
    %v1221 = vmax.f32 %v1114, 0.0
    %v1222 = vmax.f32 %v389, 0.0
    %v1223 = vmax.f32 %v493, 0.0
    %v1224 = vmax.f32 %v597, 0.0
    %v1225 = vmax.f32 %v701, 0.0
    %v1226 = vmax.f32 %v805, 0.0
    %v1227 = vmax.f32 %v909, 0.0
    %v1228 = vmax.f32 %v1013, 0.0
    %v1229 = vmax.f32 %v1117, 0.0
    %v1230 = vmax.f32 %v391, 0.0
    %v1231 = vmax.f32 %v495, 0.0
    %v1232 = vmax.f32 %v599, 0.0
    %v1233 = vmax.f32 %v703, 0.0
    %v1234 = vmax.f32 %v807, 0.0
    %v1235 = vmax.f32 %v911, 0.0
    %v1236 = vmax.f32 %v1015, 0.0
    %v1237 = vmax.f32 %v1119, 0.0
    %v1238 = vmax.f32 %v394, 0.0
    %v1239 = vmax.f32 %v498, 0.0
    %v1240 = vmax.f32 %v602, 0.0
    %v1241 = vmax.f32 %v706, 0.0
    %v1242 = vmax.f32 %v810, 0.0
    %v1243 = vmax.f32 %v914, 0.0
    %v1244 = vmax.f32 %v1018, 0.0
    %v1245 = vmax.f32 %v1122, 0.0
    %v1246 = vmax.f32 %v396, 0.0
    %v1247 = vmax.f32 %v500, 0.0
    %v1248 = vmax.f32 %v604, 0.0
    %v1249 = vmax.f32 %v708, 0.0
    %v1250 = vmax.f32 %v812, 0.0
    %v1251 = vmax.f32 %v916, 0.0
    %v1252 = vmax.f32 %v1020, 0.0
    %v1253 = vmax.f32 %v1124, 0.0
    %v1254 = vmax.f32 %v399, 0.0
    %v1255 = vmax.f32 %v503, 0.0
    %v1256 = vmax.f32 %v607, 0.0
    %v1257 = vmax.f32 %v711, 0.0
    %v1258 = vmax.f32 %v815, 0.0
    %v1259 = vmax.f32 %v919, 0.0
    %v1260 = vmax.f32 %v1023, 0.0
    %v1261 = vmax.f32 %v1127, 0.0
    %v1262 = vmax.f32 %v401, 0.0
    %v1263 = vmax.f32 %v505, 0.0
    %v1264 = vmax.f32 %v609, 0.0
    %v1265 = vmax.f32 %v713, 0.0
    %v1266 = vmax.f32 %v817, 0.0
    %v1267 = vmax.f32 %v921, 0.0
    %v1268 = vmax.f32 %v1025, 0.0
    %v1269 = vmax.f32 %v1129, 0.0
    %v1270 = vmax.f32 %v404, 0.0
    %v1271 = vmax.f32 %v508, 0.0
    %v1272 = vmax.f32 %v612, 0.0
    %v1273 = vmax.f32 %v716, 0.0
    %v1274 = vmax.f32 %v820, 0.0
    %v1275 = vmax.f32 %v924, 0.0
    %v1276 = vmax.f32 %v1028, 0.0
    %v1277 = vmax.f32 %v1132, 0.0
    %v1278 = vmax.f32 %v406, 0.0
    %v1279 = vmax.f32 %v510, 0.0
    %v1280 = vmax.f32 %v614, 0.0
    %v1281 = vmax.f32 %v718, 0.0
    %v1282 = vmax.f32 %v822, 0.0
    %v1283 = vmax.f32 %v926, 0.0
    %v1284 = vmax.f32 %v1030, 0.0
    %v1285 = vmax.f32 %v1134, 0.0
    %v1286 = vmax.f32 %v409, 0.0
    %v1287 = vmax.f32 %v513, 0.0
    %v1288 = vmax.f32 %v617, 0.0
    %v1289 = vmax.f32 %v721, 0.0
    %v1290 = vmax.f32 %v825, 0.0
    %v1291 = vmax.f32 %v929, 0.0
    %v1292 = vmax.f32 %v1033, 0.0
    %v1293 = vmax.f32 %v1137, 0.0
    %v1294 = vmax.f32 %v411, 0.0
    %v1295 = vmax.f32 %v515, 0.0
    %v1296 = vmax.f32 %v619, 0.0
    %v1297 = vmax.f32 %v723, 0.0
    %v1298 = vmax.f32 %v827, 0.0
    %v1299 = vmax.f32 %v931, 0.0
    %v1300 = vmax.f32 %v1035, 0.0
    %v1301 = vmax.f32 %v1139, 0.0
    %v1302 = vmax.f32 %v414, 0.0
    %v1303 = vmax.f32 %v518, 0.0
    %v1304 = vmax.f32 %v622, 0.0
    %v1305 = vmax.f32 %v726, 0.0
    %v1306 = vmax.f32 %v830, 0.0
    %v1307 = vmax.f32 %v934, 0.0
    %v1308 = vmax.f32 %v1038, 0.0
    %v1309 = vmax.f32 %v1142, 0.0
    %v1310 = vmax.f32 %v416, 0.0
    %v1311 = vmax.f32 %v520, 0.0
    %v1312 = vmax.f32 %v624, 0.0
    %v1313 = vmax.f32 %v728, 0.0
    %v1314 = vmax.f32 %v832, 0.0
    %v1315 = vmax.f32 %v936, 0.0
    %v1316 = vmax.f32 %v1040, 0.0
    %v1317 = vmax.f32 %v1144, 0.0
    %v1318 = vmax.f32 %v419, 0.0
    %v1319 = vmax.f32 %v523, 0.0
    %v1320 = vmax.f32 %v627, 0.0
    %v1321 = vmax.f32 %v731, 0.0
    %v1322 = vmax.f32 %v835, 0.0
    %v1323 = vmax.f32 %v939, 0.0
    %v1324 = vmax.f32 %v1043, 0.0
    %v1325 = vmax.f32 %v1147, 0.0
    %v1326 = vmax.f32 %v421, 0.0
    %v1327 = vmax.f32 %v525, 0.0
    %v1328 = vmax.f32 %v629, 0.0
    %v1329 = vmax.f32 %v733, 0.0
    %v1330 = vmax.f32 %v837, 0.0
    %v1331 = vmax.f32 %v941, 0.0
    %v1332 = vmax.f32 %v1045, 0.0
    %v1333 = vmax.f32 %v1149, 0.0
    %v1334 = vmax.f32 %v424, 0.0
    %v1335 = vmax.f32 %v528, 0.0
    %v1336 = vmax.f32 %v632, 0.0
    %v1337 = vmax.f32 %v736, 0.0
    %v1338 = vmax.f32 %v840, 0.0
    %v1339 = vmax.f32 %v944, 0.0
    %v1340 = vmax.f32 %v1048, 0.0
    %v1341 = vmax.f32 %v1152, 0.0
    %v1342 = vmax.f32 %v426, 0.0
    %v1343 = vmax.f32 %v530, 0.0
    %v1344 = vmax.f32 %v634, 0.0
    %v1345 = vmax.f32 %v738, 0.0
    %v1346 = vmax.f32 %v842, 0.0
    %v1347 = vmax.f32 %v946, 0.0
    %v1348 = vmax.f32 %v1050, 0.0
    %v1349 = vmax.f32 %v1154, 0.0
    %v1350 = vmax.f32 %v429, 0.0
    %v1351 = vmax.f32 %v533, 0.0
    %v1352 = vmax.f32 %v637, 0.0
    %v1353 = vmax.f32 %v741, 0.0
    %v1354 = vmax.f32 %v845, 0.0
    %v1355 = vmax.f32 %v949, 0.0
    %v1356 = vmax.f32 %v1053, 0.0
    %v1357 = vmax.f32 %v1157, 0.0
    %v1358 = vmax.f32 %v431, 0.0
    %v1359 = vmax.f32 %v535, 0.0
    %v1360 = vmax.f32 %v639, 0.0
    %v1361 = vmax.f32 %v743, 0.0
    %v1362 = vmax.f32 %v847, 0.0
    %v1363 = vmax.f32 %v951, 0.0
    %v1364 = vmax.f32 %v1055, 0.0
    %v1365 = vmax.f32 %v1159, 0.0
    %v1366 = vmax.f32 %v434, 0.0
    %v1367 = vmax.f32 %v538, 0.0
    %v1368 = vmax.f32 %v642, 0.0
    %v1369 = vmax.f32 %v746, 0.0
    %v1370 = vmax.f32 %v850, 0.0
    %v1371 = vmax.f32 %v954, 0.0
    %v1372 = vmax.f32 %v1058, 0.0
    %v1373 = vmax.f32 %v1162, 0.0
    %v1374 = vmax.f32 %v436, 0.0
    %v1375 = vmax.f32 %v540, 0.0
    %v1376 = vmax.f32 %v644, 0.0
    %v1377 = vmax.f32 %v748, 0.0
    %v1378 = vmax.f32 %v852, 0.0
    %v1379 = vmax.f32 %v956, 0.0
    %v1380 = vmax.f32 %v1060, 0.0
    %v1381 = vmax.f32 %v1164, 0.0
    %v1382 = vmax.f32 %v439, 0.0
    %v1383 = vmax.f32 %v543, 0.0
    %v1384 = vmax.f32 %v647, 0.0
    %v1385 = vmax.f32 %v751, 0.0
    %v1386 = vmax.f32 %v855, 0.0
    %v1387 = vmax.f32 %v959, 0.0
    %v1388 = vmax.f32 %v1063, 0.0
    %v1389 = vmax.f32 %v1167, 0.0
    %v1390 = vmax.f32 %v441, 0.0
    %v1391 = vmax.f32 %v545, 0.0
    %v1392 = vmax.f32 %v649, 0.0
    %v1393 = vmax.f32 %v753, 0.0
    %v1394 = vmax.f32 %v857, 0.0
    %v1395 = vmax.f32 %v961, 0.0
    %v1396 = vmax.f32 %v1065, 0.0
    %v1397 = vmax.f32 %v1169, 0.0
    %v1398 = vmax.f32 %v444, 0.0
    %v1399 = vmax.f32 %v548, 0.0
    %v1400 = vmax.f32 %v652, 0.0
    %v1401 = vmax.f32 %v756, 0.0
    %v1402 = vmax.f32 %v860, 0.0
    %v1403 = vmax.f32 %v964, 0.0
    %v1404 = vmax.f32 %v1068, 0.0
    %v1405 = vmax.f32 %v1172, 0.0
    %v1406 = vmax.f32 %v446, 0.0
    %v1407 = vmax.f32 %v550, 0.0
    %v1408 = vmax.f32 %v654, 0.0
    %v1409 = vmax.f32 %v758, 0.0
    %v1410 = vmax.f32 %v862, 0.0
    %v1411 = vmax.f32 %v966, 0.0
    %v1412 = vmax.f32 %v1070, 0.0
    %v1413 = vmax.f32 %v1174, 0.0
    %v1414 = vmax.f32 %v449, 0.0
    %v1415 = vmax.f32 %v553, 0.0
    %v1416 = vmax.f32 %v657, 0.0
    %v1417 = vmax.f32 %v761, 0.0
    %v1418 = vmax.f32 %v865, 0.0
    %v1419 = vmax.f32 %v969, 0.0
    %v1420 = vmax.f32 %v1073, 0.0
    %v1421 = vmax.f32 %v1177, 0.0
    %v1422 = vmax.f32 %v451, 0.0
    %v1423 = vmax.f32 %v555, 0.0
    %v1424 = vmax.f32 %v659, 0.0
    %v1425 = vmax.f32 %v763, 0.0
    %v1426 = vmax.f32 %v867, 0.0
    %v1427 = vmax.f32 %v971, 0.0
    %v1428 = vmax.f32 %v1075, 0.0
    %v1429 = vmax.f32 %v1179, 0.0
    %v1430 = vmax.f32 %v454, 0.0
    %v1431 = vmax.f32 %v558, 0.0
    %v1432 = vmax.f32 %v662, 0.0
    %v1433 = vmax.f32 %v766, 0.0
    %v1434 = vmax.f32 %v870, 0.0
    %v1435 = vmax.f32 %v974, 0.0
    %v1436 = vmax.f32 %v1078, 0.0
    %v1437 = vmax.f32 %v1182, 0.0
    %v1438 = vmax.f32 %v456, 0.0
    %v1439 = vmax.f32 %v560, 0.0
    %v1440 = vmax.f32 %v664, 0.0
    %v1441 = vmax.f32 %v768, 0.0
    %v1442 = vmax.f32 %v872, 0.0
    %v1443 = vmax.f32 %v976, 0.0
    %v1444 = vmax.f32 %v1080, 0.0
    %v1445 = vmax.f32 %v1184, 0.0
    %v1446 = vmax.f32 %v459, 0.0
    %v1447 = vmax.f32 %v563, 0.0
    %v1448 = vmax.f32 %v667, 0.0
    %v1449 = vmax.f32 %v771, 0.0
    %v1450 = vmax.f32 %v875, 0.0
    %v1451 = vmax.f32 %v979, 0.0
    %v1452 = vmax.f32 %v1083, 0.0
    %v1453 = vmax.f32 %v1187, 0.0
    %v1454 = vmax.f32 %v461, 0.0
    %v1455 = vmax.f32 %v565, 0.0
    %v1456 = vmax.f32 %v669, 0.0
    %v1457 = vmax.f32 %v773, 0.0
    %v1458 = vmax.f32 %v877, 0.0
    %v1459 = vmax.f32 %v981, 0.0
    %v1460 = vmax.f32 %v1085, 0.0
    %v1461 = vmax.f32 %v1189, 0.0
    %v1462 = vmax.f32 %v464, 0.0
    %v1463 = vmax.f32 %v568, 0.0
    %v1464 = vmax.f32 %v672, 0.0
    %v1465 = vmax.f32 %v776, 0.0
    %v1466 = vmax.f32 %v880, 0.0
    %v1467 = vmax.f32 %v984, 0.0
    %v1468 = vmax.f32 %v1088, 0.0
    %v1469 = vmax.f32 %v1192, 0.0
    %v1470 = vmax.f32 %v466, 0.0
    %v1471 = vmax.f32 %v570, 0.0
    %v1472 = vmax.f32 %v674, 0.0
    %v1473 = vmax.f32 %v778, 0.0
    %v1474 = vmax.f32 %v882, 0.0
    %v1475 = vmax.f32 %v986, 0.0
    %v1476 = vmax.f32 %v1090, 0.0
    %v1477 = vmax.f32 %v1194, 0.0
    %v1478 = vmax.f32 %v469, 0.0
    %v1479 = vmax.f32 %v573, 0.0
    %v1480 = vmax.f32 %v677, 0.0
    %v1481 = vmax.f32 %v781, 0.0
    %v1482 = vmax.f32 %v885, 0.0
    %v1483 = vmax.f32 %v989, 0.0
    %v1484 = vmax.f32 %v1093, 0.0
    %v1485 = vmax.f32 %v1197, 0.0
    %v1486 = vmax.f32 %v471, 0.0
    %v1487 = vmax.f32 %v575, 0.0
    %v1488 = vmax.f32 %v679, 0.0
    %v1489 = vmax.f32 %v783, 0.0
    %v1490 = vmax.f32 %v887, 0.0
    %v1491 = vmax.f32 %v991, 0.0
    %v1492 = vmax.f32 %v1095, 0.0
    %v1493 = vmax.f32 %v1199, 0.0
    %v1494 = vmax.f32 %v474, 0.0
    %v1495 = vmax.f32 %v578, 0.0
    %v1496 = vmax.f32 %v682, 0.0
    %v1497 = vmax.f32 %v786, 0.0
    %v1498 = vmax.f32 %v890, 0.0
    %v1499 = vmax.f32 %v994, 0.0
    %v1500 = vmax.f32 %v1098, 0.0
    %v1501 = vmax.f32 %v1202, 0.0
    %v1502 = vmax.f32 %v476, 0.0
    %v1503 = vmax.f32 %v580, 0.0
    %v1504 = vmax.f32 %v684, 0.0
    %v1505 = vmax.f32 %v788, 0.0
    %v1506 = vmax.f32 %v892, 0.0
    %v1507 = vmax.f32 %v996, 0.0
    %v1508 = vmax.f32 %v1100, 0.0
    %v1509 = vmax.f32 %v1204, 0.0
    %v1510 = vpack.c.bf16 %v1214, %v1206
    %v1511 = vpack.c.bf16 %v1215, %v1207
    %v1512 = vpack.c.bf16 %v1216, %v1208
    %v1513 = vpack.c.bf16 %v1217, %v1209
    %v1514 = vpack.c.bf16 %v1218, %v1210
    %v1515 = vpack.c.bf16 %v1219, %v1211
    %v1516 = vpack.c.bf16 %v1220, %v1212
    %v1517 = vpack.c.bf16 %v1221, %v1213
    %v1518 = vpack.c.bf16 %v1230, %v1222
    %v1519 = vpack.c.bf16 %v1231, %v1223
    %v1520 = vpack.c.bf16 %v1232, %v1224
    %v1521 = vpack.c.bf16 %v1233, %v1225
    %v1522 = vpack.c.bf16 %v1234, %v1226
    %v1523 = vpack.c.bf16 %v1235, %v1227
    %v1524 = vpack.c.bf16 %v1236, %v1228
    %v1525 = vpack.c.bf16 %v1237, %v1229
    %v1526 = vpack.c.bf16 %v1246, %v1238
    %v1527 = vpack.c.bf16 %v1247, %v1239
    %v1528 = vpack.c.bf16 %v1248, %v1240
    %v1529 = vpack.c.bf16 %v1249, %v1241
    %v1530 = vpack.c.bf16 %v1250, %v1242
    %v1531 = vpack.c.bf16 %v1251, %v1243
    %v1532 = vpack.c.bf16 %v1252, %v1244
    %v1533 = vpack.c.bf16 %v1253, %v1245
    %v1534 = vpack.c.bf16 %v1262, %v1254
    %v1535 = vpack.c.bf16 %v1263, %v1255
    %v1536 = vpack.c.bf16 %v1264, %v1256
    %v1537 = vpack.c.bf16 %v1265, %v1257
    %v1538 = vpack.c.bf16 %v1266, %v1258
    %v1539 = vpack.c.bf16 %v1267, %v1259
    %v1540 = vpack.c.bf16 %v1268, %v1260
    %v1541 = vpack.c.bf16 %v1269, %v1261
    %v1542 = vpack.c.bf16 %v1278, %v1270
    %v1543 = vpack.c.bf16 %v1279, %v1271
    %v1544 = vpack.c.bf16 %v1280, %v1272
    %v1545 = vpack.c.bf16 %v1281, %v1273
    %v1546 = vpack.c.bf16 %v1282, %v1274
    %v1547 = vpack.c.bf16 %v1283, %v1275
    %v1548 = vpack.c.bf16 %v1284, %v1276
    %v1549 = vpack.c.bf16 %v1285, %v1277
    %v1550 = vpack.c.bf16 %v1294, %v1286
    %v1551 = vpack.c.bf16 %v1295, %v1287
    %v1552 = vpack.c.bf16 %v1296, %v1288
    %v1553 = vpack.c.bf16 %v1297, %v1289
    %v1554 = vpack.c.bf16 %v1298, %v1290
    %v1555 = vpack.c.bf16 %v1299, %v1291
    %v1556 = vpack.c.bf16 %v1300, %v1292
    %v1557 = vpack.c.bf16 %v1301, %v1293
    %v1558 = vpack.c.bf16 %v1310, %v1302
    %v1559 = vpack.c.bf16 %v1311, %v1303
    %v1560 = vpack.c.bf16 %v1312, %v1304
    %v1561 = vpack.c.bf16 %v1313, %v1305
    %v1562 = vpack.c.bf16 %v1314, %v1306
    %v1563 = vpack.c.bf16 %v1315, %v1307
    %v1564 = vpack.c.bf16 %v1316, %v1308
    %v1565 = vpack.c.bf16 %v1317, %v1309
    %v1566 = vpack.c.bf16 %v1326, %v1318
    %v1567 = vpack.c.bf16 %v1327, %v1319
    %v1568 = vpack.c.bf16 %v1328, %v1320
    %v1569 = vpack.c.bf16 %v1329, %v1321
    %v1570 = vpack.c.bf16 %v1330, %v1322
    %v1571 = vpack.c.bf16 %v1331, %v1323
    %v1572 = vpack.c.bf16 %v1332, %v1324
    %v1573 = vpack.c.bf16 %v1333, %v1325
    %v1574 = vpack.c.bf16 %v1342, %v1334
    %v1575 = vpack.c.bf16 %v1343, %v1335
    %v1576 = vpack.c.bf16 %v1344, %v1336
    %v1577 = vpack.c.bf16 %v1345, %v1337
    %v1578 = vpack.c.bf16 %v1346, %v1338
    %v1579 = vpack.c.bf16 %v1347, %v1339
    %v1580 = vpack.c.bf16 %v1348, %v1340
    %v1581 = vpack.c.bf16 %v1349, %v1341
    %v1582 = vpack.c.bf16 %v1358, %v1350
    %v1583 = vpack.c.bf16 %v1359, %v1351
    %v1584 = vpack.c.bf16 %v1360, %v1352
    %v1585 = vpack.c.bf16 %v1361, %v1353
    %v1586 = vpack.c.bf16 %v1362, %v1354
    %v1587 = vpack.c.bf16 %v1363, %v1355
    %v1588 = vpack.c.bf16 %v1364, %v1356
    %v1589 = vpack.c.bf16 %v1365, %v1357
    %v1590 = vpack.c.bf16 %v1374, %v1366
    %v1591 = vpack.c.bf16 %v1375, %v1367
    %v1592 = vpack.c.bf16 %v1376, %v1368
    %v1593 = vpack.c.bf16 %v1377, %v1369
    %v1594 = vpack.c.bf16 %v1378, %v1370
    %v1595 = vpack.c.bf16 %v1379, %v1371
    %v1596 = vpack.c.bf16 %v1380, %v1372
    %v1597 = vpack.c.bf16 %v1381, %v1373
    %v1598 = vpack.c.bf16 %v1390, %v1382
    %v1599 = vpack.c.bf16 %v1391, %v1383
    %v1600 = vpack.c.bf16 %v1392, %v1384
    %v1601 = vpack.c.bf16 %v1393, %v1385
    %v1602 = vpack.c.bf16 %v1394, %v1386
    %v1603 = vpack.c.bf16 %v1395, %v1387
    %v1604 = vpack.c.bf16 %v1396, %v1388
    %v1605 = vpack.c.bf16 %v1397, %v1389
    %v1606 = vpack.c.bf16 %v1406, %v1398
    %v1607 = vpack.c.bf16 %v1407, %v1399
    %v1608 = vpack.c.bf16 %v1408, %v1400
    %v1609 = vpack.c.bf16 %v1409, %v1401
    %v1610 = vpack.c.bf16 %v1410, %v1402
    %v1611 = vpack.c.bf16 %v1411, %v1403
    %v1612 = vpack.c.bf16 %v1412, %v1404
    %v1613 = vpack.c.bf16 %v1413, %v1405
    %v1614 = vpack.c.bf16 %v1422, %v1414
    %v1615 = vpack.c.bf16 %v1423, %v1415
    %v1616 = vpack.c.bf16 %v1424, %v1416
    %v1617 = vpack.c.bf16 %v1425, %v1417
    %v1618 = vpack.c.bf16 %v1426, %v1418
    %v1619 = vpack.c.bf16 %v1427, %v1419
    %v1620 = vpack.c.bf16 %v1428, %v1420
    %v1621 = vpack.c.bf16 %v1429, %v1421
    %v1622 = vpack.c.bf16 %v1438, %v1430
    %v1623 = vpack.c.bf16 %v1439, %v1431
    %v1624 = vpack.c.bf16 %v1440, %v1432
    %v1625 = vpack.c.bf16 %v1441, %v1433
    %v1626 = vpack.c.bf16 %v1442, %v1434
    %v1627 = vpack.c.bf16 %v1443, %v1435
    %v1628 = vpack.c.bf16 %v1444, %v1436
    %v1629 = vpack.c.bf16 %v1445, %v1437
    %v1630 = vpack.c.bf16 %v1454, %v1446
    %v1631 = vpack.c.bf16 %v1455, %v1447
    %v1632 = vpack.c.bf16 %v1456, %v1448
    %v1633 = vpack.c.bf16 %v1457, %v1449
    %v1634 = vpack.c.bf16 %v1458, %v1450
    %v1635 = vpack.c.bf16 %v1459, %v1451
    %v1636 = vpack.c.bf16 %v1460, %v1452
    %v1637 = vpack.c.bf16 %v1461, %v1453
    %v1638 = vpack.c.bf16 %v1470, %v1462
    %v1639 = vpack.c.bf16 %v1471, %v1463
    %v1640 = vpack.c.bf16 %v1472, %v1464
    %v1641 = vpack.c.bf16 %v1473, %v1465
    %v1642 = vpack.c.bf16 %v1474, %v1466
    %v1643 = vpack.c.bf16 %v1475, %v1467
    %v1644 = vpack.c.bf16 %v1476, %v1468
    %v1645 = vpack.c.bf16 %v1477, %v1469
    %v1646 = vpack.c.bf16 %v1486, %v1478
    %v1647 = vpack.c.bf16 %v1487, %v1479
    %v1648 = vpack.c.bf16 %v1488, %v1480
    %v1649 = vpack.c.bf16 %v1489, %v1481
    %v1650 = vpack.c.bf16 %v1490, %v1482
    %v1651 = vpack.c.bf16 %v1491, %v1483
    %v1652 = vpack.c.bf16 %v1492, %v1484
    %v1653 = vpack.c.bf16 %v1493, %v1485
    %v1654 = vpack.c.bf16 %v1502, %v1494
    %v1655 = vpack.c.bf16 %v1503, %v1495
    %v1656 = vpack.c.bf16 %v1504, %v1496
    %v1657 = vpack.c.bf16 %v1505, %v1497
    %v1658 = vpack.c.bf16 %v1506, %v1498
    %v1659 = vpack.c.bf16 %v1507, %v1499
    %v1660 = vpack.c.bf16 %v1508, %v1500
    %v1661 = vpack.c.bf16 %v1509, %v1501
    %v1662 = vld [vmem:[#allocation2] sm:$0xff]
    %v1663 = vld [vmem:[#allocation2 + $0x8] sm:$0xff]
    %v1664 = vld [vmem:[#allocation2 + $0x10] sm:$0xff]
    %v1665 = vld [vmem:[#allocation2 + $0x18] sm:$0xff]
    %v1666 = vld [vmem:[#allocation2 + $0x20] sm:$0xff]
    %v1667 = vld [vmem:[#allocation2 + $0x28] sm:$0xff]
    %v1668 = vld [vmem:[#allocation2 + $0x30] sm:$0xff]
    %v1669 = vld [vmem:[#allocation2 + $0x38] sm:$0xff]
    %v1670 = vld [vmem:[#allocation2 + $0x40] sm:$0xff]
    %v1671 = vld [vmem:[#allocation2 + $0x48] sm:$0xff]
    %v1672 = vld [vmem:[#allocation2 + $0x50] sm:$0xff]
    %v1673 = vld [vmem:[#allocation2 + $0x58] sm:$0xff]
    %v1674 = vld [vmem:[#allocation2 + $0x60] sm:$0xff]
    %v1675 = vld [vmem:[#allocation2 + $0x68] sm:$0xff]
    %v1676 = vld [vmem:[#allocation2 + $0x70] sm:$0xff]
    %v1677 = vld [vmem:[#allocation2 + $0x78] sm:$0xff]
    %v1678 = vld [vmem:[#allocation2 + $0x80] sm:$0xff]
    %v1679 = vld [vmem:[#allocation2 + $0x88] sm:$0xff]
    %v1680 = vld [vmem:[#allocation2 + $0x90] sm:$0xff]
    %v1681 = vld [vmem:[#allocation2 + $0x98] sm:$0xff]
    %v1682 = vld [vmem:[#allocation2 + $0xa0] sm:$0xff]
    %v1683 = vld [vmem:[#allocation2 + $0xa8] sm:$0xff]
    %v1684 = vld [vmem:[#allocation2 + $0xb0] sm:$0xff]
    %v1685 = vld [vmem:[#allocation2 + $0xb8] sm:$0xff]
    %v1686 = vld [vmem:[#allocation2 + $0xc0] sm:$0xff]
    %v1687 = vld [vmem:[#allocation2 + $0xc8] sm:$0xff]
    %v1688 = vld [vmem:[#allocation2 + $0xd0] sm:$0xff]
    %v1689 = vld [vmem:[#allocation2 + $0xd8] sm:$0xff]
    %v1690 = vld [vmem:[#allocation2 + $0xe0] sm:$0xff]
    %v1691 = vld [vmem:[#allocation2 + $0xe8] sm:$0xff]
    %v1692 = vld [vmem:[#allocation2 + $0xf0] sm:$0xff]
    %v1693 = vld [vmem:[#allocation2 + $0xf8] sm:$0xff]
    %v1694 = vld [vmem:[#allocation2 + $0x100] sm:$0xff]
    %v1695 = vld [vmem:[#allocation2 + $0x108] sm:$0xff]
    %v1696 = vld [vmem:[#allocation2 + $0x110] sm:$0xff]
    %v1697 = vld [vmem:[#allocation2 + $0x118] sm:$0xff]
    %v1698 = vld [vmem:[#allocation2 + $0x120] sm:$0xff]
    %v1699 = vld [vmem:[#allocation2 + $0x128] sm:$0xff]
    %v1700 = vld [vmem:[#allocation2 + $0x130] sm:$0xff]
    %v1701 = vld [vmem:[#allocation2 + $0x138] sm:$0xff]
    %v1702 = vld [vmem:[#allocation2 + $0x140] sm:$0xff]
    %v1703 = vld [vmem:[#allocation2 + $0x148] sm:$0xff]
    %v1704 = vld [vmem:[#allocation2 + $0x150] sm:$0xff]
    %v1705 = vld [vmem:[#allocation2 + $0x158] sm:$0xff]
    %v1706 = vld [vmem:[#allocation2 + $0x160] sm:$0xff]
    %v1707 = vld [vmem:[#allocation2 + $0x168] sm:$0xff]
    %v1708 = vld [vmem:[#allocation2 + $0x170] sm:$0xff]
    %v1709 = vld [vmem:[#allocation2 + $0x178] sm:$0xff]
    %v1710 = vld [vmem:[#allocation2 + $0x180] sm:$0xff]
    %v1711 = vld [vmem:[#allocation2 + $0x188] sm:$0xff]
    %v1712 = vld [vmem:[#allocation2 + $0x190] sm:$0xff]
    %v1713 = vld [vmem:[#allocation2 + $0x198] sm:$0xff]
    %v1714 = vld [vmem:[#allocation2 + $0x1a0] sm:$0xff]
    %v1715 = vld [vmem:[#allocation2 + $0x1a8] sm:$0xff]
    %v1716 = vld [vmem:[#allocation2 + $0x1b0] sm:$0xff]
    %v1717 = vld [vmem:[#allocation2 + $0x1b8] sm:$0xff]
    %v1718 = vld [vmem:[#allocation2 + $0x1c0] sm:$0xff]
    %v1719 = vld [vmem:[#allocation2 + $0x1c8] sm:$0xff]
    %v1720 = vld [vmem:[#allocation2 + $0x1d0] sm:$0xff]
    %v1721 = vld [vmem:[#allocation2 + $0x1d8] sm:$0xff]
    %v1722 = vld [vmem:[#allocation2 + $0x1e0] sm:$0xff]
    %v1723 = vld [vmem:[#allocation2 + $0x1e8] sm:$0xff]
    %v1724 = vld [vmem:[#allocation2 + $0x1f0] sm:$0xff]
    %v1725 = vld [vmem:[#allocation2 + $0x1f8] sm:$0xff]
    %v1726 = vld [vmem:[#allocation2 + $0x200] sm:$0xff]
    %v1727 = vld [vmem:[#allocation2 + $0x208] sm:$0xff]
    %v1728 = vld [vmem:[#allocation2 + $0x210] sm:$0xff]
    %v1729 = vld [vmem:[#allocation2 + $0x218] sm:$0xff]
    %v1730 = vld [vmem:[#allocation2 + $0x220] sm:$0xff]
    %v1731 = vld [vmem:[#allocation2 + $0x228] sm:$0xff]
    %v1732 = vld [vmem:[#allocation2 + $0x230] sm:$0xff]
    %v1733 = vld [vmem:[#allocation2 + $0x238] sm:$0xff]
    %v1734 = vld [vmem:[#allocation2 + $0x240] sm:$0xff]
    %v1735 = vld [vmem:[#allocation2 + $0x248] sm:$0xff]
    %v1736 = vld [vmem:[#allocation2 + $0x250] sm:$0xff]
    %v1737 = vld [vmem:[#allocation2 + $0x258] sm:$0xff]
    %v1738 = vld [vmem:[#allocation2 + $0x260] sm:$0xff]
    %v1739 = vld [vmem:[#allocation2 + $0x268] sm:$0xff]
    %v1740 = vld [vmem:[#allocation2 + $0x270] sm:$0xff]
    %v1741 = vld [vmem:[#allocation2 + $0x278] sm:$0xff]
    %v1742 = vld [vmem:[#allocation2 + $0x280] sm:$0xff]
    %v1743 = vld [vmem:[#allocation2 + $0x288] sm:$0xff]
    %v1744 = vld [vmem:[#allocation2 + $0x290] sm:$0xff]
    %v1745 = vld [vmem:[#allocation2 + $0x298] sm:$0xff]
    %v1746 = vld [vmem:[#allocation2 + $0x2a0] sm:$0xff]
    %v1747 = vld [vmem:[#allocation2 + $0x2a8] sm:$0xff]
    %v1748 = vld [vmem:[#allocation2 + $0x2b0] sm:$0xff]
    %v1749 = vld [vmem:[#allocation2 + $0x2b8] sm:$0xff]
    %v1750 = vld [vmem:[#allocation2 + $0x2c0] sm:$0xff]
    %v1751 = vld [vmem:[#allocation2 + $0x2c8] sm:$0xff]
    %v1752 = vld [vmem:[#allocation2 + $0x2d0] sm:$0xff]
    %v1753 = vld [vmem:[#allocation2 + $0x2d8] sm:$0xff]
    %v1754 = vld [vmem:[#allocation2 + $0x2e0] sm:$0xff]
    %v1755 = vld [vmem:[#allocation2 + $0x2e8] sm:$0xff]
    %v1756 = vld [vmem:[#allocation2 + $0x2f0] sm:$0xff]
    %v1757 = vld [vmem:[#allocation2 + $0x2f8] sm:$0xff]
    %v1758 = vld [vmem:[#allocation2 + $0x300] sm:$0xff]
    %v1759 = vld [vmem:[#allocation2 + $0x308] sm:$0xff]
    %v1760 = vld [vmem:[#allocation2 + $0x310] sm:$0xff]
    %v1761 = vld [vmem:[#allocation2 + $0x318] sm:$0xff]
    %v1762 = vld [vmem:[#allocation2 + $0x320] sm:$0xff]
    %v1763 = vld [vmem:[#allocation2 + $0x328] sm:$0xff]
    %v1764 = vld [vmem:[#allocation2 + $0x330] sm:$0xff]
    %v1765 = vld [vmem:[#allocation2 + $0x338] sm:$0xff]
    %v1766 = vld [vmem:[#allocation2 + $0x340] sm:$0xff]
    %v1767 = vld [vmem:[#allocation2 + $0x348] sm:$0xff]
    %v1768 = vld [vmem:[#allocation2 + $0x350] sm:$0xff]
    %v1769 = vld [vmem:[#allocation2 + $0x358] sm:$0xff]
    %v1770 = vld [vmem:[#allocation2 + $0x360] sm:$0xff]
    %v1771 = vld [vmem:[#allocation2 + $0x368] sm:$0xff]
    %v1772 = vld [vmem:[#allocation2 + $0x370] sm:$0xff]
    %v1773 = vld [vmem:[#allocation2 + $0x378] sm:$0xff]
    %v1774 = vld [vmem:[#allocation2 + $0x380] sm:$0xff]
    %v1775 = vld [vmem:[#allocation2 + $0x388] sm:$0xff]
    %v1776 = vld [vmem:[#allocation2 + $0x390] sm:$0xff]
    %v1777 = vld [vmem:[#allocation2 + $0x398] sm:$0xff]
    %v1778 = vld [vmem:[#allocation2 + $0x3a0] sm:$0xff]
    %v1779 = vld [vmem:[#allocation2 + $0x3a8] sm:$0xff]
    %v1780 = vld [vmem:[#allocation2 + $0x3b0] sm:$0xff]
    %v1781 = vld [vmem:[#allocation2 + $0x3b8] sm:$0xff]
    %v1782 = vld [vmem:[#allocation2 + $0x3c0] sm:$0xff]
    %v1783 = vld [vmem:[#allocation2 + $0x3c8] sm:$0xff]
    %v1784 = vld [vmem:[#allocation2 + $0x3d0] sm:$0xff]
    %v1785 = vld [vmem:[#allocation2 + $0x3d8] sm:$0xff]
    %v1786 = vld [vmem:[#allocation2 + $0x3e0] sm:$0xff]
    %v1787 = vld [vmem:[#allocation2 + $0x3e8] sm:$0xff]
    %v1788 = vld [vmem:[#allocation2 + $0x3f0] sm:$0xff]
    %v1789 = vld [vmem:[#allocation2 + $0x3f8] sm:$0xff]
    %v1790 = vld [vmem:[%s4] sm:$0x3]
    %v1792 = vperm.slane %v1790, 0
    %v1793 = vperm.slane %v1790, 1
    %v1924 = vunpack.c.l.b16 %v1662
    %v1925 = vunpack.c.h.b16 %v1662
    %v1926 = vunpack.c.l.b16 %v1663
    %v1927 = vunpack.c.h.b16 %v1663
    %v1928 = vunpack.c.l.b16 %v1664
    %v1929 = vunpack.c.h.b16 %v1664
    %v1930 = vunpack.c.l.b16 %v1665
    %v1931 = vunpack.c.h.b16 %v1665
    %v1932 = vunpack.c.l.b16 %v1666
    %v1933 = vunpack.c.h.b16 %v1666
    %v1934 = vunpack.c.l.b16 %v1667
    %v1935 = vunpack.c.h.b16 %v1667
    %v1936 = vunpack.c.l.b16 %v1668
    %v1937 = vunpack.c.h.b16 %v1668
    %v1938 = vunpack.c.l.b16 %v1669
    %v1939 = vunpack.c.h.b16 %v1669
    %v1940 = vunpack.c.l.b16 %v1670
    %v1941 = vunpack.c.h.b16 %v1670
    %v1942 = vunpack.c.l.b16 %v1671
    %v1943 = vunpack.c.h.b16 %v1671
    %v1944 = vunpack.c.l.b16 %v1672
    %v1945 = vunpack.c.h.b16 %v1672
    %v1946 = vunpack.c.l.b16 %v1673
    %v1947 = vunpack.c.h.b16 %v1673
    %v1948 = vunpack.c.l.b16 %v1674
    %v1949 = vunpack.c.h.b16 %v1674
    %v1950 = vunpack.c.l.b16 %v1675
    %v1951 = vunpack.c.h.b16 %v1675
    %v1952 = vunpack.c.l.b16 %v1676
    %v1953 = vunpack.c.h.b16 %v1676
    %v1954 = vunpack.c.l.b16 %v1677
    %v1955 = vunpack.c.h.b16 %v1677
    %v1956 = vunpack.c.l.b16 %v1678
    %v1957 = vunpack.c.h.b16 %v1678
    %v1958 = vunpack.c.l.b16 %v1679
    %v1959 = vunpack.c.h.b16 %v1679
    %v1960 = vunpack.c.l.b16 %v1680
    %v1961 = vunpack.c.h.b16 %v1680
    %v1962 = vunpack.c.l.b16 %v1681
    %v1963 = vunpack.c.h.b16 %v1681
    %v1964 = vunpack.c.l.b16 %v1682
    %v1965 = vunpack.c.h.b16 %v1682
    %v1966 = vunpack.c.l.b16 %v1683
    %v1967 = vunpack.c.h.b16 %v1683
    %v1968 = vunpack.c.l.b16 %v1684
    %v1969 = vunpack.c.h.b16 %v1684
    %v1970 = vunpack.c.l.b16 %v1685
    %v1971 = vunpack.c.h.b16 %v1685
    %v1972 = vunpack.c.l.b16 %v1686
    %v1973 = vunpack.c.h.b16 %v1686
    %v1974 = vunpack.c.l.b16 %v1687
    %v1975 = vunpack.c.h.b16 %v1687
    %v1976 = vunpack.c.l.b16 %v1688
    %v1977 = vunpack.c.h.b16 %v1688
    %v1978 = vunpack.c.l.b16 %v1689
    %v1979 = vunpack.c.h.b16 %v1689
    %v1980 = vunpack.c.l.b16 %v1690
    %v1981 = vunpack.c.h.b16 %v1690
    %v1982 = vunpack.c.l.b16 %v1691
    %v1983 = vunpack.c.h.b16 %v1691
    %v1984 = vunpack.c.l.b16 %v1692
    %v1985 = vunpack.c.h.b16 %v1692
    %v1986 = vunpack.c.l.b16 %v1693
    %v1987 = vunpack.c.h.b16 %v1693
    %v1988 = vunpack.c.l.b16 %v1694
    %v1989 = vunpack.c.h.b16 %v1694
    %v1990 = vunpack.c.l.b16 %v1695
    %v1991 = vunpack.c.h.b16 %v1695
    %v1992 = vunpack.c.l.b16 %v1696
    %v1993 = vunpack.c.h.b16 %v1696
    %v1994 = vunpack.c.l.b16 %v1697
    %v1995 = vunpack.c.h.b16 %v1697
    %v1996 = vunpack.c.l.b16 %v1698
    %v1997 = vunpack.c.h.b16 %v1698
    %v1998 = vunpack.c.l.b16 %v1699
    %v1999 = vunpack.c.h.b16 %v1699
    %v2000 = vunpack.c.l.b16 %v1700
    %v2001 = vunpack.c.h.b16 %v1700
    %v2002 = vunpack.c.l.b16 %v1701
    %v2003 = vunpack.c.h.b16 %v1701
    %v2004 = vunpack.c.l.b16 %v1702
    %v2005 = vunpack.c.h.b16 %v1702
    %v2006 = vunpack.c.l.b16 %v1703
    %v2007 = vunpack.c.h.b16 %v1703
    %v2008 = vunpack.c.l.b16 %v1704
    %v2009 = vunpack.c.h.b16 %v1704
    %v2010 = vunpack.c.l.b16 %v1705
    %v2011 = vunpack.c.h.b16 %v1705
    %v2012 = vunpack.c.l.b16 %v1706
    %v2013 = vunpack.c.h.b16 %v1706
    %v2014 = vunpack.c.l.b16 %v1707
    %v2015 = vunpack.c.h.b16 %v1707
    %v2016 = vunpack.c.l.b16 %v1708
    %v2017 = vunpack.c.h.b16 %v1708
    %v2018 = vunpack.c.l.b16 %v1709
    %v2019 = vunpack.c.h.b16 %v1709
    %v2020 = vunpack.c.l.b16 %v1710
    %v2021 = vunpack.c.h.b16 %v1710
    %v2022 = vunpack.c.l.b16 %v1711
    %v2023 = vunpack.c.h.b16 %v1711
    %v2024 = vunpack.c.l.b16 %v1712
    %v2025 = vunpack.c.h.b16 %v1712
    %v2026 = vunpack.c.l.b16 %v1713
    %v2027 = vunpack.c.h.b16 %v1713
    %v2028 = vunpack.c.l.b16 %v1714
    %v2029 = vunpack.c.h.b16 %v1714
    %v2030 = vunpack.c.l.b16 %v1715
    %v2031 = vunpack.c.h.b16 %v1715
    %v2032 = vunpack.c.l.b16 %v1716
    %v2033 = vunpack.c.h.b16 %v1716
    %v2034 = vunpack.c.l.b16 %v1717
    %v2035 = vunpack.c.h.b16 %v1717
    %v2036 = vunpack.c.l.b16 %v1718
    %v2037 = vunpack.c.h.b16 %v1718
    %v2038 = vunpack.c.l.b16 %v1719
    %v2039 = vunpack.c.h.b16 %v1719
    %v2040 = vunpack.c.l.b16 %v1720
    %v2041 = vunpack.c.h.b16 %v1720
    %v2042 = vunpack.c.l.b16 %v1721
    %v2043 = vunpack.c.h.b16 %v1721
    %v2044 = vunpack.c.l.b16 %v1722
    %v2045 = vunpack.c.h.b16 %v1722
    %v2046 = vunpack.c.l.b16 %v1723
    %v2047 = vunpack.c.h.b16 %v1723
    %v2048 = vunpack.c.l.b16 %v1724
    %v2049 = vunpack.c.h.b16 %v1724
    %v2050 = vunpack.c.l.b16 %v1725
    %v2051 = vunpack.c.h.b16 %v1725
    %v2052 = vunpack.c.l.b16 %v1726
    %v2053 = vunpack.c.h.b16 %v1726
    %v2054 = vunpack.c.l.b16 %v1727
    %v2055 = vunpack.c.h.b16 %v1727
    %v2056 = vunpack.c.l.b16 %v1728
    %v2057 = vunpack.c.h.b16 %v1728
    %v2058 = vunpack.c.l.b16 %v1729
    %v2059 = vunpack.c.h.b16 %v1729
    %v2060 = vunpack.c.l.b16 %v1730
    %v2061 = vunpack.c.h.b16 %v1730
    %v2062 = vunpack.c.l.b16 %v1731
    %v2063 = vunpack.c.h.b16 %v1731
    %v2064 = vunpack.c.l.b16 %v1732
    %v2065 = vunpack.c.h.b16 %v1732
    %v2066 = vunpack.c.l.b16 %v1733
    %v2067 = vunpack.c.h.b16 %v1733
    %v2068 = vunpack.c.l.b16 %v1734
    %v2069 = vunpack.c.h.b16 %v1734
    %v2070 = vunpack.c.l.b16 %v1735
    %v2071 = vunpack.c.h.b16 %v1735
    %v2072 = vunpack.c.l.b16 %v1736
    %v2073 = vunpack.c.h.b16 %v1736
    %v2074 = vunpack.c.l.b16 %v1737
    %v2075 = vunpack.c.h.b16 %v1737
    %v2076 = vunpack.c.l.b16 %v1738
    %v2077 = vunpack.c.h.b16 %v1738
    %v2078 = vunpack.c.l.b16 %v1739
    %v2079 = vunpack.c.h.b16 %v1739
    %v2080 = vunpack.c.l.b16 %v1740
    %v2081 = vunpack.c.h.b16 %v1740
    %v2082 = vunpack.c.l.b16 %v1741
    %v2083 = vunpack.c.h.b16 %v1741
    %v2084 = vunpack.c.l.b16 %v1742
    %v2085 = vunpack.c.h.b16 %v1742
    %v2086 = vunpack.c.l.b16 %v1743
    %v2087 = vunpack.c.h.b16 %v1743
    %v2088 = vunpack.c.l.b16 %v1744
    %v2089 = vunpack.c.h.b16 %v1744
    %v2090 = vunpack.c.l.b16 %v1745
    %v2091 = vunpack.c.h.b16 %v1745
    %v2092 = vunpack.c.l.b16 %v1746
    %v2093 = vunpack.c.h.b16 %v1746
    %v2094 = vunpack.c.l.b16 %v1747
    %v2095 = vunpack.c.h.b16 %v1747
    %v2096 = vunpack.c.l.b16 %v1748
    %v2097 = vunpack.c.h.b16 %v1748
    %v2098 = vunpack.c.l.b16 %v1749
    %v2099 = vunpack.c.h.b16 %v1749
    %v2100 = vunpack.c.l.b16 %v1750
    %v2101 = vunpack.c.h.b16 %v1750
    %v2102 = vunpack.c.l.b16 %v1751
    %v2103 = vunpack.c.h.b16 %v1751
    %v2104 = vunpack.c.l.b16 %v1752
    %v2105 = vunpack.c.h.b16 %v1752
    %v2106 = vunpack.c.l.b16 %v1753
    %v2107 = vunpack.c.h.b16 %v1753
    %v2108 = vunpack.c.l.b16 %v1754
    %v2109 = vunpack.c.h.b16 %v1754
    %v2110 = vunpack.c.l.b16 %v1755
    %v2111 = vunpack.c.h.b16 %v1755
    %v2112 = vunpack.c.l.b16 %v1756
    %v2113 = vunpack.c.h.b16 %v1756
    %v2114 = vunpack.c.l.b16 %v1757
    %v2115 = vunpack.c.h.b16 %v1757
    %v2116 = vunpack.c.l.b16 %v1758
    %v2117 = vunpack.c.h.b16 %v1758
    %v2118 = vunpack.c.l.b16 %v1759
    %v2119 = vunpack.c.h.b16 %v1759
    %v2120 = vunpack.c.l.b16 %v1760
    %v2121 = vunpack.c.h.b16 %v1760
    %v2122 = vunpack.c.l.b16 %v1761
    %v2123 = vunpack.c.h.b16 %v1761
    %v2124 = vunpack.c.l.b16 %v1762
    %v2125 = vunpack.c.h.b16 %v1762
    %v2126 = vunpack.c.l.b16 %v1763
    %v2127 = vunpack.c.h.b16 %v1763
    %v2128 = vunpack.c.l.b16 %v1764
    %v2129 = vunpack.c.h.b16 %v1764
    %v2130 = vunpack.c.l.b16 %v1765
    %v2131 = vunpack.c.h.b16 %v1765
    %v2132 = vunpack.c.l.b16 %v1766
    %v2133 = vunpack.c.h.b16 %v1766
    %v2134 = vunpack.c.l.b16 %v1767
    %v2135 = vunpack.c.h.b16 %v1767
    %v2136 = vunpack.c.l.b16 %v1768
    %v2137 = vunpack.c.h.b16 %v1768
    %v2138 = vunpack.c.l.b16 %v1769
    %v2139 = vunpack.c.h.b16 %v1769
    %v2140 = vunpack.c.l.b16 %v1770
    %v2141 = vunpack.c.h.b16 %v1770
    %v2142 = vunpack.c.l.b16 %v1771
    %v2143 = vunpack.c.h.b16 %v1771
    %v2144 = vunpack.c.l.b16 %v1772
    %v2145 = vunpack.c.h.b16 %v1772
    %v2146 = vunpack.c.l.b16 %v1773
    %v2147 = vunpack.c.h.b16 %v1773
    %v2148 = vunpack.c.l.b16 %v1774
    %v2149 = vunpack.c.h.b16 %v1774
    %v2150 = vunpack.c.l.b16 %v1775
    %v2151 = vunpack.c.h.b16 %v1775
    %v2152 = vunpack.c.l.b16 %v1776
    %v2153 = vunpack.c.h.b16 %v1776
    %v2154 = vunpack.c.l.b16 %v1777
    %v2155 = vunpack.c.h.b16 %v1777
    %v2156 = vunpack.c.l.b16 %v1778
    %v2157 = vunpack.c.h.b16 %v1778
    %v2158 = vunpack.c.l.b16 %v1779
    %v2159 = vunpack.c.h.b16 %v1779
    %v2160 = vunpack.c.l.b16 %v1780
    %v2161 = vunpack.c.h.b16 %v1780
    %v2162 = vunpack.c.l.b16 %v1781
    %v2163 = vunpack.c.h.b16 %v1781
    %v2164 = vunpack.c.l.b16 %v1782
    %v2165 = vunpack.c.h.b16 %v1782
    %v2166 = vunpack.c.l.b16 %v1783
    %v2167 = vunpack.c.h.b16 %v1783
    %v2168 = vunpack.c.l.b16 %v1784
    %v2169 = vunpack.c.h.b16 %v1784
    %v2170 = vunpack.c.l.b16 %v1785
    %v2171 = vunpack.c.h.b16 %v1785
    %v2172 = vunpack.c.l.b16 %v1786
    %v2173 = vunpack.c.h.b16 %v1786
    %v2174 = vunpack.c.l.b16 %v1787
    %v2175 = vunpack.c.h.b16 %v1787
    %v2176 = vunpack.c.l.b16 %v1788
    %v2177 = vunpack.c.h.b16 %v1788
    %v2178 = vunpack.c.l.b16 %v1789
    %v2179 = vunpack.c.h.b16 %v1789
    %v2180 = vpack.c.b16 %v1926, %v1924
    %v2181 = vpack.c.b16 %v1927, %v1925
    %v2182 = vpack.c.b16 %v1930, %v1928
    %v2183 = vpack.c.b16 %v1931, %v1929
    %v2184 = vpack.c.b16 %v1934, %v1932
    %v2185 = vpack.c.b16 %v1935, %v1933
    %v2186 = vpack.c.b16 %v1938, %v1936
    %v2187 = vpack.c.b16 %v1939, %v1937
    %v2188 = vpack.c.b16 %v1942, %v1940
    %v2189 = vpack.c.b16 %v1943, %v1941
    %v2190 = vpack.c.b16 %v1946, %v1944
    %v2191 = vpack.c.b16 %v1947, %v1945
    %v2192 = vpack.c.b16 %v1950, %v1948
    %v2193 = vpack.c.b16 %v1951, %v1949
    %v2194 = vpack.c.b16 %v1954, %v1952
    %v2195 = vpack.c.b16 %v1955, %v1953
    %v2196 = vpack.c.b16 %v1958, %v1956
    %v2197 = vpack.c.b16 %v1959, %v1957
    %v2198 = vpack.c.b16 %v1962, %v1960
    %v2199 = vpack.c.b16 %v1963, %v1961
    %v2200 = vpack.c.b16 %v1966, %v1964
    %v2201 = vpack.c.b16 %v1967, %v1965
    %v2202 = vpack.c.b16 %v1970, %v1968
    %v2203 = vpack.c.b16 %v1971, %v1969
    %v2204 = vpack.c.b16 %v1974, %v1972
    %v2205 = vpack.c.b16 %v1975, %v1973
    %v2206 = vpack.c.b16 %v1978, %v1976
    %v2207 = vpack.c.b16 %v1979, %v1977
    %v2208 = vpack.c.b16 %v1982, %v1980
    %v2209 = vpack.c.b16 %v1983, %v1981
    %v2210 = vpack.c.b16 %v1986, %v1984
    %v2211 = vpack.c.b16 %v1987, %v1985
    %v2212 = vpack.c.b16 %v1990, %v1988
    %v2213 = vpack.c.b16 %v1991, %v1989
    %v2214 = vpack.c.b16 %v1994, %v1992
    %v2215 = vpack.c.b16 %v1995, %v1993
    %v2216 = vpack.c.b16 %v1998, %v1996
    %v2217 = vpack.c.b16 %v1999, %v1997
    %v2218 = vpack.c.b16 %v2002, %v2000
    %v2219 = vpack.c.b16 %v2003, %v2001
    %v2220 = vpack.c.b16 %v2006, %v2004
    %v2221 = vpack.c.b16 %v2007, %v2005
    %v2222 = vpack.c.b16 %v2010, %v2008
    %v2223 = vpack.c.b16 %v2011, %v2009
    %v2224 = vpack.c.b16 %v2014, %v2012
    %v2225 = vpack.c.b16 %v2015, %v2013
    %v2226 = vpack.c.b16 %v2018, %v2016
    %v2227 = vpack.c.b16 %v2019, %v2017
    %v2228 = vpack.c.b16 %v2022, %v2020
    %v2229 = vpack.c.b16 %v2023, %v2021
    %v2230 = vpack.c.b16 %v2026, %v2024
    %v2231 = vpack.c.b16 %v2027, %v2025
    %v2232 = vpack.c.b16 %v2030, %v2028
    %v2233 = vpack.c.b16 %v2031, %v2029
    %v2234 = vpack.c.b16 %v2034, %v2032
    %v2235 = vpack.c.b16 %v2035, %v2033
    %v2236 = vpack.c.b16 %v2038, %v2036
    %v2237 = vpack.c.b16 %v2039, %v2037
    %v2238 = vpack.c.b16 %v2042, %v2040
    %v2239 = vpack.c.b16 %v2043, %v2041
    %v2240 = vpack.c.b16 %v2046, %v2044
    %v2241 = vpack.c.b16 %v2047, %v2045
    %v2242 = vpack.c.b16 %v2050, %v2048
    %v2243 = vpack.c.b16 %v2051, %v2049
    %v2244 = vpack.c.b16 %v2054, %v2052
    %v2245 = vpack.c.b16 %v2055, %v2053
    %v2246 = vpack.c.b16 %v2058, %v2056
    %v2247 = vpack.c.b16 %v2059, %v2057
    %v2248 = vpack.c.b16 %v2062, %v2060
    %v2249 = vpack.c.b16 %v2063, %v2061
    %v2250 = vpack.c.b16 %v2066, %v2064
    %v2251 = vpack.c.b16 %v2067, %v2065
    %v2252 = vpack.c.b16 %v2070, %v2068
    %v2253 = vpack.c.b16 %v2071, %v2069
    %v2254 = vpack.c.b16 %v2074, %v2072
    %v2255 = vpack.c.b16 %v2075, %v2073
    %v2256 = vpack.c.b16 %v2078, %v2076
    %v2257 = vpack.c.b16 %v2079, %v2077
    %v2258 = vpack.c.b16 %v2082, %v2080
    %v2259 = vpack.c.b16 %v2083, %v2081
    %v2260 = vpack.c.b16 %v2086, %v2084
    %v2261 = vpack.c.b16 %v2087, %v2085
    %v2262 = vpack.c.b16 %v2090, %v2088
    %v2263 = vpack.c.b16 %v2091, %v2089
    %v2264 = vpack.c.b16 %v2094, %v2092
    %v2265 = vpack.c.b16 %v2095, %v2093
    %v2266 = vpack.c.b16 %v2098, %v2096
    %v2267 = vpack.c.b16 %v2099, %v2097
    %v2268 = vpack.c.b16 %v2102, %v2100
    %v2269 = vpack.c.b16 %v2103, %v2101
    %v2270 = vpack.c.b16 %v2106, %v2104
    %v2271 = vpack.c.b16 %v2107, %v2105
    %v2272 = vpack.c.b16 %v2110, %v2108
    %v2273 = vpack.c.b16 %v2111, %v2109
    %v2274 = vpack.c.b16 %v2114, %v2112
    %v2275 = vpack.c.b16 %v2115, %v2113
    %v2276 = vpack.c.b16 %v2118, %v2116
    %v2277 = vpack.c.b16 %v2119, %v2117
    %v2278 = vpack.c.b16 %v2122, %v2120
    %v2279 = vpack.c.b16 %v2123, %v2121
    %v2280 = vpack.c.b16 %v2126, %v2124
    %v2281 = vpack.c.b16 %v2127, %v2125
    %v2282 = vpack.c.b16 %v2130, %v2128
    %v2283 = vpack.c.b16 %v2131, %v2129
    %v2284 = vpack.c.b16 %v2134, %v2132
    %v2285 = vpack.c.b16 %v2135, %v2133
    %v2286 = vpack.c.b16 %v2138, %v2136
    %v2287 = vpack.c.b16 %v2139, %v2137
    %v2288 = vpack.c.b16 %v2142, %v2140
    %v2289 = vpack.c.b16 %v2143, %v2141
    %v2290 = vpack.c.b16 %v2146, %v2144
    %v2291 = vpack.c.b16 %v2147, %v2145
    %v2292 = vpack.c.b16 %v2150, %v2148
    %v2293 = vpack.c.b16 %v2151, %v2149
    %v2294 = vpack.c.b16 %v2154, %v2152
    %v2295 = vpack.c.b16 %v2155, %v2153
    %v2296 = vpack.c.b16 %v2158, %v2156
    %v2297 = vpack.c.b16 %v2159, %v2157
    %v2298 = vpack.c.b16 %v2162, %v2160
    %v2299 = vpack.c.b16 %v2163, %v2161
    %v2300 = vpack.c.b16 %v2166, %v2164
    %v2301 = vpack.c.b16 %v2167, %v2165
    %v2302 = vpack.c.b16 %v2170, %v2168
    %v2303 = vpack.c.b16 %v2171, %v2169
    %v2304 = vpack.c.b16 %v2174, %v2172
    %v2305 = vpack.c.b16 %v2175, %v2173
    %v2306 = vpack.c.b16 %v2178, %v2176
    %v2307 = vpack.c.b16 %v2179, %v2177
    %2436 = vmatpush.bf16.msra.mxu0 %v2194
    %2437 = vmatpush.bf16.msra.mxu0 %v2192
    %2438 = vmatpush.bf16.msra.mxu0 %v2190
    %2439 = vmatpush.bf16.msra.mxu0 %v2188
    %2440 = vmatpush.bf16.msra.mxu0 %v2186
    %2441 = vmatpush.bf16.msra.mxu0 %v2184
    %2442 = vmatpush.bf16.msra.mxu0 %v2182
    %2443 = vmatpush.bf16.msra.mxu0 %v2180
    %2444 = vmatmul.bf16.gmra.mxu0 %v1510
    %v2445 = vpop.f32.mrf.mxu0
    %v2446 = vadd.f32 %v1792, %v2445
    %v2447 = vpop.f32.mrf.mxu0
    %v2448 = vadd.f32 %v1792, %v2447
    %2449 = vmatmul.bf16.gmra.mxu0 %v1518
    %v2450 = vpop.f32.mrf.mxu0
    %v2451 = vadd.f32 %v1792, %v2450
    %v2452 = vpop.f32.mrf.mxu0
    %v2453 = vadd.f32 %v1792, %v2452
    %2454 = vmatmul.bf16.gmra.mxu0 %v1526
    %v2455 = vpop.f32.mrf.mxu0
    %v2456 = vadd.f32 %v1792, %v2455
    %v2457 = vpop.f32.mrf.mxu0
    %v2458 = vadd.f32 %v1792, %v2457
    %2459 = vmatmul.bf16.gmra.mxu0 %v1534
    %v2460 = vpop.f32.mrf.mxu0
    %v2461 = vadd.f32 %v1792, %v2460
    %v2462 = vpop.f32.mrf.mxu0
    %v2463 = vadd.f32 %v1792, %v2462
    %2464 = vmatmul.bf16.gmra.mxu0 %v1542
    %v2465 = vpop.f32.mrf.mxu0
    %v2466 = vadd.f32 %v1792, %v2465
    %v2467 = vpop.f32.mrf.mxu0
    %v2468 = vadd.f32 %v1792, %v2467
    %2469 = vmatmul.bf16.gmra.mxu0 %v1550
    %v2470 = vpop.f32.mrf.mxu0
    %v2471 = vadd.f32 %v1792, %v2470
    %v2472 = vpop.f32.mrf.mxu0
    %v2473 = vadd.f32 %v1792, %v2472
    %2474 = vmatmul.bf16.gmra.mxu0 %v1558
    %v2475 = vpop.f32.mrf.mxu0
    %v2476 = vadd.f32 %v1792, %v2475
    %v2477 = vpop.f32.mrf.mxu0
    %v2478 = vadd.f32 %v1792, %v2477
    %2479 = vmatmul.bf16.gmra.mxu0 %v1566
    %v2480 = vpop.f32.mrf.mxu0
    %v2481 = vadd.f32 %v1792, %v2480
    %v2482 = vpop.f32.mrf.mxu0
    %v2483 = vadd.f32 %v1792, %v2482
    %2484 = vmatmul.bf16.gmra.mxu0 %v1574
    %v2485 = vpop.f32.mrf.mxu0
    %v2486 = vadd.f32 %v1792, %v2485
    %v2487 = vpop.f32.mrf.mxu0
    %v2488 = vadd.f32 %v1792, %v2487
    %2489 = vmatmul.bf16.gmra.mxu0 %v1582
    %v2490 = vpop.f32.mrf.mxu0
    %v2491 = vadd.f32 %v1792, %v2490
    %v2492 = vpop.f32.mrf.mxu0
    %v2493 = vadd.f32 %v1792, %v2492
    %2494 = vmatmul.bf16.gmra.mxu0 %v1590
    %v2495 = vpop.f32.mrf.mxu0
    %v2496 = vadd.f32 %v1792, %v2495
    %v2497 = vpop.f32.mrf.mxu0
    %v2498 = vadd.f32 %v1792, %v2497
    %2499 = vmatmul.bf16.gmra.mxu0 %v1598
    %v2500 = vpop.f32.mrf.mxu0
    %v2501 = vadd.f32 %v1792, %v2500
    %v2502 = vpop.f32.mrf.mxu0
    %v2503 = vadd.f32 %v1792, %v2502
    %2504 = vmatmul.bf16.gmra.mxu0 %v1606
    %v2505 = vpop.f32.mrf.mxu0
    %v2506 = vadd.f32 %v1792, %v2505
    %v2507 = vpop.f32.mrf.mxu0
    %v2508 = vadd.f32 %v1792, %v2507
    %2509 = vmatmul.bf16.gmra.mxu0 %v1614
    %v2510 = vpop.f32.mrf.mxu0
    %v2511 = vadd.f32 %v1792, %v2510
    %v2512 = vpop.f32.mrf.mxu0
    %v2513 = vadd.f32 %v1792, %v2512
    %2514 = vmatmul.bf16.gmra.mxu0 %v1622
    %v2515 = vpop.f32.mrf.mxu0
    %v2516 = vadd.f32 %v1792, %v2515
    %v2517 = vpop.f32.mrf.mxu0
    %v2518 = vadd.f32 %v1792, %v2517
    %2519 = vmatmul.bf16.gmra.mxu0 %v1630
    %v2520 = vpop.f32.mrf.mxu0
    %v2521 = vadd.f32 %v1792, %v2520
    %v2522 = vpop.f32.mrf.mxu0
    %v2523 = vadd.f32 %v1792, %v2522
    %2524 = vmatmul.bf16.gmra.mxu0 %v1638
    %v2525 = vpop.f32.mrf.mxu0
    %v2526 = vadd.f32 %v1792, %v2525
    %v2527 = vpop.f32.mrf.mxu0
    %v2528 = vadd.f32 %v1792, %v2527
    %2529 = vmatmul.bf16.gmra.mxu0 %v1646
    %v2530 = vpop.f32.mrf.mxu0
    %v2531 = vadd.f32 %v1792, %v2530
    %v2532 = vpop.f32.mrf.mxu0
    %v2533 = vadd.f32 %v1792, %v2532
    %2534 = vmatmul.bf16.gmra.mxu0 %v1654
    %v2535 = vpop.f32.mrf.mxu0
    %v2536 = vadd.f32 %v1792, %v2535
    %v2537 = vpop.f32.mrf.mxu0
    %v2538 = vadd.f32 %v1792, %v2537
    %2539 = vdwg.mxu0
    %2540 = vmatpush.bf16.msra.mxu0 %v2210
    %2541 = vmatpush.bf16.msra.mxu0 %v2208
    %2542 = vmatpush.bf16.msra.mxu0 %v2206
    %2543 = vmatpush.bf16.msra.mxu0 %v2204
    %2544 = vmatpush.bf16.msra.mxu0 %v2202
    %2545 = vmatpush.bf16.msra.mxu0 %v2200
    %2546 = vmatpush.bf16.msra.mxu0 %v2198
    %2547 = vmatpush.bf16.msra.mxu0 %v2196
    %2548 = vmatmul.bf16.gmra.mxu0 %v1511
    %v2549 = vpop.f32.mrf.mxu0
    %v2550 = vadd.f32 %v2446, %v2549
    %v2551 = vpop.f32.mrf.mxu0
    %v2552 = vadd.f32 %v2448, %v2551
    %2553 = vmatmul.bf16.gmra.mxu0 %v1519
    %v2554 = vpop.f32.mrf.mxu0
    %v2555 = vadd.f32 %v2451, %v2554
    %v2556 = vpop.f32.mrf.mxu0
    %v2557 = vadd.f32 %v2453, %v2556
    %2558 = vmatmul.bf16.gmra.mxu0 %v1527
    %v2559 = vpop.f32.mrf.mxu0
    %v2560 = vadd.f32 %v2456, %v2559
    %v2561 = vpop.f32.mrf.mxu0
    %v2562 = vadd.f32 %v2458, %v2561
    %2563 = vmatmul.bf16.gmra.mxu0 %v1535
    %v2564 = vpop.f32.mrf.mxu0
    %v2565 = vadd.f32 %v2461, %v2564
    %v2566 = vpop.f32.mrf.mxu0
    %v2567 = vadd.f32 %v2463, %v2566
    %2568 = vmatmul.bf16.gmra.mxu0 %v1543
    %v2569 = vpop.f32.mrf.mxu0
    %v2570 = vadd.f32 %v2466, %v2569
    %v2571 = vpop.f32.mrf.mxu0
    %v2572 = vadd.f32 %v2468, %v2571
    %2573 = vmatmul.bf16.gmra.mxu0 %v1551
    %v2574 = vpop.f32.mrf.mxu0
    %v2575 = vadd.f32 %v2471, %v2574
    %v2576 = vpop.f32.mrf.mxu0
    %v2577 = vadd.f32 %v2473, %v2576
    %2578 = vmatmul.bf16.gmra.mxu0 %v1559
    %v2579 = vpop.f32.mrf.mxu0
    %v2580 = vadd.f32 %v2476, %v2579
    %v2581 = vpop.f32.mrf.mxu0
    %v2582 = vadd.f32 %v2478, %v2581
    %2583 = vmatmul.bf16.gmra.mxu0 %v1567
    %v2584 = vpop.f32.mrf.mxu0
    %v2585 = vadd.f32 %v2481, %v2584
    %v2586 = vpop.f32.mrf.mxu0
    %v2587 = vadd.f32 %v2483, %v2586
    %2588 = vmatmul.bf16.gmra.mxu0 %v1575
    %v2589 = vpop.f32.mrf.mxu0
    %v2590 = vadd.f32 %v2486, %v2589
    %v2591 = vpop.f32.mrf.mxu0
    %v2592 = vadd.f32 %v2488, %v2591
    %2593 = vmatmul.bf16.gmra.mxu0 %v1583
    %v2594 = vpop.f32.mrf.mxu0
    %v2595 = vadd.f32 %v2491, %v2594
    %v2596 = vpop.f32.mrf.mxu0
    %v2597 = vadd.f32 %v2493, %v2596
    %2598 = vmatmul.bf16.gmra.mxu0 %v1591
    %v2599 = vpop.f32.mrf.mxu0
    %v2600 = vadd.f32 %v2496, %v2599
    %v2601 = vpop.f32.mrf.mxu0
    %v2602 = vadd.f32 %v2498, %v2601
    %2603 = vmatmul.bf16.gmra.mxu0 %v1599
    %v2604 = vpop.f32.mrf.mxu0
    %v2605 = vadd.f32 %v2501, %v2604
    %v2606 = vpop.f32.mrf.mxu0
    %v2607 = vadd.f32 %v2503, %v2606
    %2608 = vmatmul.bf16.gmra.mxu0 %v1607
    %v2609 = vpop.f32.mrf.mxu0
    %v2610 = vadd.f32 %v2506, %v2609
    %v2611 = vpop.f32.mrf.mxu0
    %v2612 = vadd.f32 %v2508, %v2611
    %2613 = vmatmul.bf16.gmra.mxu0 %v1615
    %v2614 = vpop.f32.mrf.mxu0
    %v2615 = vadd.f32 %v2511, %v2614
    %v2616 = vpop.f32.mrf.mxu0
    %v2617 = vadd.f32 %v2513, %v2616
    %2618 = vmatmul.bf16.gmra.mxu0 %v1623
    %v2619 = vpop.f32.mrf.mxu0
    %v2620 = vadd.f32 %v2516, %v2619
    %v2621 = vpop.f32.mrf.mxu0
    %v2622 = vadd.f32 %v2518, %v2621
    %2623 = vmatmul.bf16.gmra.mxu0 %v1631
    %v2624 = vpop.f32.mrf.mxu0
    %v2625 = vadd.f32 %v2521, %v2624
    %v2626 = vpop.f32.mrf.mxu0
    %v2627 = vadd.f32 %v2523, %v2626
    %2628 = vmatmul.bf16.gmra.mxu0 %v1639
    %v2629 = vpop.f32.mrf.mxu0
    %v2630 = vadd.f32 %v2526, %v2629
    %v2631 = vpop.f32.mrf.mxu0
    %v2632 = vadd.f32 %v2528, %v2631
    %2633 = vmatmul.bf16.gmra.mxu0 %v1647
    %v2634 = vpop.f32.mrf.mxu0
    %v2635 = vadd.f32 %v2531, %v2634
    %v2636 = vpop.f32.mrf.mxu0
    %v2637 = vadd.f32 %v2533, %v2636
    %2638 = vmatmul.bf16.gmra.mxu0 %v1655
    %v2639 = vpop.f32.mrf.mxu0
    %v2640 = vadd.f32 %v2536, %v2639
    %v2641 = vpop.f32.mrf.mxu0
    %v2642 = vadd.f32 %v2538, %v2641
    %2643 = vdwg.mxu0
    %2644 = vmatpush.bf16.msra.mxu0 %v2226
    %2645 = vmatpush.bf16.msra.mxu0 %v2224
    %2646 = vmatpush.bf16.msra.mxu0 %v2222
    %2647 = vmatpush.bf16.msra.mxu0 %v2220
    %2648 = vmatpush.bf16.msra.mxu0 %v2218
    %2649 = vmatpush.bf16.msra.mxu0 %v2216
    %2650 = vmatpush.bf16.msra.mxu0 %v2214
    %2651 = vmatpush.bf16.msra.mxu0 %v2212
    %2652 = vmatmul.bf16.gmra.mxu0 %v1512
    %v2653 = vpop.f32.mrf.mxu0
    %v2654 = vadd.f32 %v2550, %v2653
    %v2655 = vpop.f32.mrf.mxu0
    %v2656 = vadd.f32 %v2552, %v2655
    %2657 = vmatmul.bf16.gmra.mxu0 %v1520
    %v2658 = vpop.f32.mrf.mxu0
    %v2659 = vadd.f32 %v2555, %v2658
    %v2660 = vpop.f32.mrf.mxu0
    %v2661 = vadd.f32 %v2557, %v2660
    %2662 = vmatmul.bf16.gmra.mxu0 %v1528
    %v2663 = vpop.f32.mrf.mxu0
    %v2664 = vadd.f32 %v2560, %v2663
    %v2665 = vpop.f32.mrf.mxu0
    %v2666 = vadd.f32 %v2562, %v2665
    %2667 = vmatmul.bf16.gmra.mxu0 %v1536
    %v2668 = vpop.f32.mrf.mxu0
    %v2669 = vadd.f32 %v2565, %v2668
    %v2670 = vpop.f32.mrf.mxu0
    %v2671 = vadd.f32 %v2567, %v2670
    %2672 = vmatmul.bf16.gmra.mxu0 %v1544
    %v2673 = vpop.f32.mrf.mxu0
    %v2674 = vadd.f32 %v2570, %v2673
    %v2675 = vpop.f32.mrf.mxu0
    %v2676 = vadd.f32 %v2572, %v2675
    %2677 = vmatmul.bf16.gmra.mxu0 %v1552
    %v2678 = vpop.f32.mrf.mxu0
    %v2679 = vadd.f32 %v2575, %v2678
    %v2680 = vpop.f32.mrf.mxu0
    %v2681 = vadd.f32 %v2577, %v2680
    %2682 = vmatmul.bf16.gmra.mxu0 %v1560
    %v2683 = vpop.f32.mrf.mxu0
    %v2684 = vadd.f32 %v2580, %v2683
    %v2685 = vpop.f32.mrf.mxu0
    %v2686 = vadd.f32 %v2582, %v2685
    %2687 = vmatmul.bf16.gmra.mxu0 %v1568
    %v2688 = vpop.f32.mrf.mxu0
    %v2689 = vadd.f32 %v2585, %v2688
    %v2690 = vpop.f32.mrf.mxu0
    %v2691 = vadd.f32 %v2587, %v2690
    %2692 = vmatmul.bf16.gmra.mxu0 %v1576
    %v2693 = vpop.f32.mrf.mxu0
    %v2694 = vadd.f32 %v2590, %v2693
    %v2695 = vpop.f32.mrf.mxu0
    %v2696 = vadd.f32 %v2592, %v2695
    %2697 = vmatmul.bf16.gmra.mxu0 %v1584
    %v2698 = vpop.f32.mrf.mxu0
    %v2699 = vadd.f32 %v2595, %v2698
    %v2700 = vpop.f32.mrf.mxu0
    %v2701 = vadd.f32 %v2597, %v2700
    %2702 = vmatmul.bf16.gmra.mxu0 %v1592
    %v2703 = vpop.f32.mrf.mxu0
    %v2704 = vadd.f32 %v2600, %v2703
    %v2705 = vpop.f32.mrf.mxu0
    %v2706 = vadd.f32 %v2602, %v2705
    %2707 = vmatmul.bf16.gmra.mxu0 %v1600
    %v2708 = vpop.f32.mrf.mxu0
    %v2709 = vadd.f32 %v2605, %v2708
    %v2710 = vpop.f32.mrf.mxu0
    %v2711 = vadd.f32 %v2607, %v2710
    %2712 = vmatmul.bf16.gmra.mxu0 %v1608
    %v2713 = vpop.f32.mrf.mxu0
    %v2714 = vadd.f32 %v2610, %v2713
    %v2715 = vpop.f32.mrf.mxu0
    %v2716 = vadd.f32 %v2612, %v2715
    %2717 = vmatmul.bf16.gmra.mxu0 %v1616
    %v2718 = vpop.f32.mrf.mxu0
    %v2719 = vadd.f32 %v2615, %v2718
    %v2720 = vpop.f32.mrf.mxu0
    %v2721 = vadd.f32 %v2617, %v2720
    %2722 = vmatmul.bf16.gmra.mxu0 %v1624
    %v2723 = vpop.f32.mrf.mxu0
    %v2724 = vadd.f32 %v2620, %v2723
    %v2725 = vpop.f32.mrf.mxu0
    %v2726 = vadd.f32 %v2622, %v2725
    %2727 = vmatmul.bf16.gmra.mxu0 %v1632
    %v2728 = vpop.f32.mrf.mxu0
    %v2729 = vadd.f32 %v2625, %v2728
    %v2730 = vpop.f32.mrf.mxu0
    %v2731 = vadd.f32 %v2627, %v2730
    %2732 = vmatmul.bf16.gmra.mxu0 %v1640
    %v2733 = vpop.f32.mrf.mxu0
    %v2734 = vadd.f32 %v2630, %v2733
    %v2735 = vpop.f32.mrf.mxu0
    %v2736 = vadd.f32 %v2632, %v2735
    %2737 = vmatmul.bf16.gmra.mxu0 %v1648
    %v2738 = vpop.f32.mrf.mxu0
    %v2739 = vadd.f32 %v2635, %v2738
    %v2740 = vpop.f32.mrf.mxu0
    %v2741 = vadd.f32 %v2637, %v2740
    %2742 = vmatmul.bf16.gmra.mxu0 %v1656
    %v2743 = vpop.f32.mrf.mxu0
    %v2744 = vadd.f32 %v2640, %v2743
    %v2745 = vpop.f32.mrf.mxu0
    %v2746 = vadd.f32 %v2642, %v2745
    %2747 = vdwg.mxu0
    %2748 = vmatpush.bf16.msra.mxu0 %v2242
    %2749 = vmatpush.bf16.msra.mxu0 %v2240
    %2750 = vmatpush.bf16.msra.mxu0 %v2238
    %2751 = vmatpush.bf16.msra.mxu0 %v2236
    %2752 = vmatpush.bf16.msra.mxu0 %v2234
    %2753 = vmatpush.bf16.msra.mxu0 %v2232
    %2754 = vmatpush.bf16.msra.mxu0 %v2230
    %2755 = vmatpush.bf16.msra.mxu0 %v2228
    %2756 = vmatmul.bf16.gmra.mxu0 %v1513
    %v2757 = vpop.f32.mrf.mxu0
    %v2758 = vadd.f32 %v2654, %v2757
    %v2759 = vpop.f32.mrf.mxu0
    %v2760 = vadd.f32 %v2656, %v2759
    %2761 = vmatmul.bf16.gmra.mxu0 %v1521
    %v2762 = vpop.f32.mrf.mxu0
    %v2763 = vadd.f32 %v2659, %v2762
    %v2764 = vpop.f32.mrf.mxu0
    %v2765 = vadd.f32 %v2661, %v2764
    %2766 = vmatmul.bf16.gmra.mxu0 %v1529
    %v2767 = vpop.f32.mrf.mxu0
    %v2768 = vadd.f32 %v2664, %v2767
    %v2769 = vpop.f32.mrf.mxu0
    %v2770 = vadd.f32 %v2666, %v2769
    %2771 = vmatmul.bf16.gmra.mxu0 %v1537
    %v2772 = vpop.f32.mrf.mxu0
    %v2773 = vadd.f32 %v2669, %v2772
    %v2774 = vpop.f32.mrf.mxu0
    %v2775 = vadd.f32 %v2671, %v2774
    %2776 = vmatmul.bf16.gmra.mxu0 %v1545
    %v2777 = vpop.f32.mrf.mxu0
    %v2778 = vadd.f32 %v2674, %v2777
    %v2779 = vpop.f32.mrf.mxu0
    %v2780 = vadd.f32 %v2676, %v2779
    %2781 = vmatmul.bf16.gmra.mxu0 %v1553
    %v2782 = vpop.f32.mrf.mxu0
    %v2783 = vadd.f32 %v2679, %v2782
    %v2784 = vpop.f32.mrf.mxu0
    %v2785 = vadd.f32 %v2681, %v2784
    %2786 = vmatmul.bf16.gmra.mxu0 %v1561
    %v2787 = vpop.f32.mrf.mxu0
    %v2788 = vadd.f32 %v2684, %v2787
    %v2789 = vpop.f32.mrf.mxu0
    %v2790 = vadd.f32 %v2686, %v2789
    %2791 = vmatmul.bf16.gmra.mxu0 %v1569
    %v2792 = vpop.f32.mrf.mxu0
    %v2793 = vadd.f32 %v2689, %v2792
    %v2794 = vpop.f32.mrf.mxu0
    %v2795 = vadd.f32 %v2691, %v2794
    %2796 = vmatmul.bf16.gmra.mxu0 %v1577
    %v2797 = vpop.f32.mrf.mxu0
    %v2798 = vadd.f32 %v2694, %v2797
    %v2799 = vpop.f32.mrf.mxu0
    %v2800 = vadd.f32 %v2696, %v2799
    %2801 = vmatmul.bf16.gmra.mxu0 %v1585
    %v2802 = vpop.f32.mrf.mxu0
    %v2803 = vadd.f32 %v2699, %v2802
    %v2804 = vpop.f32.mrf.mxu0
    %v2805 = vadd.f32 %v2701, %v2804
    %2806 = vmatmul.bf16.gmra.mxu0 %v1593
    %v2807 = vpop.f32.mrf.mxu0
    %v2808 = vadd.f32 %v2704, %v2807
    %v2809 = vpop.f32.mrf.mxu0
    %v2810 = vadd.f32 %v2706, %v2809
    %2811 = vmatmul.bf16.gmra.mxu0 %v1601
    %v2812 = vpop.f32.mrf.mxu0
    %v2813 = vadd.f32 %v2709, %v2812
    %v2814 = vpop.f32.mrf.mxu0
    %v2815 = vadd.f32 %v2711, %v2814
    %2816 = vmatmul.bf16.gmra.mxu0 %v1609
    %v2817 = vpop.f32.mrf.mxu0
    %v2818 = vadd.f32 %v2714, %v2817
    %v2819 = vpop.f32.mrf.mxu0
    %v2820 = vadd.f32 %v2716, %v2819
    %2821 = vmatmul.bf16.gmra.mxu0 %v1617
    %v2822 = vpop.f32.mrf.mxu0
    %v2823 = vadd.f32 %v2719, %v2822
    %v2824 = vpop.f32.mrf.mxu0
    %v2825 = vadd.f32 %v2721, %v2824
    %2826 = vmatmul.bf16.gmra.mxu0 %v1625
    %v2827 = vpop.f32.mrf.mxu0
    %v2828 = vadd.f32 %v2724, %v2827
    %v2829 = vpop.f32.mrf.mxu0
    %v2830 = vadd.f32 %v2726, %v2829
    %2831 = vmatmul.bf16.gmra.mxu0 %v1633
    %v2832 = vpop.f32.mrf.mxu0
    %v2833 = vadd.f32 %v2729, %v2832
    %v2834 = vpop.f32.mrf.mxu0
    %v2835 = vadd.f32 %v2731, %v2834
    %2836 = vmatmul.bf16.gmra.mxu0 %v1641
    %v2837 = vpop.f32.mrf.mxu0
    %v2838 = vadd.f32 %v2734, %v2837
    %v2839 = vpop.f32.mrf.mxu0
    %v2840 = vadd.f32 %v2736, %v2839
    %2841 = vmatmul.bf16.gmra.mxu0 %v1649
    %v2842 = vpop.f32.mrf.mxu0
    %v2843 = vadd.f32 %v2739, %v2842
    %v2844 = vpop.f32.mrf.mxu0
    %v2845 = vadd.f32 %v2741, %v2844
    %2846 = vmatmul.bf16.gmra.mxu0 %v1657
    %v2847 = vpop.f32.mrf.mxu0
    %v2848 = vadd.f32 %v2744, %v2847
    %v2849 = vpop.f32.mrf.mxu0
    %v2850 = vadd.f32 %v2746, %v2849
    %2851 = vdwg.mxu0
    %2852 = vmatpush.bf16.msra.mxu0 %v2258
    %2853 = vmatpush.bf16.msra.mxu0 %v2256
    %2854 = vmatpush.bf16.msra.mxu0 %v2254
    %2855 = vmatpush.bf16.msra.mxu0 %v2252
    %2856 = vmatpush.bf16.msra.mxu0 %v2250
    %2857 = vmatpush.bf16.msra.mxu0 %v2248
    %2858 = vmatpush.bf16.msra.mxu0 %v2246
    %2859 = vmatpush.bf16.msra.mxu0 %v2244
    %2860 = vmatmul.bf16.gmra.mxu0 %v1514
    %v2861 = vpop.f32.mrf.mxu0
    %v2862 = vadd.f32 %v2758, %v2861
    %v2863 = vpop.f32.mrf.mxu0
    %v2864 = vadd.f32 %v2760, %v2863
    %2865 = vmatmul.bf16.gmra.mxu0 %v1522
    %v2866 = vpop.f32.mrf.mxu0
    %v2867 = vadd.f32 %v2763, %v2866
    %v2868 = vpop.f32.mrf.mxu0
    %v2869 = vadd.f32 %v2765, %v2868
    %2870 = vmatmul.bf16.gmra.mxu0 %v1530
    %v2871 = vpop.f32.mrf.mxu0
    %v2872 = vadd.f32 %v2768, %v2871
    %v2873 = vpop.f32.mrf.mxu0
    %v2874 = vadd.f32 %v2770, %v2873
    %2875 = vmatmul.bf16.gmra.mxu0 %v1538
    %v2876 = vpop.f32.mrf.mxu0
    %v2877 = vadd.f32 %v2773, %v2876
    %v2878 = vpop.f32.mrf.mxu0
    %v2879 = vadd.f32 %v2775, %v2878
    %2880 = vmatmul.bf16.gmra.mxu0 %v1546
    %v2881 = vpop.f32.mrf.mxu0
    %v2882 = vadd.f32 %v2778, %v2881
    %v2883 = vpop.f32.mrf.mxu0
    %v2884 = vadd.f32 %v2780, %v2883
    %2885 = vmatmul.bf16.gmra.mxu0 %v1554
    %v2886 = vpop.f32.mrf.mxu0
    %v2887 = vadd.f32 %v2783, %v2886
    %v2888 = vpop.f32.mrf.mxu0
    %v2889 = vadd.f32 %v2785, %v2888
    %2890 = vmatmul.bf16.gmra.mxu0 %v1562
    %v2891 = vpop.f32.mrf.mxu0
    %v2892 = vadd.f32 %v2788, %v2891
    %v2893 = vpop.f32.mrf.mxu0
    %v2894 = vadd.f32 %v2790, %v2893
    %2895 = vmatmul.bf16.gmra.mxu0 %v1570
    %v2896 = vpop.f32.mrf.mxu0
    %v2897 = vadd.f32 %v2793, %v2896
    %v2898 = vpop.f32.mrf.mxu0
    %v2899 = vadd.f32 %v2795, %v2898
    %2900 = vmatmul.bf16.gmra.mxu0 %v1578
    %v2901 = vpop.f32.mrf.mxu0
    %v2902 = vadd.f32 %v2798, %v2901
    %v2903 = vpop.f32.mrf.mxu0
    %v2904 = vadd.f32 %v2800, %v2903
    %2905 = vmatmul.bf16.gmra.mxu0 %v1586
    %v2906 = vpop.f32.mrf.mxu0
    %v2907 = vadd.f32 %v2803, %v2906
    %v2908 = vpop.f32.mrf.mxu0
    %v2909 = vadd.f32 %v2805, %v2908
    %2910 = vmatmul.bf16.gmra.mxu0 %v1594
    %v2911 = vpop.f32.mrf.mxu0
    %v2912 = vadd.f32 %v2808, %v2911
    %v2913 = vpop.f32.mrf.mxu0
    %v2914 = vadd.f32 %v2810, %v2913
    %2915 = vmatmul.bf16.gmra.mxu0 %v1602
    %v2916 = vpop.f32.mrf.mxu0
    %v2917 = vadd.f32 %v2813, %v2916
    %v2918 = vpop.f32.mrf.mxu0
    %v2919 = vadd.f32 %v2815, %v2918
    %2920 = vmatmul.bf16.gmra.mxu0 %v1610
    %v2921 = vpop.f32.mrf.mxu0
    %v2922 = vadd.f32 %v2818, %v2921
    %v2923 = vpop.f32.mrf.mxu0
    %v2924 = vadd.f32 %v2820, %v2923
    %2925 = vmatmul.bf16.gmra.mxu0 %v1618
    %v2926 = vpop.f32.mrf.mxu0
    %v2927 = vadd.f32 %v2823, %v2926
    %v2928 = vpop.f32.mrf.mxu0
    %v2929 = vadd.f32 %v2825, %v2928
    %2930 = vmatmul.bf16.gmra.mxu0 %v1626
    %v2931 = vpop.f32.mrf.mxu0
    %v2932 = vadd.f32 %v2828, %v2931
    %v2933 = vpop.f32.mrf.mxu0
    %v2934 = vadd.f32 %v2830, %v2933
    %2935 = vmatmul.bf16.gmra.mxu0 %v1634
    %v2936 = vpop.f32.mrf.mxu0
    %v2937 = vadd.f32 %v2833, %v2936
    %v2938 = vpop.f32.mrf.mxu0
    %v2939 = vadd.f32 %v2835, %v2938
    %2940 = vmatmul.bf16.gmra.mxu0 %v1642
    %v2941 = vpop.f32.mrf.mxu0
    %v2942 = vadd.f32 %v2838, %v2941
    %v2943 = vpop.f32.mrf.mxu0
    %v2944 = vadd.f32 %v2840, %v2943
    %2945 = vmatmul.bf16.gmra.mxu0 %v1650
    %v2946 = vpop.f32.mrf.mxu0
    %v2947 = vadd.f32 %v2843, %v2946
    %v2948 = vpop.f32.mrf.mxu0
    %v2949 = vadd.f32 %v2845, %v2948
    %2950 = vmatmul.bf16.gmra.mxu0 %v1658
    %v2951 = vpop.f32.mrf.mxu0
    %v2952 = vadd.f32 %v2848, %v2951
    %v2953 = vpop.f32.mrf.mxu0
    %v2954 = vadd.f32 %v2850, %v2953
    %2955 = vdwg.mxu0
    %2956 = vmatpush.bf16.msra.mxu0 %v2274
    %2957 = vmatpush.bf16.msra.mxu0 %v2272
    %2958 = vmatpush.bf16.msra.mxu0 %v2270
    %2959 = vmatpush.bf16.msra.mxu0 %v2268
    %2960 = vmatpush.bf16.msra.mxu0 %v2266
    %2961 = vmatpush.bf16.msra.mxu0 %v2264
    %2962 = vmatpush.bf16.msra.mxu0 %v2262
    %2963 = vmatpush.bf16.msra.mxu0 %v2260
    %2964 = vmatmul.bf16.gmra.mxu0 %v1515
    %v2965 = vpop.f32.mrf.mxu0
    %v2966 = vadd.f32 %v2862, %v2965
    %v2967 = vpop.f32.mrf.mxu0
    %v2968 = vadd.f32 %v2864, %v2967
    %2969 = vmatmul.bf16.gmra.mxu0 %v1523
    %v2970 = vpop.f32.mrf.mxu0
    %v2971 = vadd.f32 %v2867, %v2970
    %v2972 = vpop.f32.mrf.mxu0
    %v2973 = vadd.f32 %v2869, %v2972
    %2974 = vmatmul.bf16.gmra.mxu0 %v1531
    %v2975 = vpop.f32.mrf.mxu0
    %v2976 = vadd.f32 %v2872, %v2975
    %v2977 = vpop.f32.mrf.mxu0
    %v2978 = vadd.f32 %v2874, %v2977
    %2979 = vmatmul.bf16.gmra.mxu0 %v1539
    %v2980 = vpop.f32.mrf.mxu0
    %v2981 = vadd.f32 %v2877, %v2980
    %v2982 = vpop.f32.mrf.mxu0
    %v2983 = vadd.f32 %v2879, %v2982
    %2984 = vmatmul.bf16.gmra.mxu0 %v1547
    %v2985 = vpop.f32.mrf.mxu0
    %v2986 = vadd.f32 %v2882, %v2985
    %v2987 = vpop.f32.mrf.mxu0
    %v2988 = vadd.f32 %v2884, %v2987
    %2989 = vmatmul.bf16.gmra.mxu0 %v1555
    %v2990 = vpop.f32.mrf.mxu0
    %v2991 = vadd.f32 %v2887, %v2990
    %v2992 = vpop.f32.mrf.mxu0
    %v2993 = vadd.f32 %v2889, %v2992
    %2994 = vmatmul.bf16.gmra.mxu0 %v1563
    %v2995 = vpop.f32.mrf.mxu0
    %v2996 = vadd.f32 %v2892, %v2995
    %v2997 = vpop.f32.mrf.mxu0
    %v2998 = vadd.f32 %v2894, %v2997
    %2999 = vmatmul.bf16.gmra.mxu0 %v1571
    %v3000 = vpop.f32.mrf.mxu0
    %v3001 = vadd.f32 %v2897, %v3000
    %v3002 = vpop.f32.mrf.mxu0
    %v3003 = vadd.f32 %v2899, %v3002
    %3004 = vmatmul.bf16.gmra.mxu0 %v1579
    %v3005 = vpop.f32.mrf.mxu0
    %v3006 = vadd.f32 %v2902, %v3005
    %v3007 = vpop.f32.mrf.mxu0
    %v3008 = vadd.f32 %v2904, %v3007
    %3009 = vmatmul.bf16.gmra.mxu0 %v1587
    %v3010 = vpop.f32.mrf.mxu0
    %v3011 = vadd.f32 %v2907, %v3010
    %v3012 = vpop.f32.mrf.mxu0
    %v3013 = vadd.f32 %v2909, %v3012
    %3014 = vmatmul.bf16.gmra.mxu0 %v1595
    %v3015 = vpop.f32.mrf.mxu0
    %v3016 = vadd.f32 %v2912, %v3015
    %v3017 = vpop.f32.mrf.mxu0
    %v3018 = vadd.f32 %v2914, %v3017
    %3019 = vmatmul.bf16.gmra.mxu0 %v1603
    %v3020 = vpop.f32.mrf.mxu0
    %v3021 = vadd.f32 %v2917, %v3020
    %v3022 = vpop.f32.mrf.mxu0
    %v3023 = vadd.f32 %v2919, %v3022
    %3024 = vmatmul.bf16.gmra.mxu0 %v1611
    %v3025 = vpop.f32.mrf.mxu0
    %v3026 = vadd.f32 %v2922, %v3025
    %v3027 = vpop.f32.mrf.mxu0
    %v3028 = vadd.f32 %v2924, %v3027
    %3029 = vmatmul.bf16.gmra.mxu0 %v1619
    %v3030 = vpop.f32.mrf.mxu0
    %v3031 = vadd.f32 %v2927, %v3030
    %v3032 = vpop.f32.mrf.mxu0
    %v3033 = vadd.f32 %v2929, %v3032
    %3034 = vmatmul.bf16.gmra.mxu0 %v1627
    %v3035 = vpop.f32.mrf.mxu0
    %v3036 = vadd.f32 %v2932, %v3035
    %v3037 = vpop.f32.mrf.mxu0
    %v3038 = vadd.f32 %v2934, %v3037
    %3039 = vmatmul.bf16.gmra.mxu0 %v1635
    %v3040 = vpop.f32.mrf.mxu0
    %v3041 = vadd.f32 %v2937, %v3040
    %v3042 = vpop.f32.mrf.mxu0
    %v3043 = vadd.f32 %v2939, %v3042
    %3044 = vmatmul.bf16.gmra.mxu0 %v1643
    %v3045 = vpop.f32.mrf.mxu0
    %v3046 = vadd.f32 %v2942, %v3045
    %v3047 = vpop.f32.mrf.mxu0
    %v3048 = vadd.f32 %v2944, %v3047
    %3049 = vmatmul.bf16.gmra.mxu0 %v1651
    %v3050 = vpop.f32.mrf.mxu0
    %v3051 = vadd.f32 %v2947, %v3050
    %v3052 = vpop.f32.mrf.mxu0
    %v3053 = vadd.f32 %v2949, %v3052
    %3054 = vmatmul.bf16.gmra.mxu0 %v1659
    %v3055 = vpop.f32.mrf.mxu0
    %v3056 = vadd.f32 %v2952, %v3055
    %v3057 = vpop.f32.mrf.mxu0
    %v3058 = vadd.f32 %v2954, %v3057
    %3059 = vdwg.mxu0
    %3060 = vmatpush.bf16.msra.mxu0 %v2290
    %3061 = vmatpush.bf16.msra.mxu0 %v2288
    %3062 = vmatpush.bf16.msra.mxu0 %v2286
    %3063 = vmatpush.bf16.msra.mxu0 %v2284
    %3064 = vmatpush.bf16.msra.mxu0 %v2282
    %3065 = vmatpush.bf16.msra.mxu0 %v2280
    %3066 = vmatpush.bf16.msra.mxu0 %v2278
    %3067 = vmatpush.bf16.msra.mxu0 %v2276
    %3068 = vmatmul.bf16.gmra.mxu0 %v1516
    %v3069 = vpop.f32.mrf.mxu0
    %v3070 = vadd.f32 %v2966, %v3069
    %v3071 = vpop.f32.mrf.mxu0
    %v3072 = vadd.f32 %v2968, %v3071
    %3073 = vmatmul.bf16.gmra.mxu0 %v1524
    %v3074 = vpop.f32.mrf.mxu0
    %v3075 = vadd.f32 %v2971, %v3074
    %v3076 = vpop.f32.mrf.mxu0
    %v3077 = vadd.f32 %v2973, %v3076
    %3078 = vmatmul.bf16.gmra.mxu0 %v1532
    %v3079 = vpop.f32.mrf.mxu0
    %v3080 = vadd.f32 %v2976, %v3079
    %v3081 = vpop.f32.mrf.mxu0
    %v3082 = vadd.f32 %v2978, %v3081
    %3083 = vmatmul.bf16.gmra.mxu0 %v1540
    %v3084 = vpop.f32.mrf.mxu0
    %v3085 = vadd.f32 %v2981, %v3084
    %v3086 = vpop.f32.mrf.mxu0
    %v3087 = vadd.f32 %v2983, %v3086
    %3088 = vmatmul.bf16.gmra.mxu0 %v1548
    %v3089 = vpop.f32.mrf.mxu0
    %v3090 = vadd.f32 %v2986, %v3089
    %v3091 = vpop.f32.mrf.mxu0
    %v3092 = vadd.f32 %v2988, %v3091
    %3093 = vmatmul.bf16.gmra.mxu0 %v1556
    %v3094 = vpop.f32.mrf.mxu0
    %v3095 = vadd.f32 %v2991, %v3094
    %v3096 = vpop.f32.mrf.mxu0
    %v3097 = vadd.f32 %v2993, %v3096
    %3098 = vmatmul.bf16.gmra.mxu0 %v1564
    %v3099 = vpop.f32.mrf.mxu0
    %v3100 = vadd.f32 %v2996, %v3099
    %v3101 = vpop.f32.mrf.mxu0
    %v3102 = vadd.f32 %v2998, %v3101
    %3103 = vmatmul.bf16.gmra.mxu0 %v1572
    %v3104 = vpop.f32.mrf.mxu0
    %v3105 = vadd.f32 %v3001, %v3104
    %v3106 = vpop.f32.mrf.mxu0
    %v3107 = vadd.f32 %v3003, %v3106
    %3108 = vmatmul.bf16.gmra.mxu0 %v1580
    %v3109 = vpop.f32.mrf.mxu0
    %v3110 = vadd.f32 %v3006, %v3109
    %v3111 = vpop.f32.mrf.mxu0
    %v3112 = vadd.f32 %v3008, %v3111
    %3113 = vmatmul.bf16.gmra.mxu0 %v1588
    %v3114 = vpop.f32.mrf.mxu0
    %v3115 = vadd.f32 %v3011, %v3114
    %v3116 = vpop.f32.mrf.mxu0
    %v3117 = vadd.f32 %v3013, %v3116
    %3118 = vmatmul.bf16.gmra.mxu0 %v1596
    %v3119 = vpop.f32.mrf.mxu0
    %v3120 = vadd.f32 %v3016, %v3119
    %v3121 = vpop.f32.mrf.mxu0
    %v3122 = vadd.f32 %v3018, %v3121
    %3123 = vmatmul.bf16.gmra.mxu0 %v1604
    %v3124 = vpop.f32.mrf.mxu0
    %v3125 = vadd.f32 %v3021, %v3124
    %v3126 = vpop.f32.mrf.mxu0
    %v3127 = vadd.f32 %v3023, %v3126
    %3128 = vmatmul.bf16.gmra.mxu0 %v1612
    %v3129 = vpop.f32.mrf.mxu0
    %v3130 = vadd.f32 %v3026, %v3129
    %v3131 = vpop.f32.mrf.mxu0
    %v3132 = vadd.f32 %v3028, %v3131
    %3133 = vmatmul.bf16.gmra.mxu0 %v1620
    %v3134 = vpop.f32.mrf.mxu0
    %v3135 = vadd.f32 %v3031, %v3134
    %v3136 = vpop.f32.mrf.mxu0
    %v3137 = vadd.f32 %v3033, %v3136
    %3138 = vmatmul.bf16.gmra.mxu0 %v1628
    %v3139 = vpop.f32.mrf.mxu0
    %v3140 = vadd.f32 %v3036, %v3139
    %v3141 = vpop.f32.mrf.mxu0
    %v3142 = vadd.f32 %v3038, %v3141
    %3143 = vmatmul.bf16.gmra.mxu0 %v1636
    %v3144 = vpop.f32.mrf.mxu0
    %v3145 = vadd.f32 %v3041, %v3144
    %v3146 = vpop.f32.mrf.mxu0
    %v3147 = vadd.f32 %v3043, %v3146
    %3148 = vmatmul.bf16.gmra.mxu0 %v1644
    %v3149 = vpop.f32.mrf.mxu0
    %v3150 = vadd.f32 %v3046, %v3149
    %v3151 = vpop.f32.mrf.mxu0
    %v3152 = vadd.f32 %v3048, %v3151
    %3153 = vmatmul.bf16.gmra.mxu0 %v1652
    %v3154 = vpop.f32.mrf.mxu0
    %v3155 = vadd.f32 %v3051, %v3154
    %v3156 = vpop.f32.mrf.mxu0
    %v3157 = vadd.f32 %v3053, %v3156
    %3158 = vmatmul.bf16.gmra.mxu0 %v1660
    %v3159 = vpop.f32.mrf.mxu0
    %v3160 = vadd.f32 %v3056, %v3159
    %v3161 = vpop.f32.mrf.mxu0
    %v3162 = vadd.f32 %v3058, %v3161
    %3163 = vdwg.mxu0
    %3164 = vmatpush.bf16.msra.mxu0 %v2306
    %3165 = vmatpush.bf16.msra.mxu0 %v2304
    %3166 = vmatpush.bf16.msra.mxu0 %v2302
    %3167 = vmatpush.bf16.msra.mxu0 %v2300
    %3168 = vmatpush.bf16.msra.mxu0 %v2298
    %3169 = vmatpush.bf16.msra.mxu0 %v2296
    %3170 = vmatpush.bf16.msra.mxu0 %v2294
    %3171 = vmatpush.bf16.msra.mxu0 %v2292
    %3172 = vmatmul.bf16.gmra.mxu0 %v1517
    %v3173 = vpop.f32.mrf.mxu0
    %v3174 = vadd.f32 %v3070, %v3173
    %v3175 = vpop.f32.mrf.mxu0
    %v3176 = vadd.f32 %v3072, %v3175
    %3177 = vmatmul.bf16.gmra.mxu0 %v1525
    %v3178 = vpop.f32.mrf.mxu0
    %v3179 = vadd.f32 %v3075, %v3178
    %v3180 = vpop.f32.mrf.mxu0
    %v3181 = vadd.f32 %v3077, %v3180
    %3182 = vmatmul.bf16.gmra.mxu0 %v1533
    %v3183 = vpop.f32.mrf.mxu0
    %v3184 = vadd.f32 %v3080, %v3183
    %v3185 = vpop.f32.mrf.mxu0
    %v3186 = vadd.f32 %v3082, %v3185
    %3187 = vmatmul.bf16.gmra.mxu0 %v1541
    %v3188 = vpop.f32.mrf.mxu0
    %v3189 = vadd.f32 %v3085, %v3188
    %v3190 = vpop.f32.mrf.mxu0
    %v3191 = vadd.f32 %v3087, %v3190
    %3192 = vmatmul.bf16.gmra.mxu0 %v1549
    %v3193 = vpop.f32.mrf.mxu0
    %v3194 = vadd.f32 %v3090, %v3193
    %v3195 = vpop.f32.mrf.mxu0
    %v3196 = vadd.f32 %v3092, %v3195
    %3197 = vmatmul.bf16.gmra.mxu0 %v1557
    %v3198 = vpop.f32.mrf.mxu0
    %v3199 = vadd.f32 %v3095, %v3198
    %v3200 = vpop.f32.mrf.mxu0
    %v3201 = vadd.f32 %v3097, %v3200
    %3202 = vmatmul.bf16.gmra.mxu0 %v1565
    %v3203 = vpop.f32.mrf.mxu0
    %v3204 = vadd.f32 %v3100, %v3203
    %v3205 = vpop.f32.mrf.mxu0
    %v3206 = vadd.f32 %v3102, %v3205
    %3207 = vmatmul.bf16.gmra.mxu0 %v1573
    %v3208 = vpop.f32.mrf.mxu0
    %v3209 = vadd.f32 %v3105, %v3208
    %v3210 = vpop.f32.mrf.mxu0
    %v3211 = vadd.f32 %v3107, %v3210
    %3212 = vmatmul.bf16.gmra.mxu0 %v1581
    %v3213 = vpop.f32.mrf.mxu0
    %v3214 = vadd.f32 %v3110, %v3213
    %v3215 = vpop.f32.mrf.mxu0
    %v3216 = vadd.f32 %v3112, %v3215
    %3217 = vmatmul.bf16.gmra.mxu0 %v1589
    %v3218 = vpop.f32.mrf.mxu0
    %v3219 = vadd.f32 %v3115, %v3218
    %v3220 = vpop.f32.mrf.mxu0
    %v3221 = vadd.f32 %v3117, %v3220
    %3222 = vmatmul.bf16.gmra.mxu0 %v1597
    %v3223 = vpop.f32.mrf.mxu0
    %v3224 = vadd.f32 %v3120, %v3223
    %v3225 = vpop.f32.mrf.mxu0
    %v3226 = vadd.f32 %v3122, %v3225
    %3227 = vmatmul.bf16.gmra.mxu0 %v1605
    %v3228 = vpop.f32.mrf.mxu0
    %v3229 = vadd.f32 %v3125, %v3228
    %v3230 = vpop.f32.mrf.mxu0
    %v3231 = vadd.f32 %v3127, %v3230
    %3232 = vmatmul.bf16.gmra.mxu0 %v1613
    %v3233 = vpop.f32.mrf.mxu0
    %v3234 = vadd.f32 %v3130, %v3233
    %v3235 = vpop.f32.mrf.mxu0
    %v3236 = vadd.f32 %v3132, %v3235
    %3237 = vmatmul.bf16.gmra.mxu0 %v1621
    %v3238 = vpop.f32.mrf.mxu0
    %v3239 = vadd.f32 %v3135, %v3238
    %v3240 = vpop.f32.mrf.mxu0
    %v3241 = vadd.f32 %v3137, %v3240
    %3242 = vmatmul.bf16.gmra.mxu0 %v1629
    %v3243 = vpop.f32.mrf.mxu0
    %v3244 = vadd.f32 %v3140, %v3243
    %v3245 = vpop.f32.mrf.mxu0
    %v3246 = vadd.f32 %v3142, %v3245
    %3247 = vmatmul.bf16.gmra.mxu0 %v1637
    %v3248 = vpop.f32.mrf.mxu0
    %v3249 = vadd.f32 %v3145, %v3248
    %v3250 = vpop.f32.mrf.mxu0
    %v3251 = vadd.f32 %v3147, %v3250
    %3252 = vmatmul.bf16.gmra.mxu0 %v1645
    %v3253 = vpop.f32.mrf.mxu0
    %v3254 = vadd.f32 %v3150, %v3253
    %v3255 = vpop.f32.mrf.mxu0
    %v3256 = vadd.f32 %v3152, %v3255
    %3257 = vmatmul.bf16.gmra.mxu0 %v1653
    %v3258 = vpop.f32.mrf.mxu0
    %v3259 = vadd.f32 %v3155, %v3258
    %v3260 = vpop.f32.mrf.mxu0
    %v3261 = vadd.f32 %v3157, %v3260
    %3262 = vmatmul.bf16.gmra.mxu0 %v1661
    %v3263 = vpop.f32.mrf.mxu0
    %v3264 = vadd.f32 %v3160, %v3263
    %v3265 = vpop.f32.mrf.mxu0
    %v3266 = vadd.f32 %v3162, %v3265
    %3267 = vdwg.mxu0
    %3268 = vmatpush.bf16.msra.mxu0 %v2195
    %3269 = vmatpush.bf16.msra.mxu0 %v2193
    %3270 = vmatpush.bf16.msra.mxu0 %v2191
    %3271 = vmatpush.bf16.msra.mxu0 %v2189
    %3272 = vmatpush.bf16.msra.mxu0 %v2187
    %3273 = vmatpush.bf16.msra.mxu0 %v2185
    %3274 = vmatpush.bf16.msra.mxu0 %v2183
    %3275 = vmatpush.bf16.msra.mxu0 %v2181
    %3276 = vmatmul.bf16.gmra.mxu0 %v1510
    %v3277 = vpop.f32.mrf.mxu0
    %v3278 = vadd.f32 %v1793, %v3277
    %v3279 = vpop.f32.mrf.mxu0
    %v3280 = vadd.f32 %v1793, %v3279
    %3281 = vmatmul.bf16.gmra.mxu0 %v1518
    %v3282 = vpop.f32.mrf.mxu0
    %v3283 = vadd.f32 %v1793, %v3282
    %v3284 = vpop.f32.mrf.mxu0
    %v3285 = vadd.f32 %v1793, %v3284
    %3286 = vmatmul.bf16.gmra.mxu0 %v1526
    %v3287 = vpop.f32.mrf.mxu0
    %v3288 = vadd.f32 %v1793, %v3287
    %v3289 = vpop.f32.mrf.mxu0
    %v3290 = vadd.f32 %v1793, %v3289
    %3291 = vmatmul.bf16.gmra.mxu0 %v1534
    %v3292 = vpop.f32.mrf.mxu0
    %v3293 = vadd.f32 %v1793, %v3292
    %v3294 = vpop.f32.mrf.mxu0
    %v3295 = vadd.f32 %v1793, %v3294
    %3296 = vmatmul.bf16.gmra.mxu0 %v1542
    %v3297 = vpop.f32.mrf.mxu0
    %v3298 = vadd.f32 %v1793, %v3297
    %v3299 = vpop.f32.mrf.mxu0
    %v3300 = vadd.f32 %v1793, %v3299
    %3301 = vmatmul.bf16.gmra.mxu0 %v1550
    %v3302 = vpop.f32.mrf.mxu0
    %v3303 = vadd.f32 %v1793, %v3302
    %v3304 = vpop.f32.mrf.mxu0
    %v3305 = vadd.f32 %v1793, %v3304
    %3306 = vmatmul.bf16.gmra.mxu0 %v1558
    %v3307 = vpop.f32.mrf.mxu0
    %v3308 = vadd.f32 %v1793, %v3307
    %v3309 = vpop.f32.mrf.mxu0
    %v3310 = vadd.f32 %v1793, %v3309
    %3311 = vmatmul.bf16.gmra.mxu0 %v1566
    %v3312 = vpop.f32.mrf.mxu0
    %v3313 = vadd.f32 %v1793, %v3312
    %v3314 = vpop.f32.mrf.mxu0
    %v3315 = vadd.f32 %v1793, %v3314
    %3316 = vmatmul.bf16.gmra.mxu0 %v1574
    %v3317 = vpop.f32.mrf.mxu0
    %v3318 = vadd.f32 %v1793, %v3317
    %v3319 = vpop.f32.mrf.mxu0
    %v3320 = vadd.f32 %v1793, %v3319
    %3321 = vmatmul.bf16.gmra.mxu0 %v1582
    %v3322 = vpop.f32.mrf.mxu0
    %v3323 = vadd.f32 %v1793, %v3322
    %v3324 = vpop.f32.mrf.mxu0
    %v3325 = vadd.f32 %v1793, %v3324
    %3326 = vmatmul.bf16.gmra.mxu0 %v1590
    %v3327 = vpop.f32.mrf.mxu0
    %v3328 = vadd.f32 %v1793, %v3327
    %v3329 = vpop.f32.mrf.mxu0
    %v3330 = vadd.f32 %v1793, %v3329
    %3331 = vmatmul.bf16.gmra.mxu0 %v1598
    %v3332 = vpop.f32.mrf.mxu0
    %v3333 = vadd.f32 %v1793, %v3332
    %v3334 = vpop.f32.mrf.mxu0
    %v3335 = vadd.f32 %v1793, %v3334
    %3336 = vmatmul.bf16.gmra.mxu0 %v1606
    %v3337 = vpop.f32.mrf.mxu0
    %v3338 = vadd.f32 %v1793, %v3337
    %v3339 = vpop.f32.mrf.mxu0
    %v3340 = vadd.f32 %v1793, %v3339
    %3341 = vmatmul.bf16.gmra.mxu0 %v1614
    %v3342 = vpop.f32.mrf.mxu0
    %v3343 = vadd.f32 %v1793, %v3342
    %v3344 = vpop.f32.mrf.mxu0
    %v3345 = vadd.f32 %v1793, %v3344
    %3346 = vmatmul.bf16.gmra.mxu0 %v1622
    %v3347 = vpop.f32.mrf.mxu0
    %v3348 = vadd.f32 %v1793, %v3347
    %v3349 = vpop.f32.mrf.mxu0
    %v3350 = vadd.f32 %v1793, %v3349
    %3351 = vmatmul.bf16.gmra.mxu0 %v1630
    %v3352 = vpop.f32.mrf.mxu0
    %v3353 = vadd.f32 %v1793, %v3352
    %v3354 = vpop.f32.mrf.mxu0
    %v3355 = vadd.f32 %v1793, %v3354
    %3356 = vmatmul.bf16.gmra.mxu0 %v1638
    %v3357 = vpop.f32.mrf.mxu0
    %v3358 = vadd.f32 %v1793, %v3357
    %v3359 = vpop.f32.mrf.mxu0
    %v3360 = vadd.f32 %v1793, %v3359
    %3361 = vmatmul.bf16.gmra.mxu0 %v1646
    %v3362 = vpop.f32.mrf.mxu0
    %v3363 = vadd.f32 %v1793, %v3362
    %v3364 = vpop.f32.mrf.mxu0
    %v3365 = vadd.f32 %v1793, %v3364
    %3366 = vmatmul.bf16.gmra.mxu0 %v1654
    %v3367 = vpop.f32.mrf.mxu0
    %v3368 = vadd.f32 %v1793, %v3367
    %v3369 = vpop.f32.mrf.mxu0
    %v3370 = vadd.f32 %v1793, %v3369
    %3371 = vdwg.mxu0
    %3372 = vmatpush.bf16.msra.mxu0 %v2211
    %3373 = vmatpush.bf16.msra.mxu0 %v2209
    %3374 = vmatpush.bf16.msra.mxu0 %v2207
    %3375 = vmatpush.bf16.msra.mxu0 %v2205
    %3376 = vmatpush.bf16.msra.mxu0 %v2203
    %3377 = vmatpush.bf16.msra.mxu0 %v2201
    %3378 = vmatpush.bf16.msra.mxu0 %v2199
    %3379 = vmatpush.bf16.msra.mxu0 %v2197
    %3380 = vmatmul.bf16.gmra.mxu0 %v1511
    %v3381 = vpop.f32.mrf.mxu0
    %v3382 = vadd.f32 %v3278, %v3381
    %v3383 = vpop.f32.mrf.mxu0
    %v3384 = vadd.f32 %v3280, %v3383
    %3385 = vmatmul.bf16.gmra.mxu0 %v1519
    %v3386 = vpop.f32.mrf.mxu0
    %v3387 = vadd.f32 %v3283, %v3386
    %v3388 = vpop.f32.mrf.mxu0
    %v3389 = vadd.f32 %v3285, %v3388
    %3390 = vmatmul.bf16.gmra.mxu0 %v1527
    %v3391 = vpop.f32.mrf.mxu0
    %v3392 = vadd.f32 %v3288, %v3391
    %v3393 = vpop.f32.mrf.mxu0
    %v3394 = vadd.f32 %v3290, %v3393
    %3395 = vmatmul.bf16.gmra.mxu0 %v1535
    %v3396 = vpop.f32.mrf.mxu0
    %v3397 = vadd.f32 %v3293, %v3396
    %v3398 = vpop.f32.mrf.mxu0
    %v3399 = vadd.f32 %v3295, %v3398
    %3400 = vmatmul.bf16.gmra.mxu0 %v1543
    %v3401 = vpop.f32.mrf.mxu0
    %v3402 = vadd.f32 %v3298, %v3401
    %v3403 = vpop.f32.mrf.mxu0
    %v3404 = vadd.f32 %v3300, %v3403
    %3405 = vmatmul.bf16.gmra.mxu0 %v1551
    %v3406 = vpop.f32.mrf.mxu0
    %v3407 = vadd.f32 %v3303, %v3406
    %v3408 = vpop.f32.mrf.mxu0
    %v3409 = vadd.f32 %v3305, %v3408
    %3410 = vmatmul.bf16.gmra.mxu0 %v1559
    %v3411 = vpop.f32.mrf.mxu0
    %v3412 = vadd.f32 %v3308, %v3411
    %v3413 = vpop.f32.mrf.mxu0
    %v3414 = vadd.f32 %v3310, %v3413
    %3415 = vmatmul.bf16.gmra.mxu0 %v1567
    %v3416 = vpop.f32.mrf.mxu0
    %v3417 = vadd.f32 %v3313, %v3416
    %v3418 = vpop.f32.mrf.mxu0
    %v3419 = vadd.f32 %v3315, %v3418
    %3420 = vmatmul.bf16.gmra.mxu0 %v1575
    %v3421 = vpop.f32.mrf.mxu0
    %v3422 = vadd.f32 %v3318, %v3421
    %v3423 = vpop.f32.mrf.mxu0
    %v3424 = vadd.f32 %v3320, %v3423
    %3425 = vmatmul.bf16.gmra.mxu0 %v1583
    %v3426 = vpop.f32.mrf.mxu0
    %v3427 = vadd.f32 %v3323, %v3426
    %v3428 = vpop.f32.mrf.mxu0
    %v3429 = vadd.f32 %v3325, %v3428
    %3430 = vmatmul.bf16.gmra.mxu0 %v1591
    %v3431 = vpop.f32.mrf.mxu0
    %v3432 = vadd.f32 %v3328, %v3431
    %v3433 = vpop.f32.mrf.mxu0
    %v3434 = vadd.f32 %v3330, %v3433
    %3435 = vmatmul.bf16.gmra.mxu0 %v1599
    %v3436 = vpop.f32.mrf.mxu0
    %v3437 = vadd.f32 %v3333, %v3436
    %v3438 = vpop.f32.mrf.mxu0
    %v3439 = vadd.f32 %v3335, %v3438
    %3440 = vmatmul.bf16.gmra.mxu0 %v1607
    %v3441 = vpop.f32.mrf.mxu0
    %v3442 = vadd.f32 %v3338, %v3441
    %v3443 = vpop.f32.mrf.mxu0
    %v3444 = vadd.f32 %v3340, %v3443
    %3445 = vmatmul.bf16.gmra.mxu0 %v1615
    %v3446 = vpop.f32.mrf.mxu0
    %v3447 = vadd.f32 %v3343, %v3446
    %v3448 = vpop.f32.mrf.mxu0
    %v3449 = vadd.f32 %v3345, %v3448
    %3450 = vmatmul.bf16.gmra.mxu0 %v1623
    %v3451 = vpop.f32.mrf.mxu0
    %v3452 = vadd.f32 %v3348, %v3451
    %v3453 = vpop.f32.mrf.mxu0
    %v3454 = vadd.f32 %v3350, %v3453
    %3455 = vmatmul.bf16.gmra.mxu0 %v1631
    %v3456 = vpop.f32.mrf.mxu0
    %v3457 = vadd.f32 %v3353, %v3456
    %v3458 = vpop.f32.mrf.mxu0
    %v3459 = vadd.f32 %v3355, %v3458
    %3460 = vmatmul.bf16.gmra.mxu0 %v1639
    %v3461 = vpop.f32.mrf.mxu0
    %v3462 = vadd.f32 %v3358, %v3461
    %v3463 = vpop.f32.mrf.mxu0
    %v3464 = vadd.f32 %v3360, %v3463
    %3465 = vmatmul.bf16.gmra.mxu0 %v1647
    %v3466 = vpop.f32.mrf.mxu0
    %v3467 = vadd.f32 %v3363, %v3466
    %v3468 = vpop.f32.mrf.mxu0
    %v3469 = vadd.f32 %v3365, %v3468
    %3470 = vmatmul.bf16.gmra.mxu0 %v1655
    %v3471 = vpop.f32.mrf.mxu0
    %v3472 = vadd.f32 %v3368, %v3471
    %v3473 = vpop.f32.mrf.mxu0
    %v3474 = vadd.f32 %v3370, %v3473
    %3475 = vdwg.mxu0
    %3476 = vmatpush.bf16.msra.mxu0 %v2227
    %3477 = vmatpush.bf16.msra.mxu0 %v2225
    %3478 = vmatpush.bf16.msra.mxu0 %v2223
    %3479 = vmatpush.bf16.msra.mxu0 %v2221
    %3480 = vmatpush.bf16.msra.mxu0 %v2219
    %3481 = vmatpush.bf16.msra.mxu0 %v2217
    %3482 = vmatpush.bf16.msra.mxu0 %v2215
    %3483 = vmatpush.bf16.msra.mxu0 %v2213
    %3484 = vmatmul.bf16.gmra.mxu0 %v1512
    %v3485 = vpop.f32.mrf.mxu0
    %v3486 = vadd.f32 %v3382, %v3485
    %v3487 = vpop.f32.mrf.mxu0
    %v3488 = vadd.f32 %v3384, %v3487
    %3489 = vmatmul.bf16.gmra.mxu0 %v1520
    %v3490 = vpop.f32.mrf.mxu0
    %v3491 = vadd.f32 %v3387, %v3490
    %v3492 = vpop.f32.mrf.mxu0
    %v3493 = vadd.f32 %v3389, %v3492
    %3494 = vmatmul.bf16.gmra.mxu0 %v1528
    %v3495 = vpop.f32.mrf.mxu0
    %v3496 = vadd.f32 %v3392, %v3495
    %v3497 = vpop.f32.mrf.mxu0
    %v3498 = vadd.f32 %v3394, %v3497
    %3499 = vmatmul.bf16.gmra.mxu0 %v1536
    %v3500 = vpop.f32.mrf.mxu0
    %v3501 = vadd.f32 %v3397, %v3500
    %v3502 = vpop.f32.mrf.mxu0
    %v3503 = vadd.f32 %v3399, %v3502
    %3504 = vmatmul.bf16.gmra.mxu0 %v1544
    %v3505 = vpop.f32.mrf.mxu0
    %v3506 = vadd.f32 %v3402, %v3505
    %v3507 = vpop.f32.mrf.mxu0
    %v3508 = vadd.f32 %v3404, %v3507
    %3509 = vmatmul.bf16.gmra.mxu0 %v1552
    %v3510 = vpop.f32.mrf.mxu0
    %v3511 = vadd.f32 %v3407, %v3510
    %v3512 = vpop.f32.mrf.mxu0
    %v3513 = vadd.f32 %v3409, %v3512
    %3514 = vmatmul.bf16.gmra.mxu0 %v1560
    %v3515 = vpop.f32.mrf.mxu0
    %v3516 = vadd.f32 %v3412, %v3515
    %v3517 = vpop.f32.mrf.mxu0
    %v3518 = vadd.f32 %v3414, %v3517
    %3519 = vmatmul.bf16.gmra.mxu0 %v1568
    %v3520 = vpop.f32.mrf.mxu0
    %v3521 = vadd.f32 %v3417, %v3520
    %v3522 = vpop.f32.mrf.mxu0
    %v3523 = vadd.f32 %v3419, %v3522
    %3524 = vmatmul.bf16.gmra.mxu0 %v1576
    %v3525 = vpop.f32.mrf.mxu0
    %v3526 = vadd.f32 %v3422, %v3525
    %v3527 = vpop.f32.mrf.mxu0
    %v3528 = vadd.f32 %v3424, %v3527
    %3529 = vmatmul.bf16.gmra.mxu0 %v1584
    %v3530 = vpop.f32.mrf.mxu0
    %v3531 = vadd.f32 %v3427, %v3530
    %v3532 = vpop.f32.mrf.mxu0
    %v3533 = vadd.f32 %v3429, %v3532
    %3534 = vmatmul.bf16.gmra.mxu0 %v1592
    %v3535 = vpop.f32.mrf.mxu0
    %v3536 = vadd.f32 %v3432, %v3535
    %v3537 = vpop.f32.mrf.mxu0
    %v3538 = vadd.f32 %v3434, %v3537
    %3539 = vmatmul.bf16.gmra.mxu0 %v1600
    %v3540 = vpop.f32.mrf.mxu0
    %v3541 = vadd.f32 %v3437, %v3540
    %v3542 = vpop.f32.mrf.mxu0
    %v3543 = vadd.f32 %v3439, %v3542
    %3544 = vmatmul.bf16.gmra.mxu0 %v1608
    %v3545 = vpop.f32.mrf.mxu0
    %v3546 = vadd.f32 %v3442, %v3545
    %v3547 = vpop.f32.mrf.mxu0
    %v3548 = vadd.f32 %v3444, %v3547
    %3549 = vmatmul.bf16.gmra.mxu0 %v1616
    %v3550 = vpop.f32.mrf.mxu0
    %v3551 = vadd.f32 %v3447, %v3550
    %v3552 = vpop.f32.mrf.mxu0
    %v3553 = vadd.f32 %v3449, %v3552
    %3554 = vmatmul.bf16.gmra.mxu0 %v1624
    %v3555 = vpop.f32.mrf.mxu0
    %v3556 = vadd.f32 %v3452, %v3555
    %v3557 = vpop.f32.mrf.mxu0
    %v3558 = vadd.f32 %v3454, %v3557
    %3559 = vmatmul.bf16.gmra.mxu0 %v1632
    %v3560 = vpop.f32.mrf.mxu0
    %v3561 = vadd.f32 %v3457, %v3560
    %v3562 = vpop.f32.mrf.mxu0
    %v3563 = vadd.f32 %v3459, %v3562
    %3564 = vmatmul.bf16.gmra.mxu0 %v1640
    %v3565 = vpop.f32.mrf.mxu0
    %v3566 = vadd.f32 %v3462, %v3565
    %v3567 = vpop.f32.mrf.mxu0
    %v3568 = vadd.f32 %v3464, %v3567
    %3569 = vmatmul.bf16.gmra.mxu0 %v1648
    %v3570 = vpop.f32.mrf.mxu0
    %v3571 = vadd.f32 %v3467, %v3570
    %v3572 = vpop.f32.mrf.mxu0
    %v3573 = vadd.f32 %v3469, %v3572
    %3574 = vmatmul.bf16.gmra.mxu0 %v1656
    %v3575 = vpop.f32.mrf.mxu0
    %v3576 = vadd.f32 %v3472, %v3575
    %v3577 = vpop.f32.mrf.mxu0
    %v3578 = vadd.f32 %v3474, %v3577
    %3579 = vdwg.mxu0
    %3580 = vmatpush.bf16.msra.mxu0 %v2243
    %3581 = vmatpush.bf16.msra.mxu0 %v2241
    %3582 = vmatpush.bf16.msra.mxu0 %v2239
    %3583 = vmatpush.bf16.msra.mxu0 %v2237
    %3584 = vmatpush.bf16.msra.mxu0 %v2235
    %3585 = vmatpush.bf16.msra.mxu0 %v2233
    %3586 = vmatpush.bf16.msra.mxu0 %v2231
    %3587 = vmatpush.bf16.msra.mxu0 %v2229
    %3588 = vmatmul.bf16.gmra.mxu0 %v1513
    %v3589 = vpop.f32.mrf.mxu0
    %v3590 = vadd.f32 %v3486, %v3589
    %v3591 = vpop.f32.mrf.mxu0
    %v3592 = vadd.f32 %v3488, %v3591
    %3593 = vmatmul.bf16.gmra.mxu0 %v1521
    %v3594 = vpop.f32.mrf.mxu0
    %v3595 = vadd.f32 %v3491, %v3594
    %v3596 = vpop.f32.mrf.mxu0
    %v3597 = vadd.f32 %v3493, %v3596
    %3598 = vmatmul.bf16.gmra.mxu0 %v1529
    %v3599 = vpop.f32.mrf.mxu0
    %v3600 = vadd.f32 %v3496, %v3599
    %v3601 = vpop.f32.mrf.mxu0
    %v3602 = vadd.f32 %v3498, %v3601
    %3603 = vmatmul.bf16.gmra.mxu0 %v1537
    %v3604 = vpop.f32.mrf.mxu0
    %v3605 = vadd.f32 %v3501, %v3604
    %v3606 = vpop.f32.mrf.mxu0
    %v3607 = vadd.f32 %v3503, %v3606
    %3608 = vmatmul.bf16.gmra.mxu0 %v1545
    %v3609 = vpop.f32.mrf.mxu0
    %v3610 = vadd.f32 %v3506, %v3609
    %v3611 = vpop.f32.mrf.mxu0
    %v3612 = vadd.f32 %v3508, %v3611
    %3613 = vmatmul.bf16.gmra.mxu0 %v1553
    %v3614 = vpop.f32.mrf.mxu0
    %v3615 = vadd.f32 %v3511, %v3614
    %v3616 = vpop.f32.mrf.mxu0
    %v3617 = vadd.f32 %v3513, %v3616
    %3618 = vmatmul.bf16.gmra.mxu0 %v1561
    %v3619 = vpop.f32.mrf.mxu0
    %v3620 = vadd.f32 %v3516, %v3619
    %v3621 = vpop.f32.mrf.mxu0
    %v3622 = vadd.f32 %v3518, %v3621
    %3623 = vmatmul.bf16.gmra.mxu0 %v1569
    %v3624 = vpop.f32.mrf.mxu0
    %v3625 = vadd.f32 %v3521, %v3624
    %v3626 = vpop.f32.mrf.mxu0
    %v3627 = vadd.f32 %v3523, %v3626
    %3628 = vmatmul.bf16.gmra.mxu0 %v1577
    %v3629 = vpop.f32.mrf.mxu0
    %v3630 = vadd.f32 %v3526, %v3629
    %v3631 = vpop.f32.mrf.mxu0
    %v3632 = vadd.f32 %v3528, %v3631
    %3633 = vmatmul.bf16.gmra.mxu0 %v1585
    %v3634 = vpop.f32.mrf.mxu0
    %v3635 = vadd.f32 %v3531, %v3634
    %v3636 = vpop.f32.mrf.mxu0
    %v3637 = vadd.f32 %v3533, %v3636
    %3638 = vmatmul.bf16.gmra.mxu0 %v1593
    %v3639 = vpop.f32.mrf.mxu0
    %v3640 = vadd.f32 %v3536, %v3639
    %v3641 = vpop.f32.mrf.mxu0
    %v3642 = vadd.f32 %v3538, %v3641
    %3643 = vmatmul.bf16.gmra.mxu0 %v1601
    %v3644 = vpop.f32.mrf.mxu0
    %v3645 = vadd.f32 %v3541, %v3644
    %v3646 = vpop.f32.mrf.mxu0
    %v3647 = vadd.f32 %v3543, %v3646
    %3648 = vmatmul.bf16.gmra.mxu0 %v1609
    %v3649 = vpop.f32.mrf.mxu0
    %v3650 = vadd.f32 %v3546, %v3649
    %v3651 = vpop.f32.mrf.mxu0
    %v3652 = vadd.f32 %v3548, %v3651
    %3653 = vmatmul.bf16.gmra.mxu0 %v1617
    %v3654 = vpop.f32.mrf.mxu0
    %v3655 = vadd.f32 %v3551, %v3654
    %v3656 = vpop.f32.mrf.mxu0
    %v3657 = vadd.f32 %v3553, %v3656
    %3658 = vmatmul.bf16.gmra.mxu0 %v1625
    %v3659 = vpop.f32.mrf.mxu0
    %v3660 = vadd.f32 %v3556, %v3659
    %v3661 = vpop.f32.mrf.mxu0
    %v3662 = vadd.f32 %v3558, %v3661
    %3663 = vmatmul.bf16.gmra.mxu0 %v1633
    %v3664 = vpop.f32.mrf.mxu0
    %v3665 = vadd.f32 %v3561, %v3664
    %v3666 = vpop.f32.mrf.mxu0
    %v3667 = vadd.f32 %v3563, %v3666
    %3668 = vmatmul.bf16.gmra.mxu0 %v1641
    %v3669 = vpop.f32.mrf.mxu0
    %v3670 = vadd.f32 %v3566, %v3669
    %v3671 = vpop.f32.mrf.mxu0
    %v3672 = vadd.f32 %v3568, %v3671
    %3673 = vmatmul.bf16.gmra.mxu0 %v1649
    %v3674 = vpop.f32.mrf.mxu0
    %v3675 = vadd.f32 %v3571, %v3674
    %v3676 = vpop.f32.mrf.mxu0
    %v3677 = vadd.f32 %v3573, %v3676
    %3678 = vmatmul.bf16.gmra.mxu0 %v1657
    %v3679 = vpop.f32.mrf.mxu0
    %v3680 = vadd.f32 %v3576, %v3679
    %v3681 = vpop.f32.mrf.mxu0
    %v3682 = vadd.f32 %v3578, %v3681
    %3683 = vdwg.mxu0
    %3684 = vmatpush.bf16.msra.mxu0 %v2259
    %3685 = vmatpush.bf16.msra.mxu0 %v2257
    %3686 = vmatpush.bf16.msra.mxu0 %v2255
    %3687 = vmatpush.bf16.msra.mxu0 %v2253
    %3688 = vmatpush.bf16.msra.mxu0 %v2251
    %3689 = vmatpush.bf16.msra.mxu0 %v2249
    %3690 = vmatpush.bf16.msra.mxu0 %v2247
    %3691 = vmatpush.bf16.msra.mxu0 %v2245
    %3692 = vmatmul.bf16.gmra.mxu0 %v1514
    %v3693 = vpop.f32.mrf.mxu0
    %v3694 = vadd.f32 %v3590, %v3693
    %v3695 = vpop.f32.mrf.mxu0
    %v3696 = vadd.f32 %v3592, %v3695
    %3697 = vmatmul.bf16.gmra.mxu0 %v1522
    %v3698 = vpop.f32.mrf.mxu0
    %v3699 = vadd.f32 %v3595, %v3698
    %v3700 = vpop.f32.mrf.mxu0
    %v3701 = vadd.f32 %v3597, %v3700
    %3702 = vmatmul.bf16.gmra.mxu0 %v1530
    %v3703 = vpop.f32.mrf.mxu0
    %v3704 = vadd.f32 %v3600, %v3703
    %v3705 = vpop.f32.mrf.mxu0
    %v3706 = vadd.f32 %v3602, %v3705
    %3707 = vmatmul.bf16.gmra.mxu0 %v1538
    %v3708 = vpop.f32.mrf.mxu0
    %v3709 = vadd.f32 %v3605, %v3708
    %v3710 = vpop.f32.mrf.mxu0
    %v3711 = vadd.f32 %v3607, %v3710
    %3712 = vmatmul.bf16.gmra.mxu0 %v1546
    %v3713 = vpop.f32.mrf.mxu0
    %v3714 = vadd.f32 %v3610, %v3713
    %v3715 = vpop.f32.mrf.mxu0
    %v3716 = vadd.f32 %v3612, %v3715
    %3717 = vmatmul.bf16.gmra.mxu0 %v1554
    %v3718 = vpop.f32.mrf.mxu0
    %v3719 = vadd.f32 %v3615, %v3718
    %v3720 = vpop.f32.mrf.mxu0
    %v3721 = vadd.f32 %v3617, %v3720
    %3722 = vmatmul.bf16.gmra.mxu0 %v1562
    %v3723 = vpop.f32.mrf.mxu0
    %v3724 = vadd.f32 %v3620, %v3723
    %v3725 = vpop.f32.mrf.mxu0
    %v3726 = vadd.f32 %v3622, %v3725
    %3727 = vmatmul.bf16.gmra.mxu0 %v1570
    %v3728 = vpop.f32.mrf.mxu0
    %v3729 = vadd.f32 %v3625, %v3728
    %v3730 = vpop.f32.mrf.mxu0
    %v3731 = vadd.f32 %v3627, %v3730
    %3732 = vmatmul.bf16.gmra.mxu0 %v1578
    %v3733 = vpop.f32.mrf.mxu0
    %v3734 = vadd.f32 %v3630, %v3733
    %v3735 = vpop.f32.mrf.mxu0
    %v3736 = vadd.f32 %v3632, %v3735
    %3737 = vmatmul.bf16.gmra.mxu0 %v1586
    %v3738 = vpop.f32.mrf.mxu0
    %v3739 = vadd.f32 %v3635, %v3738
    %v3740 = vpop.f32.mrf.mxu0
    %v3741 = vadd.f32 %v3637, %v3740
    %3742 = vmatmul.bf16.gmra.mxu0 %v1594
    %v3743 = vpop.f32.mrf.mxu0
    %v3744 = vadd.f32 %v3640, %v3743
    %v3745 = vpop.f32.mrf.mxu0
    %v3746 = vadd.f32 %v3642, %v3745
    %3747 = vmatmul.bf16.gmra.mxu0 %v1602
    %v3748 = vpop.f32.mrf.mxu0
    %v3749 = vadd.f32 %v3645, %v3748
    %v3750 = vpop.f32.mrf.mxu0
    %v3751 = vadd.f32 %v3647, %v3750
    %3752 = vmatmul.bf16.gmra.mxu0 %v1610
    %v3753 = vpop.f32.mrf.mxu0
    %v3754 = vadd.f32 %v3650, %v3753
    %v3755 = vpop.f32.mrf.mxu0
    %v3756 = vadd.f32 %v3652, %v3755
    %3757 = vmatmul.bf16.gmra.mxu0 %v1618
    %v3758 = vpop.f32.mrf.mxu0
    %v3759 = vadd.f32 %v3655, %v3758
    %v3760 = vpop.f32.mrf.mxu0
    %v3761 = vadd.f32 %v3657, %v3760
    %3762 = vmatmul.bf16.gmra.mxu0 %v1626
    %v3763 = vpop.f32.mrf.mxu0
    %v3764 = vadd.f32 %v3660, %v3763
    %v3765 = vpop.f32.mrf.mxu0
    %v3766 = vadd.f32 %v3662, %v3765
    %3767 = vmatmul.bf16.gmra.mxu0 %v1634
    %v3768 = vpop.f32.mrf.mxu0
    %v3769 = vadd.f32 %v3665, %v3768
    %v3770 = vpop.f32.mrf.mxu0
    %v3771 = vadd.f32 %v3667, %v3770
    %3772 = vmatmul.bf16.gmra.mxu0 %v1642
    %v3773 = vpop.f32.mrf.mxu0
    %v3774 = vadd.f32 %v3670, %v3773
    %v3775 = vpop.f32.mrf.mxu0
    %v3776 = vadd.f32 %v3672, %v3775
    %3777 = vmatmul.bf16.gmra.mxu0 %v1650
    %v3778 = vpop.f32.mrf.mxu0
    %v3779 = vadd.f32 %v3675, %v3778
    %v3780 = vpop.f32.mrf.mxu0
    %v3781 = vadd.f32 %v3677, %v3780
    %3782 = vmatmul.bf16.gmra.mxu0 %v1658
    %v3783 = vpop.f32.mrf.mxu0
    %v3784 = vadd.f32 %v3680, %v3783
    %v3785 = vpop.f32.mrf.mxu0
    %v3786 = vadd.f32 %v3682, %v3785
    %3787 = vdwg.mxu0
    %3788 = vmatpush.bf16.msra.mxu0 %v2275
    %3789 = vmatpush.bf16.msra.mxu0 %v2273
    %3790 = vmatpush.bf16.msra.mxu0 %v2271
    %3791 = vmatpush.bf16.msra.mxu0 %v2269
    %3792 = vmatpush.bf16.msra.mxu0 %v2267
    %3793 = vmatpush.bf16.msra.mxu0 %v2265
    %3794 = vmatpush.bf16.msra.mxu0 %v2263
    %3795 = vmatpush.bf16.msra.mxu0 %v2261
    %3796 = vmatmul.bf16.gmra.mxu0 %v1515
    %v3797 = vpop.f32.mrf.mxu0
    %v3798 = vadd.f32 %v3694, %v3797
    %v3799 = vpop.f32.mrf.mxu0
    %v3800 = vadd.f32 %v3696, %v3799
    %3801 = vmatmul.bf16.gmra.mxu0 %v1523
    %v3802 = vpop.f32.mrf.mxu0
    %v3803 = vadd.f32 %v3699, %v3802
    %v3804 = vpop.f32.mrf.mxu0
    %v3805 = vadd.f32 %v3701, %v3804
    %3806 = vmatmul.bf16.gmra.mxu0 %v1531
    %v3807 = vpop.f32.mrf.mxu0
    %v3808 = vadd.f32 %v3704, %v3807
    %v3809 = vpop.f32.mrf.mxu0
    %v3810 = vadd.f32 %v3706, %v3809
    %3811 = vmatmul.bf16.gmra.mxu0 %v1539
    %v3812 = vpop.f32.mrf.mxu0
    %v3813 = vadd.f32 %v3709, %v3812
    %v3814 = vpop.f32.mrf.mxu0
    %v3815 = vadd.f32 %v3711, %v3814
    %3816 = vmatmul.bf16.gmra.mxu0 %v1547
    %v3817 = vpop.f32.mrf.mxu0
    %v3818 = vadd.f32 %v3714, %v3817
    %v3819 = vpop.f32.mrf.mxu0
    %v3820 = vadd.f32 %v3716, %v3819
    %3821 = vmatmul.bf16.gmra.mxu0 %v1555
    %v3822 = vpop.f32.mrf.mxu0
    %v3823 = vadd.f32 %v3719, %v3822
    %v3824 = vpop.f32.mrf.mxu0
    %v3825 = vadd.f32 %v3721, %v3824
    %3826 = vmatmul.bf16.gmra.mxu0 %v1563
    %v3827 = vpop.f32.mrf.mxu0
    %v3828 = vadd.f32 %v3724, %v3827
    %v3829 = vpop.f32.mrf.mxu0
    %v3830 = vadd.f32 %v3726, %v3829
    %3831 = vmatmul.bf16.gmra.mxu0 %v1571
    %v3832 = vpop.f32.mrf.mxu0
    %v3833 = vadd.f32 %v3729, %v3832
    %v3834 = vpop.f32.mrf.mxu0
    %v3835 = vadd.f32 %v3731, %v3834
    %3836 = vmatmul.bf16.gmra.mxu0 %v1579
    %v3837 = vpop.f32.mrf.mxu0
    %v3838 = vadd.f32 %v3734, %v3837
    %v3839 = vpop.f32.mrf.mxu0
    %v3840 = vadd.f32 %v3736, %v3839
    %3841 = vmatmul.bf16.gmra.mxu0 %v1587
    %v3842 = vpop.f32.mrf.mxu0
    %v3843 = vadd.f32 %v3739, %v3842
    %v3844 = vpop.f32.mrf.mxu0
    %v3845 = vadd.f32 %v3741, %v3844
    %3846 = vmatmul.bf16.gmra.mxu0 %v1595
    %v3847 = vpop.f32.mrf.mxu0
    %v3848 = vadd.f32 %v3744, %v3847
    %v3849 = vpop.f32.mrf.mxu0
    %v3850 = vadd.f32 %v3746, %v3849
    %3851 = vmatmul.bf16.gmra.mxu0 %v1603
    %v3852 = vpop.f32.mrf.mxu0
    %v3853 = vadd.f32 %v3749, %v3852
    %v3854 = vpop.f32.mrf.mxu0
    %v3855 = vadd.f32 %v3751, %v3854
    %3856 = vmatmul.bf16.gmra.mxu0 %v1611
    %v3857 = vpop.f32.mrf.mxu0
    %v3858 = vadd.f32 %v3754, %v3857
    %v3859 = vpop.f32.mrf.mxu0
    %v3860 = vadd.f32 %v3756, %v3859
    %3861 = vmatmul.bf16.gmra.mxu0 %v1619
    %v3862 = vpop.f32.mrf.mxu0
    %v3863 = vadd.f32 %v3759, %v3862
    %v3864 = vpop.f32.mrf.mxu0
    %v3865 = vadd.f32 %v3761, %v3864
    %3866 = vmatmul.bf16.gmra.mxu0 %v1627
    %v3867 = vpop.f32.mrf.mxu0
    %v3868 = vadd.f32 %v3764, %v3867
    %v3869 = vpop.f32.mrf.mxu0
    %v3870 = vadd.f32 %v3766, %v3869
    %3871 = vmatmul.bf16.gmra.mxu0 %v1635
    %v3872 = vpop.f32.mrf.mxu0
    %v3873 = vadd.f32 %v3769, %v3872
    %v3874 = vpop.f32.mrf.mxu0
    %v3875 = vadd.f32 %v3771, %v3874
    %3876 = vmatmul.bf16.gmra.mxu0 %v1643
    %v3877 = vpop.f32.mrf.mxu0
    %v3878 = vadd.f32 %v3774, %v3877
    %v3879 = vpop.f32.mrf.mxu0
    %v3880 = vadd.f32 %v3776, %v3879
    %3881 = vmatmul.bf16.gmra.mxu0 %v1651
    %v3882 = vpop.f32.mrf.mxu0
    %v3883 = vadd.f32 %v3779, %v3882
    %v3884 = vpop.f32.mrf.mxu0
    %v3885 = vadd.f32 %v3781, %v3884
    %3886 = vmatmul.bf16.gmra.mxu0 %v1659
    %v3887 = vpop.f32.mrf.mxu0
    %v3888 = vadd.f32 %v3784, %v3887
    %v3889 = vpop.f32.mrf.mxu0
    %v3890 = vadd.f32 %v3786, %v3889
    %3891 = vdwg.mxu0
    %3892 = vmatpush.bf16.msra.mxu0 %v2291
    %3893 = vmatpush.bf16.msra.mxu0 %v2289
    %3894 = vmatpush.bf16.msra.mxu0 %v2287
    %3895 = vmatpush.bf16.msra.mxu0 %v2285
    %3896 = vmatpush.bf16.msra.mxu0 %v2283
    %3897 = vmatpush.bf16.msra.mxu0 %v2281
    %3898 = vmatpush.bf16.msra.mxu0 %v2279
    %3899 = vmatpush.bf16.msra.mxu0 %v2277
    %3900 = vmatmul.bf16.gmra.mxu0 %v1516
    %v3901 = vpop.f32.mrf.mxu0
    %v3902 = vadd.f32 %v3798, %v3901
    %v3903 = vpop.f32.mrf.mxu0
    %v3904 = vadd.f32 %v3800, %v3903
    %3905 = vmatmul.bf16.gmra.mxu0 %v1524
    %v3906 = vpop.f32.mrf.mxu0
    %v3907 = vadd.f32 %v3803, %v3906
    %v3908 = vpop.f32.mrf.mxu0
    %v3909 = vadd.f32 %v3805, %v3908
    %3910 = vmatmul.bf16.gmra.mxu0 %v1532
    %v3911 = vpop.f32.mrf.mxu0
    %v3912 = vadd.f32 %v3808, %v3911
    %v3913 = vpop.f32.mrf.mxu0
    %v3914 = vadd.f32 %v3810, %v3913
    %3915 = vmatmul.bf16.gmra.mxu0 %v1540
    %v3916 = vpop.f32.mrf.mxu0
    %v3917 = vadd.f32 %v3813, %v3916
    %v3918 = vpop.f32.mrf.mxu0
    %v3919 = vadd.f32 %v3815, %v3918
    %3920 = vmatmul.bf16.gmra.mxu0 %v1548
    %v3921 = vpop.f32.mrf.mxu0
    %v3922 = vadd.f32 %v3818, %v3921
    %v3923 = vpop.f32.mrf.mxu0
    %v3924 = vadd.f32 %v3820, %v3923
    %3925 = vmatmul.bf16.gmra.mxu0 %v1556
    %v3926 = vpop.f32.mrf.mxu0
    %v3927 = vadd.f32 %v3823, %v3926
    %v3928 = vpop.f32.mrf.mxu0
    %v3929 = vadd.f32 %v3825, %v3928
    %3930 = vmatmul.bf16.gmra.mxu0 %v1564
    %v3931 = vpop.f32.mrf.mxu0
    %v3932 = vadd.f32 %v3828, %v3931
    %v3933 = vpop.f32.mrf.mxu0
    %v3934 = vadd.f32 %v3830, %v3933
    %3935 = vmatmul.bf16.gmra.mxu0 %v1572
    %v3936 = vpop.f32.mrf.mxu0
    %v3937 = vadd.f32 %v3833, %v3936
    %v3938 = vpop.f32.mrf.mxu0
    %v3939 = vadd.f32 %v3835, %v3938
    %3940 = vmatmul.bf16.gmra.mxu0 %v1580
    %v3941 = vpop.f32.mrf.mxu0
    %v3942 = vadd.f32 %v3838, %v3941
    %v3943 = vpop.f32.mrf.mxu0
    %v3944 = vadd.f32 %v3840, %v3943
    %3945 = vmatmul.bf16.gmra.mxu0 %v1588
    %v3946 = vpop.f32.mrf.mxu0
    %v3947 = vadd.f32 %v3843, %v3946
    %v3948 = vpop.f32.mrf.mxu0
    %v3949 = vadd.f32 %v3845, %v3948
    %3950 = vmatmul.bf16.gmra.mxu0 %v1596
    %v3951 = vpop.f32.mrf.mxu0
    %v3952 = vadd.f32 %v3848, %v3951
    %v3953 = vpop.f32.mrf.mxu0
    %v3954 = vadd.f32 %v3850, %v3953
    %3955 = vmatmul.bf16.gmra.mxu0 %v1604
    %v3956 = vpop.f32.mrf.mxu0
    %v3957 = vadd.f32 %v3853, %v3956
    %v3958 = vpop.f32.mrf.mxu0
    %v3959 = vadd.f32 %v3855, %v3958
    %3960 = vmatmul.bf16.gmra.mxu0 %v1612
    %v3961 = vpop.f32.mrf.mxu0
    %v3962 = vadd.f32 %v3858, %v3961
    %v3963 = vpop.f32.mrf.mxu0
    %v3964 = vadd.f32 %v3860, %v3963
    %3965 = vmatmul.bf16.gmra.mxu0 %v1620
    %v3966 = vpop.f32.mrf.mxu0
    %v3967 = vadd.f32 %v3863, %v3966
    %v3968 = vpop.f32.mrf.mxu0
    %v3969 = vadd.f32 %v3865, %v3968
    %3970 = vmatmul.bf16.gmra.mxu0 %v1628
    %v3971 = vpop.f32.mrf.mxu0
    %v3972 = vadd.f32 %v3868, %v3971
    %v3973 = vpop.f32.mrf.mxu0
    %v3974 = vadd.f32 %v3870, %v3973
    %3975 = vmatmul.bf16.gmra.mxu0 %v1636
    %v3976 = vpop.f32.mrf.mxu0
    %v3977 = vadd.f32 %v3873, %v3976
    %v3978 = vpop.f32.mrf.mxu0
    %v3979 = vadd.f32 %v3875, %v3978
    %3980 = vmatmul.bf16.gmra.mxu0 %v1644
    %v3981 = vpop.f32.mrf.mxu0
    %v3982 = vadd.f32 %v3878, %v3981
    %v3983 = vpop.f32.mrf.mxu0
    %v3984 = vadd.f32 %v3880, %v3983
    %3985 = vmatmul.bf16.gmra.mxu0 %v1652
    %v3986 = vpop.f32.mrf.mxu0
    %v3987 = vadd.f32 %v3883, %v3986
    %v3988 = vpop.f32.mrf.mxu0
    %v3989 = vadd.f32 %v3885, %v3988
    %3990 = vmatmul.bf16.gmra.mxu0 %v1660
    %v3991 = vpop.f32.mrf.mxu0
    %v3992 = vadd.f32 %v3888, %v3991
    %v3993 = vpop.f32.mrf.mxu0
    %v3994 = vadd.f32 %v3890, %v3993
    %3995 = vdwg.mxu0
    %3996 = vmatpush.bf16.msra.mxu0 %v2307
    %3997 = vmatpush.bf16.msra.mxu0 %v2305
    %3998 = vmatpush.bf16.msra.mxu0 %v2303
    %3999 = vmatpush.bf16.msra.mxu0 %v2301
    %4000 = vmatpush.bf16.msra.mxu0 %v2299
    %4001 = vmatpush.bf16.msra.mxu0 %v2297
    %4002 = vmatpush.bf16.msra.mxu0 %v2295
    %4003 = vmatpush.bf16.msra.mxu0 %v2293
    %4004 = vmatmul.bf16.gmra.mxu0 %v1517
    %v4005 = vpop.f32.mrf.mxu0
    %v4006 = vadd.f32 %v3902, %v4005
    %v4007 = vpop.f32.mrf.mxu0
    %v4008 = vadd.f32 %v3904, %v4007
    %4009 = vmatmul.bf16.gmra.mxu0 %v1525
    %v4010 = vpop.f32.mrf.mxu0
    %v4011 = vadd.f32 %v3907, %v4010
    %v4012 = vpop.f32.mrf.mxu0
    %v4013 = vadd.f32 %v3909, %v4012
    %4014 = vmatmul.bf16.gmra.mxu0 %v1533
    %v4015 = vpop.f32.mrf.mxu0
    %v4016 = vadd.f32 %v3912, %v4015
    %v4017 = vpop.f32.mrf.mxu0
    %v4018 = vadd.f32 %v3914, %v4017
    %4019 = vmatmul.bf16.gmra.mxu0 %v1541
    %v4020 = vpop.f32.mrf.mxu0
    %v4021 = vadd.f32 %v3917, %v4020
    %v4022 = vpop.f32.mrf.mxu0
    %v4023 = vadd.f32 %v3919, %v4022
    %4024 = vmatmul.bf16.gmra.mxu0 %v1549
    %v4025 = vpop.f32.mrf.mxu0
    %v4026 = vadd.f32 %v3922, %v4025
    %v4027 = vpop.f32.mrf.mxu0
    %v4028 = vadd.f32 %v3924, %v4027
    %4029 = vmatmul.bf16.gmra.mxu0 %v1557
    %v4030 = vpop.f32.mrf.mxu0
    %v4031 = vadd.f32 %v3927, %v4030
    %v4032 = vpop.f32.mrf.mxu0
    %v4033 = vadd.f32 %v3929, %v4032
    %4034 = vmatmul.bf16.gmra.mxu0 %v1565
    %v4035 = vpop.f32.mrf.mxu0
    %v4036 = vadd.f32 %v3932, %v4035
    %v4037 = vpop.f32.mrf.mxu0
    %v4038 = vadd.f32 %v3934, %v4037
    %4039 = vmatmul.bf16.gmra.mxu0 %v1573
    %v4040 = vpop.f32.mrf.mxu0
    %v4041 = vadd.f32 %v3937, %v4040
    %v4042 = vpop.f32.mrf.mxu0
    %v4043 = vadd.f32 %v3939, %v4042
    %4044 = vmatmul.bf16.gmra.mxu0 %v1581
    %v4045 = vpop.f32.mrf.mxu0
    %v4046 = vadd.f32 %v3942, %v4045
    %v4047 = vpop.f32.mrf.mxu0
    %v4048 = vadd.f32 %v3944, %v4047
    %4049 = vmatmul.bf16.gmra.mxu0 %v1589
    %v4050 = vpop.f32.mrf.mxu0
    %v4051 = vadd.f32 %v3947, %v4050
    %v4052 = vpop.f32.mrf.mxu0
    %v4053 = vadd.f32 %v3949, %v4052
    %4054 = vmatmul.bf16.gmra.mxu0 %v1597
    %v4055 = vpop.f32.mrf.mxu0
    %v4056 = vadd.f32 %v3952, %v4055
    %v4057 = vpop.f32.mrf.mxu0
    %v4058 = vadd.f32 %v3954, %v4057
    %4059 = vmatmul.bf16.gmra.mxu0 %v1605
    %v4060 = vpop.f32.mrf.mxu0
    %v4061 = vadd.f32 %v3957, %v4060
    %v4062 = vpop.f32.mrf.mxu0
    %v4063 = vadd.f32 %v3959, %v4062
    %4064 = vmatmul.bf16.gmra.mxu0 %v1613
    %v4065 = vpop.f32.mrf.mxu0
    %v4066 = vadd.f32 %v3962, %v4065
    %v4067 = vpop.f32.mrf.mxu0
    %v4068 = vadd.f32 %v3964, %v4067
    %4069 = vmatmul.bf16.gmra.mxu0 %v1621
    %v4070 = vpop.f32.mrf.mxu0
    %v4071 = vadd.f32 %v3967, %v4070
    %v4072 = vpop.f32.mrf.mxu0
    %v4073 = vadd.f32 %v3969, %v4072
    %4074 = vmatmul.bf16.gmra.mxu0 %v1629
    %v4075 = vpop.f32.mrf.mxu0
    %v4076 = vadd.f32 %v3972, %v4075
    %v4077 = vpop.f32.mrf.mxu0
    %v4078 = vadd.f32 %v3974, %v4077
    %4079 = vmatmul.bf16.gmra.mxu0 %v1637
    %v4080 = vpop.f32.mrf.mxu0
    %v4081 = vadd.f32 %v3977, %v4080
    %v4082 = vpop.f32.mrf.mxu0
    %v4083 = vadd.f32 %v3979, %v4082
    %4084 = vmatmul.bf16.gmra.mxu0 %v1645
    %v4085 = vpop.f32.mrf.mxu0
    %v4086 = vadd.f32 %v3982, %v4085
    %v4087 = vpop.f32.mrf.mxu0
    %v4088 = vadd.f32 %v3984, %v4087
    %4089 = vmatmul.bf16.gmra.mxu0 %v1653
    %v4090 = vpop.f32.mrf.mxu0
    %v4091 = vadd.f32 %v3987, %v4090
    %v4092 = vpop.f32.mrf.mxu0
    %v4093 = vadd.f32 %v3989, %v4092
    %4094 = vmatmul.bf16.gmra.mxu0 %v1661
    %v4095 = vpop.f32.mrf.mxu0
    %v4096 = vadd.f32 %v3992, %v4095
    %v4097 = vpop.f32.mrf.mxu0
    %v4098 = vadd.f32 %v3994, %v4097
    %4099 = vdwg.mxu0
    %v4100 = vmax.f32 %v3174, 0.0
    %v4101 = vmax.f32 %v4006, 0.0
    %v4102 = vmax.f32 %v3176, 0.0
    %v4103 = vmax.f32 %v4008, 0.0
    %v4104 = vmax.f32 %v3179, 0.0
    %v4105 = vmax.f32 %v4011, 0.0
    %v4106 = vmax.f32 %v3181, 0.0
    %v4107 = vmax.f32 %v4013, 0.0
    %v4108 = vmax.f32 %v3184, 0.0
    %v4109 = vmax.f32 %v4016, 0.0
    %v4110 = vmax.f32 %v3186, 0.0
    %v4111 = vmax.f32 %v4018, 0.0
    %v4112 = vmax.f32 %v3189, 0.0
    %v4113 = vmax.f32 %v4021, 0.0
    %v4114 = vmax.f32 %v3191, 0.0
    %v4115 = vmax.f32 %v4023, 0.0
    %v4116 = vmax.f32 %v3194, 0.0
    %v4117 = vmax.f32 %v4026, 0.0
    %v4118 = vmax.f32 %v3196, 0.0
    %v4119 = vmax.f32 %v4028, 0.0
    %v4120 = vmax.f32 %v3199, 0.0
    %v4121 = vmax.f32 %v4031, 0.0
    %v4122 = vmax.f32 %v3201, 0.0
    %v4123 = vmax.f32 %v4033, 0.0
    %v4124 = vmax.f32 %v3204, 0.0
    %v4125 = vmax.f32 %v4036, 0.0
    %v4126 = vmax.f32 %v3206, 0.0
    %v4127 = vmax.f32 %v4038, 0.0
    %v4128 = vmax.f32 %v3209, 0.0
    %v4129 = vmax.f32 %v4041, 0.0
    %v4130 = vmax.f32 %v3211, 0.0
    %v4131 = vmax.f32 %v4043, 0.0
    %v4132 = vmax.f32 %v3214, 0.0
    %v4133 = vmax.f32 %v4046, 0.0
    %v4134 = vmax.f32 %v3216, 0.0
    %v4135 = vmax.f32 %v4048, 0.0
    %v4136 = vmax.f32 %v3219, 0.0
    %v4137 = vmax.f32 %v4051, 0.0
    %v4138 = vmax.f32 %v3221, 0.0
    %v4139 = vmax.f32 %v4053, 0.0
    %v4140 = vmax.f32 %v3224, 0.0
    %v4141 = vmax.f32 %v4056, 0.0
    %v4142 = vmax.f32 %v3226, 0.0
    %v4143 = vmax.f32 %v4058, 0.0
    %v4144 = vmax.f32 %v3229, 0.0
    %v4145 = vmax.f32 %v4061, 0.0
    %v4146 = vmax.f32 %v3231, 0.0
    %v4147 = vmax.f32 %v4063, 0.0
    %v4148 = vmax.f32 %v3234, 0.0
    %v4149 = vmax.f32 %v4066, 0.0
    %v4150 = vmax.f32 %v3236, 0.0
    %v4151 = vmax.f32 %v4068, 0.0
    %v4152 = vmax.f32 %v3239, 0.0
    %v4153 = vmax.f32 %v4071, 0.0
    %v4154 = vmax.f32 %v3241, 0.0
    %v4155 = vmax.f32 %v4073, 0.0
    %v4156 = vmax.f32 %v3244, 0.0
    %v4157 = vmax.f32 %v4076, 0.0
    %v4158 = vmax.f32 %v3246, 0.0
    %v4159 = vmax.f32 %v4078, 0.0
    %v4160 = vmax.f32 %v3249, 0.0
    %v4161 = vmax.f32 %v4081, 0.0
    %v4162 = vmax.f32 %v3251, 0.0
    %v4163 = vmax.f32 %v4083, 0.0
    %v4164 = vmax.f32 %v3254, 0.0
    %v4165 = vmax.f32 %v4086, 0.0
    %v4166 = vmax.f32 %v3256, 0.0
    %v4167 = vmax.f32 %v4088, 0.0
    %v4168 = vmax.f32 %v3259, 0.0
    %v4169 = vmax.f32 %v4091, 0.0
    %v4170 = vmax.f32 %v3261, 0.0
    %v4171 = vmax.f32 %v4093, 0.0
    %v4172 = vmax.f32 %v3264, 0.0
    %v4173 = vmax.f32 %v4096, 0.0
    %v4174 = vmax.f32 %v3266, 0.0
    %v4175 = vmax.f32 %v4098, 0.0
    %v4176 = vpack.c.bf16 %v4102, %v4100
    %v4177 = vpack.c.bf16 %v4103, %v4101
    %v4178 = vpack.c.bf16 %v4106, %v4104
    %v4179 = vpack.c.bf16 %v4107, %v4105
    %v4180 = vpack.c.bf16 %v4110, %v4108
    %v4181 = vpack.c.bf16 %v4111, %v4109
    %v4182 = vpack.c.bf16 %v4114, %v4112
    %v4183 = vpack.c.bf16 %v4115, %v4113
    %v4184 = vpack.c.bf16 %v4118, %v4116
    %v4185 = vpack.c.bf16 %v4119, %v4117
    %v4186 = vpack.c.bf16 %v4122, %v4120
    %v4187 = vpack.c.bf16 %v4123, %v4121
    %v4188 = vpack.c.bf16 %v4126, %v4124
    %v4189 = vpack.c.bf16 %v4127, %v4125
    %v4190 = vpack.c.bf16 %v4130, %v4128
    %v4191 = vpack.c.bf16 %v4131, %v4129
    %v4192 = vpack.c.bf16 %v4134, %v4132
    %v4193 = vpack.c.bf16 %v4135, %v4133
    %v4194 = vpack.c.bf16 %v4138, %v4136
    %v4195 = vpack.c.bf16 %v4139, %v4137
    %v4196 = vpack.c.bf16 %v4142, %v4140
    %v4197 = vpack.c.bf16 %v4143, %v4141
    %v4198 = vpack.c.bf16 %v4146, %v4144
    %v4199 = vpack.c.bf16 %v4147, %v4145
    %v4200 = vpack.c.bf16 %v4150, %v4148
    %v4201 = vpack.c.bf16 %v4151, %v4149
    %v4202 = vpack.c.bf16 %v4154, %v4152
    %v4203 = vpack.c.bf16 %v4155, %v4153
    %v4204 = vpack.c.bf16 %v4158, %v4156
    %v4205 = vpack.c.bf16 %v4159, %v4157
    %v4206 = vpack.c.bf16 %v4162, %v4160
    %v4207 = vpack.c.bf16 %v4163, %v4161
    %v4208 = vpack.c.bf16 %v4166, %v4164
    %v4209 = vpack.c.bf16 %v4167, %v4165
    %v4210 = vpack.c.bf16 %v4170, %v4168
    %v4211 = vpack.c.bf16 %v4171, %v4169
    %v4212 = vpack.c.bf16 %v4174, %v4172
    %v4213 = vpack.c.bf16 %v4175, %v4173
    %v4214 = vld [vmem:[%s5] sm:$0xf]
    %v4215 = vld [vmem:[%s5 + $0x4] sm:$0xf]
    %v4216 = vld [vmem:[%s5 + $0x8] sm:$0xf]
    %v4217 = vld [vmem:[%s5 + $0xc] sm:$0xf]
    %v4218 = vld [vmem:[%s5 + $0x10] sm:$0xf]
    %v4219 = vld [vmem:[%s5 + $0x14] sm:$0xf]
    %v4220 = vld [vmem:[%s5 + $0x18] sm:$0xf]
    %v4221 = vld [vmem:[%s5 + $0x1c] sm:$0xf]
    %v4222 = vld [vmem:[%s5 + $0x20] sm:$0xf]
    %v4223 = vld [vmem:[%s5 + $0x24] sm:$0xf]
    %v4224 = vld [vmem:[%s5 + $0x28] sm:$0xf]
    %v4225 = vld [vmem:[%s5 + $0x2c] sm:$0xf]
    %v4226 = vld [vmem:[%s5 + $0x30] sm:$0xf]
    %v4227 = vld [vmem:[%s5 + $0x34] sm:$0xf]
    %v4228 = vld [vmem:[%s5 + $0x38] sm:$0xf]
    %v4229 = vld [vmem:[%s5 + $0x3c] sm:$0xf]
    %v4230 = vld [vmem:[%s5 + $0x40] sm:$0xf]
    %v4231 = vld [vmem:[%s5 + $0x44] sm:$0xf]
    %v4232 = vld [vmem:[%s5 + $0x48] sm:$0xf]
    %v4233 = vld [vmem:[%s5 + $0x4c] sm:$0xf]
    %v4234 = vld [vmem:[%s5 + $0x50] sm:$0xf]
    %v4235 = vld [vmem:[%s5 + $0x54] sm:$0xf]
    %v4236 = vld [vmem:[%s5 + $0x58] sm:$0xf]
    %v4237 = vld [vmem:[%s5 + $0x5c] sm:$0xf]
    %v4238 = vld [vmem:[%s5 + $0x60] sm:$0xf]
    %v4239 = vld [vmem:[%s5 + $0x64] sm:$0xf]
    %v4240 = vld [vmem:[%s5 + $0x68] sm:$0xf]
    %v4241 = vld [vmem:[%s5 + $0x6c] sm:$0xf]
    %v4242 = vld [vmem:[%s5 + $0x70] sm:$0xf]
    %v4243 = vld [vmem:[%s5 + $0x74] sm:$0xf]
    %v4244 = vld [vmem:[%s5 + $0x78] sm:$0xf]
    %v4245 = vld [vmem:[%s5 + $0x7c] sm:$0xf]
    %v4246 = vld [vmem:[%s6] sm:$0x1]
    %v4248 = vperm.slane %v4246, 0
    %v4282 = vunpack.c.l.b16 %v4214
    %v4283 = vunpack.c.l.b16 %v4215
    %v4284 = vunpack.c.l.b16 %v4216
    %v4285 = vunpack.c.l.b16 %v4217
    %v4286 = vunpack.c.l.b16 %v4218
    %v4287 = vunpack.c.l.b16 %v4219
    %v4288 = vunpack.c.l.b16 %v4220
    %v4289 = vunpack.c.l.b16 %v4221
    %v4290 = vunpack.c.l.b16 %v4222
    %v4291 = vunpack.c.l.b16 %v4223
    %v4292 = vunpack.c.l.b16 %v4224
    %v4293 = vunpack.c.l.b16 %v4225
    %v4294 = vunpack.c.l.b16 %v4226
    %v4295 = vunpack.c.l.b16 %v4227
    %v4296 = vunpack.c.l.b16 %v4228
    %v4297 = vunpack.c.l.b16 %v4229
    %v4298 = vunpack.c.l.b16 %v4230
    %v4299 = vunpack.c.l.b16 %v4231
    %v4300 = vunpack.c.l.b16 %v4232
    %v4301 = vunpack.c.l.b16 %v4233
    %v4302 = vunpack.c.l.b16 %v4234
    %v4303 = vunpack.c.l.b16 %v4235
    %v4304 = vunpack.c.l.b16 %v4236
    %v4305 = vunpack.c.l.b16 %v4237
    %v4306 = vunpack.c.l.b16 %v4238
    %v4307 = vunpack.c.l.b16 %v4239
    %v4308 = vunpack.c.l.b16 %v4240
    %v4309 = vunpack.c.l.b16 %v4241
    %v4310 = vunpack.c.l.b16 %v4242
    %v4311 = vunpack.c.l.b16 %v4243
    %v4312 = vunpack.c.l.b16 %v4244
    %v4313 = vunpack.c.l.b16 %v4245
    %v4314 = vpack.c.b16 %v4283, %v4282
    %v4315 = vpack.c.b16 %v4285, %v4284
    %v4316 = vpack.c.b16 %v4287, %v4286
    %v4317 = vpack.c.b16 %v4289, %v4288
    %v4318 = vpack.c.b16 %v4291, %v4290
    %v4319 = vpack.c.b16 %v4293, %v4292
    %v4320 = vpack.c.b16 %v4295, %v4294
    %v4321 = vpack.c.b16 %v4297, %v4296
    %v4322 = vpack.c.b16 %v4299, %v4298
    %v4323 = vpack.c.b16 %v4301, %v4300
    %v4324 = vpack.c.b16 %v4303, %v4302
    %v4325 = vpack.c.b16 %v4305, %v4304
    %v4326 = vpack.c.b16 %v4307, %v4306
    %v4327 = vpack.c.b16 %v4309, %v4308
    %v4328 = vpack.c.b16 %v4311, %v4310
    %v4329 = vpack.c.b16 %v4313, %v4312
    %4346 = vmatpush.bf16.msra.mxu0 %v4321
    %4347 = vmatpush.bf16.msra.mxu0 %v4320
    %4348 = vmatpush.bf16.msra.mxu0 %v4319
    %4349 = vmatpush.bf16.msra.mxu0 %v4318
    %4350 = vmatpush.bf16.msra.mxu0 %v4317
    %4351 = vmatpush.bf16.msra.mxu0 %v4316
    %4352 = vmatpush.bf16.msra.mxu0 %v4315
    %4353 = vmatpush.bf16.msra.mxu0 %v4314
    %4354 = vmatmul.bf16.gmra.mxu0 %v4176
    %v4355 = vpop.f32.mrf.mxu0
    %v4356 = vadd.f32 %v4248, %v4355
    %v4357 = vpop.f32.mrf.mxu0
    %v4358 = vadd.f32 %v4248, %v4357
    %4359 = vmatmul.bf16.gmra.mxu0 %v4178
    %v4360 = vpop.f32.mrf.mxu0
    %v4361 = vadd.f32 %v4248, %v4360
    %v4362 = vpop.f32.mrf.mxu0
    %v4363 = vadd.f32 %v4248, %v4362
    %4364 = vmatmul.bf16.gmra.mxu0 %v4180
    %v4365 = vpop.f32.mrf.mxu0
    %v4366 = vadd.f32 %v4248, %v4365
    %v4367 = vpop.f32.mrf.mxu0
    %v4368 = vadd.f32 %v4248, %v4367
    %4369 = vmatmul.bf16.gmra.mxu0 %v4182
    %v4370 = vpop.f32.mrf.mxu0
    %v4371 = vadd.f32 %v4248, %v4370
    %v4372 = vpop.f32.mrf.mxu0
    %v4373 = vadd.f32 %v4248, %v4372
    %4374 = vmatmul.bf16.gmra.mxu0 %v4184
    %v4375 = vpop.f32.mrf.mxu0
    %v4376 = vadd.f32 %v4248, %v4375
    %v4377 = vpop.f32.mrf.mxu0
    %v4378 = vadd.f32 %v4248, %v4377
    %4379 = vmatmul.bf16.gmra.mxu0 %v4186
    %v4380 = vpop.f32.mrf.mxu0
    %v4381 = vadd.f32 %v4248, %v4380
    %v4382 = vpop.f32.mrf.mxu0
    %v4383 = vadd.f32 %v4248, %v4382
    %4384 = vmatmul.bf16.gmra.mxu0 %v4188
    %v4385 = vpop.f32.mrf.mxu0
    %v4386 = vadd.f32 %v4248, %v4385
    %v4387 = vpop.f32.mrf.mxu0
    %v4388 = vadd.f32 %v4248, %v4387
    %4389 = vmatmul.bf16.gmra.mxu0 %v4190
    %v4390 = vpop.f32.mrf.mxu0
    %v4391 = vadd.f32 %v4248, %v4390
    %v4392 = vpop.f32.mrf.mxu0
    %v4393 = vadd.f32 %v4248, %v4392
    %4394 = vmatmul.bf16.gmra.mxu0 %v4192
    %v4395 = vpop.f32.mrf.mxu0
    %v4396 = vadd.f32 %v4248, %v4395
    %v4397 = vpop.f32.mrf.mxu0
    %v4398 = vadd.f32 %v4248, %v4397
    %4399 = vmatmul.bf16.gmra.mxu0 %v4194
    %v4400 = vpop.f32.mrf.mxu0
    %v4401 = vadd.f32 %v4248, %v4400
    %v4402 = vpop.f32.mrf.mxu0
    %v4403 = vadd.f32 %v4248, %v4402
    %4404 = vmatmul.bf16.gmra.mxu0 %v4196
    %v4405 = vpop.f32.mrf.mxu0
    %v4406 = vadd.f32 %v4248, %v4405
    %v4407 = vpop.f32.mrf.mxu0
    %v4408 = vadd.f32 %v4248, %v4407
    %4409 = vmatmul.bf16.gmra.mxu0 %v4198
    %v4410 = vpop.f32.mrf.mxu0
    %v4411 = vadd.f32 %v4248, %v4410
    %v4412 = vpop.f32.mrf.mxu0
    %v4413 = vadd.f32 %v4248, %v4412
    %4414 = vmatmul.bf16.gmra.mxu0 %v4200
    %v4415 = vpop.f32.mrf.mxu0
    %v4416 = vadd.f32 %v4248, %v4415
    %v4417 = vpop.f32.mrf.mxu0
    %v4418 = vadd.f32 %v4248, %v4417
    %4419 = vmatmul.bf16.gmra.mxu0 %v4202
    %v4420 = vpop.f32.mrf.mxu0
    %v4421 = vadd.f32 %v4248, %v4420
    %v4422 = vpop.f32.mrf.mxu0
    %v4423 = vadd.f32 %v4248, %v4422
    %4424 = vmatmul.bf16.gmra.mxu0 %v4204
    %v4425 = vpop.f32.mrf.mxu0
    %v4426 = vadd.f32 %v4248, %v4425
    %v4427 = vpop.f32.mrf.mxu0
    %v4428 = vadd.f32 %v4248, %v4427
    %4429 = vmatmul.bf16.gmra.mxu0 %v4206
    %v4430 = vpop.f32.mrf.mxu0
    %v4431 = vadd.f32 %v4248, %v4430
    %v4432 = vpop.f32.mrf.mxu0
    %v4433 = vadd.f32 %v4248, %v4432
    %4434 = vmatmul.bf16.gmra.mxu0 %v4208
    %v4435 = vpop.f32.mrf.mxu0
    %v4436 = vadd.f32 %v4248, %v4435
    %v4437 = vpop.f32.mrf.mxu0
    %v4438 = vadd.f32 %v4248, %v4437
    %4439 = vmatmul.bf16.gmra.mxu0 %v4210
    %v4440 = vpop.f32.mrf.mxu0
    %v4441 = vadd.f32 %v4248, %v4440
    %v4442 = vpop.f32.mrf.mxu0
    %v4443 = vadd.f32 %v4248, %v4442
    %4444 = vmatmul.bf16.gmra.mxu0 %v4212
    %v4445 = vpop.f32.mrf.mxu0
    %v4446 = vadd.f32 %v4248, %v4445
    %v4447 = vpop.f32.mrf.mxu0
    %v4448 = vadd.f32 %v4248, %v4447
    %4449 = vdwg.mxu0
    %4450 = vmatpush.bf16.msra.mxu0 %v4329
    %4451 = vmatpush.bf16.msra.mxu0 %v4328
    %4452 = vmatpush.bf16.msra.mxu0 %v4327
    %4453 = vmatpush.bf16.msra.mxu0 %v4326
    %4454 = vmatpush.bf16.msra.mxu0 %v4325
    %4455 = vmatpush.bf16.msra.mxu0 %v4324
    %4456 = vmatpush.bf16.msra.mxu0 %v4323
    %4457 = vmatpush.bf16.msra.mxu0 %v4322
    %4458 = vmatmul.bf16.gmra.mxu0 %v4177
    %v4459 = vpop.f32.mrf.mxu0
    %v4460 = vadd.f32 %v4356, %v4459
    %v4461 = vpop.f32.mrf.mxu0
    %v4462 = vadd.f32 %v4358, %v4461
    %4463 = vmatmul.bf16.gmra.mxu0 %v4179
    %v4464 = vpop.f32.mrf.mxu0
    %v4465 = vadd.f32 %v4361, %v4464
    %v4466 = vpop.f32.mrf.mxu0
    %v4467 = vadd.f32 %v4363, %v4466
    %4468 = vmatmul.bf16.gmra.mxu0 %v4181
    %v4469 = vpop.f32.mrf.mxu0
    %v4470 = vadd.f32 %v4366, %v4469
    %v4471 = vpop.f32.mrf.mxu0
    %v4472 = vadd.f32 %v4368, %v4471
    %4473 = vmatmul.bf16.gmra.mxu0 %v4183
    %v4474 = vpop.f32.mrf.mxu0
    %v4475 = vadd.f32 %v4371, %v4474
    %v4476 = vpop.f32.mrf.mxu0
    %v4477 = vadd.f32 %v4373, %v4476
    %4478 = vmatmul.bf16.gmra.mxu0 %v4185
    %v4479 = vpop.f32.mrf.mxu0
    %v4480 = vadd.f32 %v4376, %v4479
    %v4481 = vpop.f32.mrf.mxu0
    %v4482 = vadd.f32 %v4378, %v4481
    %4483 = vmatmul.bf16.gmra.mxu0 %v4187
    %v4484 = vpop.f32.mrf.mxu0
    %v4485 = vadd.f32 %v4381, %v4484
    %v4486 = vpop.f32.mrf.mxu0
    %v4487 = vadd.f32 %v4383, %v4486
    %4488 = vmatmul.bf16.gmra.mxu0 %v4189
    %v4489 = vpop.f32.mrf.mxu0
    %v4490 = vadd.f32 %v4386, %v4489
    %v4491 = vpop.f32.mrf.mxu0
    %v4492 = vadd.f32 %v4388, %v4491
    %4493 = vmatmul.bf16.gmra.mxu0 %v4191
    %v4494 = vpop.f32.mrf.mxu0
    %v4495 = vadd.f32 %v4391, %v4494
    %v4496 = vpop.f32.mrf.mxu0
    %v4497 = vadd.f32 %v4393, %v4496
    %4498 = vmatmul.bf16.gmra.mxu0 %v4193
    %v4499 = vpop.f32.mrf.mxu0
    %v4500 = vadd.f32 %v4396, %v4499
    %v4501 = vpop.f32.mrf.mxu0
    %v4502 = vadd.f32 %v4398, %v4501
    %4503 = vmatmul.bf16.gmra.mxu0 %v4195
    %v4504 = vpop.f32.mrf.mxu0
    %v4505 = vadd.f32 %v4401, %v4504
    %v4506 = vpop.f32.mrf.mxu0
    %v4507 = vadd.f32 %v4403, %v4506
    %4508 = vmatmul.bf16.gmra.mxu0 %v4197
    %v4509 = vpop.f32.mrf.mxu0
    %v4510 = vadd.f32 %v4406, %v4509
    %v4511 = vpop.f32.mrf.mxu0
    %v4512 = vadd.f32 %v4408, %v4511
    %4513 = vmatmul.bf16.gmra.mxu0 %v4199
    %v4514 = vpop.f32.mrf.mxu0
    %v4515 = vadd.f32 %v4411, %v4514
    %v4516 = vpop.f32.mrf.mxu0
    %v4517 = vadd.f32 %v4413, %v4516
    %4518 = vmatmul.bf16.gmra.mxu0 %v4201
    %v4519 = vpop.f32.mrf.mxu0
    %v4520 = vadd.f32 %v4416, %v4519
    %v4521 = vpop.f32.mrf.mxu0
    %v4522 = vadd.f32 %v4418, %v4521
    %4523 = vmatmul.bf16.gmra.mxu0 %v4203
    %v4524 = vpop.f32.mrf.mxu0
    %v4525 = vadd.f32 %v4421, %v4524
    %v4526 = vpop.f32.mrf.mxu0
    %v4527 = vadd.f32 %v4423, %v4526
    %4528 = vmatmul.bf16.gmra.mxu0 %v4205
    %v4529 = vpop.f32.mrf.mxu0
    %v4530 = vadd.f32 %v4426, %v4529
    %v4531 = vpop.f32.mrf.mxu0
    %v4532 = vadd.f32 %v4428, %v4531
    %4533 = vmatmul.bf16.gmra.mxu0 %v4207
    %v4534 = vpop.f32.mrf.mxu0
    %v4535 = vadd.f32 %v4431, %v4534
    %v4536 = vpop.f32.mrf.mxu0
    %v4537 = vadd.f32 %v4433, %v4536
    %4538 = vmatmul.bf16.gmra.mxu0 %v4209
    %v4539 = vpop.f32.mrf.mxu0
    %v4540 = vadd.f32 %v4436, %v4539
    %v4541 = vpop.f32.mrf.mxu0
    %v4542 = vadd.f32 %v4438, %v4541
    %4543 = vmatmul.bf16.gmra.mxu0 %v4211
    %v4544 = vpop.f32.mrf.mxu0
    %v4545 = vadd.f32 %v4441, %v4544
    %v4546 = vpop.f32.mrf.mxu0
    %v4547 = vadd.f32 %v4443, %v4546
    %4548 = vmatmul.bf16.gmra.mxu0 %v4213
    %v4549 = vpop.f32.mrf.mxu0
    %v4550 = vadd.f32 %v4446, %v4549
    %v4551 = vpop.f32.mrf.mxu0
    %v4552 = vadd.f32 %v4448, %v4551
    %4553 = vdwg.mxu0
    %v4554 = vmax.f32 %v4460, 0.0
    %v4555 = vmax.f32 %v4462, 0.0
    %v4556 = vmax.f32 %v4465, 0.0
    %v4557 = vmax.f32 %v4467, 0.0
    %v4558 = vmax.f32 %v4470, 0.0
    %v4559 = vmax.f32 %v4472, 0.0
    %v4560 = vmax.f32 %v4475, 0.0
    %v4561 = vmax.f32 %v4477, 0.0
    %v4562 = vmax.f32 %v4480, 0.0
    %v4563 = vmax.f32 %v4482, 0.0
    %v4564 = vmax.f32 %v4485, 0.0
    %v4565 = vmax.f32 %v4487, 0.0
    %v4566 = vmax.f32 %v4490, 0.0
    %v4567 = vmax.f32 %v4492, 0.0
    %v4568 = vmax.f32 %v4495, 0.0
    %v4569 = vmax.f32 %v4497, 0.0
    %v4570 = vmax.f32 %v4500, 0.0
    %v4571 = vmax.f32 %v4502, 0.0
    %v4572 = vmax.f32 %v4505, 0.0
    %v4573 = vmax.f32 %v4507, 0.0
    %v4574 = vmax.f32 %v4510, 0.0
    %v4575 = vmax.f32 %v4512, 0.0
    %v4576 = vmax.f32 %v4515, 0.0
    %v4577 = vmax.f32 %v4517, 0.0
    %v4578 = vmax.f32 %v4520, 0.0
    %v4579 = vmax.f32 %v4522, 0.0
    %v4580 = vmax.f32 %v4525, 0.0
    %v4581 = vmax.f32 %v4527, 0.0
    %v4582 = vmax.f32 %v4530, 0.0
    %v4583 = vmax.f32 %v4532, 0.0
    %v4584 = vmax.f32 %v4535, 0.0
    %v4585 = vmax.f32 %v4537, 0.0
    %v4586 = vmax.f32 %v4540, 0.0
    %v4587 = vmax.f32 %v4542, 0.0
    %v4588 = vmax.f32 %v4545, 0.0
    %v4589 = vmax.f32 %v4547, 0.0
    %v4590 = vmax.f32 %v4550, 0.0
    %v4591 = vmax.f32 %v4552, 0.0
    %v4592 = vpack.c.bf16 %v4555, %v4554
    %v4593 = vpack.c.bf16 %v4557, %v4556
    %v4594 = vpack.c.bf16 %v4559, %v4558
    %v4595 = vpack.c.bf16 %v4561, %v4560
    %v4596 = vpack.c.bf16 %v4563, %v4562
    %v4597 = vpack.c.bf16 %v4565, %v4564
    %v4598 = vpack.c.bf16 %v4567, %v4566
    %v4599 = vpack.c.bf16 %v4569, %v4568
    %v4600 = vpack.c.bf16 %v4571, %v4570
    %v4601 = vpack.c.bf16 %v4573, %v4572
    %v4602 = vpack.c.bf16 %v4575, %v4574
    %v4603 = vpack.c.bf16 %v4577, %v4576
    %v4604 = vpack.c.bf16 %v4579, %v4578
    %v4605 = vpack.c.bf16 %v4581, %v4580
    %v4606 = vpack.c.bf16 %v4583, %v4582
    %v4607 = vpack.c.bf16 %v4585, %v4584
    %v4608 = vpack.c.bf16 %v4587, %v4586
    %v4609 = vpack.c.bf16 %v4589, %v4588
    %v4610 = vpack.c.bf16 %v4591, %v4590
    %v4611 = vld [vmem:[%s7] sm:$0xf]
    %v4612 = vld [vmem:[%s7 + $0x4] sm:$0xf]
    %v4613 = vld [vmem:[%s7 + $0x8] sm:$0xf]
    %v4614 = vld [vmem:[%s7 + $0xc] sm:$0xf]
    %v4615 = vld [vmem:[%s7 + $0x10] sm:$0xf]
    %v4616 = vld [vmem:[%s7 + $0x14] sm:$0xf]
    %v4617 = vld [vmem:[%s7 + $0x18] sm:$0xf]
    %v4618 = vld [vmem:[%s7 + $0x1c] sm:$0xf]
    %v4619 = vld [vmem:[%s8] sm:$0x1]
    %v4621 = vperm.slane %v4619, 0
    %v4631 = vunpack.c.l.b16 %v4611
    %v4632 = vunpack.c.l.b16 %v4612
    %v4633 = vunpack.c.l.b16 %v4613
    %v4634 = vunpack.c.l.b16 %v4614
    %v4635 = vunpack.c.l.b16 %v4615
    %v4636 = vunpack.c.l.b16 %v4616
    %v4637 = vunpack.c.l.b16 %v4617
    %v4638 = vunpack.c.l.b16 %v4618
    %v4639 = vpack.c.b16 %v4632, %v4631
    %v4640 = vpack.c.b16 %v4634, %v4633
    %v4641 = vpack.c.b16 %v4636, %v4635
    %v4642 = vpack.c.b16 %v4638, %v4637
    %v4648 = vsel %vm316, %v4592, 0
    %v4651 = vsel %vm316, %v4593, 0
    %v4654 = vsel %vm316, %v4594, 0
    %v4657 = vsel %vm316, %v4595, 0
    %v4660 = vsel %vm316, %v4596, 0
    %v4663 = vsel %vm316, %v4597, 0
    %v4666 = vsel %vm316, %v4598, 0
    %v4669 = vsel %vm316, %v4599, 0
    %v4672 = vsel %vm316, %v4600, 0
    %v4675 = vsel %vm316, %v4601, 0
    %v4678 = vsel %vm316, %v4602, 0
    %v4681 = vsel %vm316, %v4603, 0
    %v4684 = vsel %vm316, %v4604, 0
    %v4687 = vsel %vm316, %v4605, 0
    %v4690 = vsel %vm316, %v4606, 0
    %v4693 = vsel %vm316, %v4607, 0
    %v4696 = vsel %vm316, %v4608, 0
    %v4699 = vsel %vm316, %v4609, 0
    %v4702 = vsel %vm316, %v4610, 0
    %4704 = vmatpush.bf16.msra.mxu0 0
    %4705 = vmatpush.bf16.msra.mxu0 0
    %4706 = vmatpush.bf16.msra.mxu0 0
    %4707 = vmatpush.bf16.msra.mxu0 0
    %4708 = vmatpush.bf16.msra.mxu0 %v4642
    %4709 = vmatpush.bf16.msra.mxu0 %v4641
    %4710 = vmatpush.bf16.msra.mxu0 %v4640
    %4711 = vmatpush.bf16.msra.mxu0 %v4639
    %4712 = vmatmul.bf16.gmra.mxu0 %v4648
    %v4713 = vpop.f32.mrf.mxu0
    %v4714 = vadd.f32 %v4621, %v4713
    %v4715 = vpop.f32.mrf.mxu0
    %v4716 = vadd.f32 %v4621, %v4715
    %4717 = vmatmul.bf16.gmra.mxu0 %v4651
    %v4718 = vpop.f32.mrf.mxu0
    %v4719 = vadd.f32 %v4621, %v4718
    %v4720 = vpop.f32.mrf.mxu0
    %v4721 = vadd.f32 %v4621, %v4720
    %4722 = vmatmul.bf16.gmra.mxu0 %v4654
    %v4723 = vpop.f32.mrf.mxu0
    %v4724 = vadd.f32 %v4621, %v4723
    %v4725 = vpop.f32.mrf.mxu0
    %v4726 = vadd.f32 %v4621, %v4725
    %4727 = vmatmul.bf16.gmra.mxu0 %v4657
    %v4728 = vpop.f32.mrf.mxu0
    %v4729 = vadd.f32 %v4621, %v4728
    %v4730 = vpop.f32.mrf.mxu0
    %v4731 = vadd.f32 %v4621, %v4730
    %4732 = vmatmul.bf16.gmra.mxu0 %v4660
    %v4733 = vpop.f32.mrf.mxu0
    %v4734 = vadd.f32 %v4621, %v4733
    %v4735 = vpop.f32.mrf.mxu0
    %v4736 = vadd.f32 %v4621, %v4735
    %4737 = vmatmul.bf16.gmra.mxu0 %v4663
    %v4738 = vpop.f32.mrf.mxu0
    %v4739 = vadd.f32 %v4621, %v4738
    %v4740 = vpop.f32.mrf.mxu0
    %v4741 = vadd.f32 %v4621, %v4740
    %4742 = vmatmul.bf16.gmra.mxu0 %v4666
    %v4743 = vpop.f32.mrf.mxu0
    %v4744 = vadd.f32 %v4621, %v4743
    %v4745 = vpop.f32.mrf.mxu0
    %v4746 = vadd.f32 %v4621, %v4745
    %4747 = vmatmul.bf16.gmra.mxu0 %v4669
    %v4748 = vpop.f32.mrf.mxu0
    %v4749 = vadd.f32 %v4621, %v4748
    %v4750 = vpop.f32.mrf.mxu0
    %v4751 = vadd.f32 %v4621, %v4750
    %4752 = vmatmul.bf16.gmra.mxu0 %v4672
    %v4753 = vpop.f32.mrf.mxu0
    %v4754 = vadd.f32 %v4621, %v4753
    %v4755 = vpop.f32.mrf.mxu0
    %v4756 = vadd.f32 %v4621, %v4755
    %4757 = vmatmul.bf16.gmra.mxu0 %v4675
    %v4758 = vpop.f32.mrf.mxu0
    %v4759 = vadd.f32 %v4621, %v4758
    %v4760 = vpop.f32.mrf.mxu0
    %v4761 = vadd.f32 %v4621, %v4760
    %4762 = vmatmul.bf16.gmra.mxu0 %v4678
    %v4763 = vpop.f32.mrf.mxu0
    %v4764 = vadd.f32 %v4621, %v4763
    %v4765 = vpop.f32.mrf.mxu0
    %v4766 = vadd.f32 %v4621, %v4765
    %4767 = vmatmul.bf16.gmra.mxu0 %v4681
    %v4768 = vpop.f32.mrf.mxu0
    %v4769 = vadd.f32 %v4621, %v4768
    %v4770 = vpop.f32.mrf.mxu0
    %v4771 = vadd.f32 %v4621, %v4770
    %4772 = vmatmul.bf16.gmra.mxu0 %v4684
    %v4773 = vpop.f32.mrf.mxu0
    %v4774 = vadd.f32 %v4621, %v4773
    %v4775 = vpop.f32.mrf.mxu0
    %v4776 = vadd.f32 %v4621, %v4775
    %4777 = vmatmul.bf16.gmra.mxu0 %v4687
    %v4778 = vpop.f32.mrf.mxu0
    %v4779 = vadd.f32 %v4621, %v4778
    %v4780 = vpop.f32.mrf.mxu0
    %v4781 = vadd.f32 %v4621, %v4780
    %4782 = vmatmul.bf16.gmra.mxu0 %v4690
    %v4783 = vpop.f32.mrf.mxu0
    %v4784 = vadd.f32 %v4621, %v4783
    %v4785 = vpop.f32.mrf.mxu0
    %v4786 = vadd.f32 %v4621, %v4785
    %4787 = vmatmul.bf16.gmra.mxu0 %v4693
    %v4788 = vpop.f32.mrf.mxu0
    %v4789 = vadd.f32 %v4621, %v4788
    %v4790 = vpop.f32.mrf.mxu0
    %v4791 = vadd.f32 %v4621, %v4790
    %4792 = vmatmul.bf16.gmra.mxu0 %v4696
    %v4793 = vpop.f32.mrf.mxu0
    %v4794 = vadd.f32 %v4621, %v4793
    %v4795 = vpop.f32.mrf.mxu0
    %v4796 = vadd.f32 %v4621, %v4795
    %4797 = vmatmul.bf16.gmra.mxu0 %v4699
    %v4798 = vpop.f32.mrf.mxu0
    %v4799 = vadd.f32 %v4621, %v4798
    %v4800 = vpop.f32.mrf.mxu0
    %v4801 = vadd.f32 %v4621, %v4800
    %4802 = vmatmul.bf16.gmra.mxu0 %v4702
    %v4803 = vpop.f32.mrf.mxu0
    %v4804 = vadd.f32 %v4621, %v4803
    %v4805 = vpop.f32.mrf.mxu0
    %v4806 = vadd.f32 %v4621, %v4805
    %4807 = vdwg.mxu0
    %vm4808 = vcmask 64512
    %v4809 = vsel %vm4808, %v4714, -inf
    %4810 = vmax.xlane.f32.xlu0 %v4809
    %v4811 = vpop.xlane.xlu0 %4810
    %v4812 = vsel %vm4808, %v4716, -inf
    %4813 = vmax.xlane.f32.xlu0 %v4812
    %v4814 = vpop.xlane.xlu0 %4813
    %v4815 = vsel %vm4808, %v4719, -inf
    %4816 = vmax.xlane.f32.xlu0 %v4815
    %v4817 = vpop.xlane.xlu0 %4816
    %v4818 = vsel %vm4808, %v4721, -inf
    %4819 = vmax.xlane.f32.xlu0 %v4818
    %v4820 = vpop.xlane.xlu0 %4819
    %v4821 = vsel %vm4808, %v4724, -inf
    %4822 = vmax.xlane.f32.xlu0 %v4821
    %v4823 = vpop.xlane.xlu0 %4822
    %v4824 = vsel %vm4808, %v4726, -inf
    %4825 = vmax.xlane.f32.xlu0 %v4824
    %v4826 = vpop.xlane.xlu0 %4825
    %v4827 = vsel %vm4808, %v4729, -inf
    %4828 = vmax.xlane.f32.xlu0 %v4827
    %v4829 = vpop.xlane.xlu0 %4828
    %v4830 = vsel %vm4808, %v4731, -inf
    %4831 = vmax.xlane.f32.xlu0 %v4830
    %v4832 = vpop.xlane.xlu0 %4831
    %v4833 = vsel %vm4808, %v4734, -inf
    %4834 = vmax.xlane.f32.xlu0 %v4833
    %v4835 = vpop.xlane.xlu0 %4834
    %v4836 = vsel %vm4808, %v4736, -inf
    %4837 = vmax.xlane.f32.xlu0 %v4836
    %v4838 = vpop.xlane.xlu0 %4837
    %v4839 = vsel %vm4808, %v4739, -inf
    %4840 = vmax.xlane.f32.xlu0 %v4839
    %v4841 = vpop.xlane.xlu0 %4840
    %v4842 = vsel %vm4808, %v4741, -inf
    %4843 = vmax.xlane.f32.xlu0 %v4842
    %v4844 = vpop.xlane.xlu0 %4843
    %v4845 = vsel %vm4808, %v4744, -inf
    %4846 = vmax.xlane.f32.xlu0 %v4845
    %v4847 = vpop.xlane.xlu0 %4846
    %v4848 = vsel %vm4808, %v4746, -inf
    %4849 = vmax.xlane.f32.xlu0 %v4848
    %v4850 = vpop.xlane.xlu0 %4849
    %v4851 = vsel %vm4808, %v4749, -inf
    %4852 = vmax.xlane.f32.xlu0 %v4851
    %v4853 = vpop.xlane.xlu0 %4852
    %v4854 = vsel %vm4808, %v4751, -inf
    %4855 = vmax.xlane.f32.xlu0 %v4854
    %v4856 = vpop.xlane.xlu0 %4855
    %v4857 = vsel %vm4808, %v4754, -inf
    %4858 = vmax.xlane.f32.xlu0 %v4857
    %v4859 = vpop.xlane.xlu0 %4858
    %v4860 = vsel %vm4808, %v4756, -inf
    %4861 = vmax.xlane.f32.xlu0 %v4860
    %v4862 = vpop.xlane.xlu0 %4861
    %v4863 = vsel %vm4808, %v4759, -inf
    %4864 = vmax.xlane.f32.xlu0 %v4863
    %v4865 = vpop.xlane.xlu0 %4864
    %v4866 = vsel %vm4808, %v4761, -inf
    %4867 = vmax.xlane.f32.xlu0 %v4866
    %v4868 = vpop.xlane.xlu0 %4867
    %v4869 = vsel %vm4808, %v4764, -inf
    %4870 = vmax.xlane.f32.xlu0 %v4869
    %v4871 = vpop.xlane.xlu0 %4870
    %v4872 = vsel %vm4808, %v4766, -inf
    %4873 = vmax.xlane.f32.xlu0 %v4872
    %v4874 = vpop.xlane.xlu0 %4873
    %v4875 = vsel %vm4808, %v4769, -inf
    %4876 = vmax.xlane.f32.xlu0 %v4875
    %v4877 = vpop.xlane.xlu0 %4876
    %v4878 = vsel %vm4808, %v4771, -inf
    %4879 = vmax.xlane.f32.xlu0 %v4878
    %v4880 = vpop.xlane.xlu0 %4879
    %v4881 = vsel %vm4808, %v4774, -inf
    %4882 = vmax.xlane.f32.xlu0 %v4881
    %v4883 = vpop.xlane.xlu0 %4882
    %v4884 = vsel %vm4808, %v4776, -inf
    %4885 = vmax.xlane.f32.xlu0 %v4884
    %v4886 = vpop.xlane.xlu0 %4885
    %v4887 = vsel %vm4808, %v4779, -inf
    %4888 = vmax.xlane.f32.xlu0 %v4887
    %v4889 = vpop.xlane.xlu0 %4888
    %v4890 = vsel %vm4808, %v4781, -inf
    %4891 = vmax.xlane.f32.xlu0 %v4890
    %v4892 = vpop.xlane.xlu0 %4891
    %v4893 = vsel %vm4808, %v4784, -inf
    %4894 = vmax.xlane.f32.xlu0 %v4893
    %v4895 = vpop.xlane.xlu0 %4894
    %v4896 = vsel %vm4808, %v4786, -inf
    %4897 = vmax.xlane.f32.xlu0 %v4896
    %v4898 = vpop.xlane.xlu0 %4897
    %v4899 = vsel %vm4808, %v4789, -inf
    %4900 = vmax.xlane.f32.xlu0 %v4899
    %v4901 = vpop.xlane.xlu0 %4900
    %v4902 = vsel %vm4808, %v4791, -inf
    %4903 = vmax.xlane.f32.xlu0 %v4902
    %v4904 = vpop.xlane.xlu0 %4903
    %v4905 = vsel %vm4808, %v4794, -inf
    %4906 = vmax.xlane.f32.xlu0 %v4905
    %v4907 = vpop.xlane.xlu0 %4906
    %v4908 = vsel %vm4808, %v4796, -inf
    %4909 = vmax.xlane.f32.xlu0 %v4908
    %v4910 = vpop.xlane.xlu0 %4909
    %v4911 = vsel %vm4808, %v4799, -inf
    %4912 = vmax.xlane.f32.xlu0 %v4911
    %v4913 = vpop.xlane.xlu0 %4912
    %v4914 = vsel %vm4808, %v4801, -inf
    %4915 = vmax.xlane.f32.xlu0 %v4914
    %v4916 = vpop.xlane.xlu0 %4915
    %v4917 = vsel %vm4808, %v4804, -inf
    %4918 = vmax.xlane.f32.xlu0 %v4917
    %v4919 = vpop.xlane.xlu0 %4918
    %v4920 = vsel %vm4808, %v4806, -inf
    %4921 = vmax.xlane.f32.xlu0 %v4920
    %v4922 = vpop.xlane.xlu0 %4921
    %v4923 = vsub.f32 %v4714, %v4811
    %v4924 = vsub.f32 %v4716, %v4814
    %v4925 = vsub.f32 %v4719, %v4817
    %v4926 = vsub.f32 %v4721, %v4820
    %v4927 = vsub.f32 %v4724, %v4823
    %v4928 = vsub.f32 %v4726, %v4826
    %v4929 = vsub.f32 %v4729, %v4829
    %v4930 = vsub.f32 %v4731, %v4832
    %v4931 = vsub.f32 %v4734, %v4835
    %v4932 = vsub.f32 %v4736, %v4838
    %v4933 = vsub.f32 %v4739, %v4841
    %v4934 = vsub.f32 %v4741, %v4844
    %v4935 = vsub.f32 %v4744, %v4847
    %v4936 = vsub.f32 %v4746, %v4850
    %v4937 = vsub.f32 %v4749, %v4853
    %v4938 = vsub.f32 %v4751, %v4856
    %v4939 = vsub.f32 %v4754, %v4859
    %v4940 = vsub.f32 %v4756, %v4862
    %v4941 = vsub.f32 %v4759, %v4865
    %v4942 = vsub.f32 %v4761, %v4868
    %v4943 = vsub.f32 %v4764, %v4871
    %v4944 = vsub.f32 %v4766, %v4874
    %v4945 = vsub.f32 %v4769, %v4877
    %v4946 = vsub.f32 %v4771, %v4880
    %v4947 = vsub.f32 %v4774, %v4883
    %v4948 = vsub.f32 %v4776, %v4886
    %v4949 = vsub.f32 %v4779, %v4889
    %v4950 = vsub.f32 %v4781, %v4892
    %v4951 = vsub.f32 %v4784, %v4895
    %v4952 = vsub.f32 %v4786, %v4898
    %v4953 = vsub.f32 %v4789, %v4901
    %v4954 = vsub.f32 %v4791, %v4904
    %v4955 = vsub.f32 %v4794, %v4907
    %v4956 = vsub.f32 %v4796, %v4910
    %v4957 = vsub.f32 %v4799, %v4913
    %v4958 = vsub.f32 %v4801, %v4916
    %v4959 = vsub.f32 %v4804, %v4919
    %v4960 = vsub.f32 %v4806, %v4922
    %v4961 = vmul.f32 %v4923, 1.442695
    %v4962 = vpow.pop %v4961
    %v4963 = vmul.f32 %v4924, 1.442695
    %v4964 = vpow.pop %v4963
    %v4965 = vmul.f32 %v4925, 1.442695
    %v4966 = vpow.pop %v4965
    %v4967 = vmul.f32 %v4926, 1.442695
    %v4968 = vpow.pop %v4967
    %v4969 = vmul.f32 %v4927, 1.442695
    %v4970 = vpow.pop %v4969
    %v4971 = vmul.f32 %v4928, 1.442695
    %v4972 = vpow.pop %v4971
    %v4973 = vmul.f32 %v4929, 1.442695
    %v4974 = vpow.pop %v4973
    %v4975 = vmul.f32 %v4930, 1.442695
    %v4976 = vpow.pop %v4975
    %v4977 = vmul.f32 %v4931, 1.442695
    %v4978 = vpow.pop %v4977
    %v4979 = vmul.f32 %v4932, 1.442695
    %v4980 = vpow.pop %v4979
    %v4981 = vmul.f32 %v4933, 1.442695
    %v4982 = vpow.pop %v4981
    %v4983 = vmul.f32 %v4934, 1.442695
    %v4984 = vpow.pop %v4983
    %v4985 = vmul.f32 %v4935, 1.442695
    %v4986 = vpow.pop %v4985
    %v4987 = vmul.f32 %v4936, 1.442695
    %v4988 = vpow.pop %v4987
    %v4989 = vmul.f32 %v4937, 1.442695
    %v4990 = vpow.pop %v4989
    %v4991 = vmul.f32 %v4938, 1.442695
    %v4992 = vpow.pop %v4991
    %v4993 = vmul.f32 %v4939, 1.442695
    %v4994 = vpow.pop %v4993
    %v4995 = vmul.f32 %v4940, 1.442695
    %v4996 = vpow.pop %v4995
    %v4997 = vmul.f32 %v4941, 1.442695
    %v4998 = vpow.pop %v4997
    %v4999 = vmul.f32 %v4942, 1.442695
    %v5000 = vpow.pop %v4999
    %v5001 = vmul.f32 %v4943, 1.442695
    %v5002 = vpow.pop %v5001
    %v5003 = vmul.f32 %v4944, 1.442695
    %v5004 = vpow.pop %v5003
    %v5005 = vmul.f32 %v4945, 1.442695
    %v5006 = vpow.pop %v5005
    %v5007 = vmul.f32 %v4946, 1.442695
    %v5008 = vpow.pop %v5007
    %v5009 = vmul.f32 %v4947, 1.442695
    %v5010 = vpow.pop %v5009
    %v5011 = vmul.f32 %v4948, 1.442695
    %v5012 = vpow.pop %v5011
    %v5013 = vmul.f32 %v4949, 1.442695
    %v5014 = vpow.pop %v5013
    %v5015 = vmul.f32 %v4950, 1.442695
    %v5016 = vpow.pop %v5015
    %v5017 = vmul.f32 %v4951, 1.442695
    %v5018 = vpow.pop %v5017
    %v5019 = vmul.f32 %v4952, 1.442695
    %v5020 = vpow.pop %v5019
    %v5021 = vmul.f32 %v4953, 1.442695
    %v5022 = vpow.pop %v5021
    %v5023 = vmul.f32 %v4954, 1.442695
    %v5024 = vpow.pop %v5023
    %v5025 = vmul.f32 %v4955, 1.442695
    %v5026 = vpow.pop %v5025
    %v5027 = vmul.f32 %v4956, 1.442695
    %v5028 = vpow.pop %v5027
    %v5029 = vmul.f32 %v4957, 1.442695
    %v5030 = vpow.pop %v5029
    %v5031 = vmul.f32 %v4958, 1.442695
    %v5032 = vpow.pop %v5031
    %v5033 = vmul.f32 %v4959, 1.442695
    %v5034 = vpow.pop %v5033
    %v5035 = vmul.f32 %v4960, 1.442695
    %v5036 = vpow.pop %v5035
    %v5037 = vsel %vm4808, %v4962, 0.0
    %5038 = vadd.xlane.f32.xlu0 %v5037
    %v5039 = vpop.xlane.xlu0 %5038
    %v5040 = vsel %vm4808, %v4964, 0.0
    %5041 = vadd.xlane.f32.xlu0 %v5040
    %v5042 = vpop.xlane.xlu0 %5041
    %v5043 = vsel %vm4808, %v4966, 0.0
    %5044 = vadd.xlane.f32.xlu0 %v5043
    %v5045 = vpop.xlane.xlu0 %5044
    %v5046 = vsel %vm4808, %v4968, 0.0
    %5047 = vadd.xlane.f32.xlu0 %v5046
    %v5048 = vpop.xlane.xlu0 %5047
    %v5049 = vsel %vm4808, %v4970, 0.0
    %5050 = vadd.xlane.f32.xlu0 %v5049
    %v5051 = vpop.xlane.xlu0 %5050
    %v5052 = vsel %vm4808, %v4972, 0.0
    %5053 = vadd.xlane.f32.xlu0 %v5052
    %v5054 = vpop.xlane.xlu0 %5053
    %v5055 = vsel %vm4808, %v4974, 0.0
    %5056 = vadd.xlane.f32.xlu0 %v5055
    %v5057 = vpop.xlane.xlu0 %5056
    %v5058 = vsel %vm4808, %v4976, 0.0
    %5059 = vadd.xlane.f32.xlu0 %v5058
    %v5060 = vpop.xlane.xlu0 %5059
    %v5061 = vsel %vm4808, %v4978, 0.0
    %5062 = vadd.xlane.f32.xlu0 %v5061
    %v5063 = vpop.xlane.xlu0 %5062
    %v5064 = vsel %vm4808, %v4980, 0.0
    %5065 = vadd.xlane.f32.xlu0 %v5064
    %v5066 = vpop.xlane.xlu0 %5065
    %v5067 = vsel %vm4808, %v4982, 0.0
    %5068 = vadd.xlane.f32.xlu0 %v5067
    %v5069 = vpop.xlane.xlu0 %5068
    %v5070 = vsel %vm4808, %v4984, 0.0
    %5071 = vadd.xlane.f32.xlu0 %v5070
    %v5072 = vpop.xlane.xlu0 %5071
    %v5073 = vsel %vm4808, %v4986, 0.0
    %5074 = vadd.xlane.f32.xlu0 %v5073
    %v5075 = vpop.xlane.xlu0 %5074
    %v5076 = vsel %vm4808, %v4988, 0.0
    %5077 = vadd.xlane.f32.xlu0 %v5076
    %v5078 = vpop.xlane.xlu0 %5077
    %v5079 = vsel %vm4808, %v4990, 0.0
    %5080 = vadd.xlane.f32.xlu0 %v5079
    %v5081 = vpop.xlane.xlu0 %5080
    %v5082 = vsel %vm4808, %v4992, 0.0
    %5083 = vadd.xlane.f32.xlu0 %v5082
    %v5084 = vpop.xlane.xlu0 %5083
    %v5085 = vsel %vm4808, %v4994, 0.0
    %5086 = vadd.xlane.f32.xlu0 %v5085
    %v5087 = vpop.xlane.xlu0 %5086
    %v5088 = vsel %vm4808, %v4996, 0.0
    %5089 = vadd.xlane.f32.xlu0 %v5088
    %v5090 = vpop.xlane.xlu0 %5089
    %v5091 = vsel %vm4808, %v4998, 0.0
    %5092 = vadd.xlane.f32.xlu0 %v5091
    %v5093 = vpop.xlane.xlu0 %5092
    %v5094 = vsel %vm4808, %v5000, 0.0
    %5095 = vadd.xlane.f32.xlu0 %v5094
    %v5096 = vpop.xlane.xlu0 %5095
    %v5097 = vsel %vm4808, %v5002, 0.0
    %5098 = vadd.xlane.f32.xlu0 %v5097
    %v5099 = vpop.xlane.xlu0 %5098
    %v5100 = vsel %vm4808, %v5004, 0.0
    %5101 = vadd.xlane.f32.xlu0 %v5100
    %v5102 = vpop.xlane.xlu0 %5101
    %v5103 = vsel %vm4808, %v5006, 0.0
    %5104 = vadd.xlane.f32.xlu0 %v5103
    %v5105 = vpop.xlane.xlu0 %5104
    %v5106 = vsel %vm4808, %v5008, 0.0
    %5107 = vadd.xlane.f32.xlu0 %v5106
    %v5108 = vpop.xlane.xlu0 %5107
    %v5109 = vsel %vm4808, %v5010, 0.0
    %5110 = vadd.xlane.f32.xlu0 %v5109
    %v5111 = vpop.xlane.xlu0 %5110
    %v5112 = vsel %vm4808, %v5012, 0.0
    %5113 = vadd.xlane.f32.xlu0 %v5112
    %v5114 = vpop.xlane.xlu0 %5113
    %v5115 = vsel %vm4808, %v5014, 0.0
    %5116 = vadd.xlane.f32.xlu0 %v5115
    %v5117 = vpop.xlane.xlu0 %5116
    %v5118 = vsel %vm4808, %v5016, 0.0
    %5119 = vadd.xlane.f32.xlu0 %v5118
    %v5120 = vpop.xlane.xlu0 %5119
    %v5121 = vsel %vm4808, %v5018, 0.0
    %5122 = vadd.xlane.f32.xlu0 %v5121
    %v5123 = vpop.xlane.xlu0 %5122
    %v5124 = vsel %vm4808, %v5020, 0.0
    %5125 = vadd.xlane.f32.xlu0 %v5124
    %v5126 = vpop.xlane.xlu0 %5125
    %v5127 = vsel %vm4808, %v5022, 0.0
    %5128 = vadd.xlane.f32.xlu0 %v5127
    %v5129 = vpop.xlane.xlu0 %5128
    %v5130 = vsel %vm4808, %v5024, 0.0
    %5131 = vadd.xlane.f32.xlu0 %v5130
    %v5132 = vpop.xlane.xlu0 %5131
    %v5133 = vsel %vm4808, %v5026, 0.0
    %5134 = vadd.xlane.f32.xlu0 %v5133
    %v5135 = vpop.xlane.xlu0 %5134
    %v5136 = vsel %vm4808, %v5028, 0.0
    %5137 = vadd.xlane.f32.xlu0 %v5136
    %v5138 = vpop.xlane.xlu0 %5137
    %v5139 = vsel %vm4808, %v5030, 0.0
    %5140 = vadd.xlane.f32.xlu0 %v5139
    %v5141 = vpop.xlane.xlu0 %5140
    %v5142 = vsel %vm4808, %v5032, 0.0
    %5143 = vadd.xlane.f32.xlu0 %v5142
    %v5144 = vpop.xlane.xlu0 %5143
    %v5145 = vsel %vm4808, %v5034, 0.0
    %5146 = vadd.xlane.f32.xlu0 %v5145
    %v5147 = vpop.xlane.xlu0 %5146
    %v5148 = vsel %vm4808, %v5036, 0.0
    %5149 = vadd.xlane.f32.xlu0 %v5148
    %v5150 = vpop.xlane.xlu0 %5149
    %v5151 = vrcp.pop %v5039
    %v5152 = vmul.f32 %v5039, %v5151
    %v5153 = vsub.f32 1.0, %v5152
    %v5154 = vmul.f32 %v5151, %v5153
    %v5155 = vadd.f32 %v5151, %v5154
    %vm5156 = vweird.f32 %v5039
    %vm5157 = vweird.f32 %v5151
    %vm5158 = vmor %vm5156, %vm5157
    %v5159 = vsel %vm5158, %v5151, %v5155
    %v5160 = vand.u32 2147483647, %v5039
    %vm5161 = vcmp.eq.f32.partialorder %v5160, 8.507059e+37
    %v5162 = vand.u32 %v5039, 2147483648
    %v5163 = vor.u32 1.1754944e-38, %v5162
    %v5164 = vsel %vm5161, %v5163, %v5159
    %v5165 = vmul.f32 %v4962, %v5164
    %v5166 = vrcp.pop %v5042
    %v5167 = vmul.f32 %v5042, %v5166
    %v5168 = vsub.f32 1.0, %v5167
    %v5169 = vmul.f32 %v5166, %v5168
    %v5170 = vadd.f32 %v5166, %v5169
    %vm5171 = vweird.f32 %v5042
    %vm5172 = vweird.f32 %v5166
    %vm5173 = vmor %vm5171, %vm5172
    %v5174 = vsel %vm5173, %v5166, %v5170
    %v5175 = vand.u32 2147483647, %v5042
    %vm5176 = vcmp.eq.f32.partialorder %v5175, 8.507059e+37
    %v5177 = vand.u32 %v5042, 2147483648
    %v5178 = vor.u32 1.1754944e-38, %v5177
    %v5179 = vsel %vm5176, %v5178, %v5174
    %v5180 = vmul.f32 %v4964, %v5179
    %v5181 = vrcp.pop %v5045
    %v5182 = vmul.f32 %v5045, %v5181
    %v5183 = vsub.f32 1.0, %v5182
    %v5184 = vmul.f32 %v5181, %v5183
    %v5185 = vadd.f32 %v5181, %v5184
    %vm5186 = vweird.f32 %v5045
    %vm5187 = vweird.f32 %v5181
    %vm5188 = vmor %vm5186, %vm5187
    %v5189 = vsel %vm5188, %v5181, %v5185
    %v5190 = vand.u32 2147483647, %v5045
    %vm5191 = vcmp.eq.f32.partialorder %v5190, 8.507059e+37
    %v5192 = vand.u32 %v5045, 2147483648
    %v5193 = vor.u32 1.1754944e-38, %v5192
    %v5194 = vsel %vm5191, %v5193, %v5189
    %v5195 = vmul.f32 %v4966, %v5194
    %v5196 = vrcp.pop %v5048
    %v5197 = vmul.f32 %v5048, %v5196
    %v5198 = vsub.f32 1.0, %v5197
    %v5199 = vmul.f32 %v5196, %v5198
    %v5200 = vadd.f32 %v5196, %v5199
    %vm5201 = vweird.f32 %v5048
    %vm5202 = vweird.f32 %v5196
    %vm5203 = vmor %vm5201, %vm5202
    %v5204 = vsel %vm5203, %v5196, %v5200
    %v5205 = vand.u32 2147483647, %v5048
    %vm5206 = vcmp.eq.f32.partialorder %v5205, 8.507059e+37
    %v5207 = vand.u32 %v5048, 2147483648
    %v5208 = vor.u32 1.1754944e-38, %v5207
    %v5209 = vsel %vm5206, %v5208, %v5204
    %v5210 = vmul.f32 %v4968, %v5209
    %v5211 = vrcp.pop %v5051
    %v5212 = vmul.f32 %v5051, %v5211
    %v5213 = vsub.f32 1.0, %v5212
    %v5214 = vmul.f32 %v5211, %v5213
    %v5215 = vadd.f32 %v5211, %v5214
    %vm5216 = vweird.f32 %v5051
    %vm5217 = vweird.f32 %v5211
    %vm5218 = vmor %vm5216, %vm5217
    %v5219 = vsel %vm5218, %v5211, %v5215
    %v5220 = vand.u32 2147483647, %v5051
    %vm5221 = vcmp.eq.f32.partialorder %v5220, 8.507059e+37
    %v5222 = vand.u32 %v5051, 2147483648
    %v5223 = vor.u32 1.1754944e-38, %v5222
    %v5224 = vsel %vm5221, %v5223, %v5219
    %v5225 = vmul.f32 %v4970, %v5224
    %v5226 = vrcp.pop %v5054
    %v5227 = vmul.f32 %v5054, %v5226
    %v5228 = vsub.f32 1.0, %v5227
    %v5229 = vmul.f32 %v5226, %v5228
    %v5230 = vadd.f32 %v5226, %v5229
    %vm5231 = vweird.f32 %v5054
    %vm5232 = vweird.f32 %v5226
    %vm5233 = vmor %vm5231, %vm5232
    %v5234 = vsel %vm5233, %v5226, %v5230
    %v5235 = vand.u32 2147483647, %v5054
    %vm5236 = vcmp.eq.f32.partialorder %v5235, 8.507059e+37
    %v5237 = vand.u32 %v5054, 2147483648
    %v5238 = vor.u32 1.1754944e-38, %v5237
    %v5239 = vsel %vm5236, %v5238, %v5234
    %v5240 = vmul.f32 %v4972, %v5239
    %v5241 = vrcp.pop %v5057
    %v5242 = vmul.f32 %v5057, %v5241
    %v5243 = vsub.f32 1.0, %v5242
    %v5244 = vmul.f32 %v5241, %v5243
    %v5245 = vadd.f32 %v5241, %v5244
    %vm5246 = vweird.f32 %v5057
    %vm5247 = vweird.f32 %v5241
    %vm5248 = vmor %vm5246, %vm5247
    %v5249 = vsel %vm5248, %v5241, %v5245
    %v5250 = vand.u32 2147483647, %v5057
    %vm5251 = vcmp.eq.f32.partialorder %v5250, 8.507059e+37
    %v5252 = vand.u32 %v5057, 2147483648
    %v5253 = vor.u32 1.1754944e-38, %v5252
    %v5254 = vsel %vm5251, %v5253, %v5249
    %v5255 = vmul.f32 %v4974, %v5254
    %v5256 = vrcp.pop %v5060
    %v5257 = vmul.f32 %v5060, %v5256
    %v5258 = vsub.f32 1.0, %v5257
    %v5259 = vmul.f32 %v5256, %v5258
    %v5260 = vadd.f32 %v5256, %v5259
    %vm5261 = vweird.f32 %v5060
    %vm5262 = vweird.f32 %v5256
    %vm5263 = vmor %vm5261, %vm5262
    %v5264 = vsel %vm5263, %v5256, %v5260
    %v5265 = vand.u32 2147483647, %v5060
    %vm5266 = vcmp.eq.f32.partialorder %v5265, 8.507059e+37
    %v5267 = vand.u32 %v5060, 2147483648
    %v5268 = vor.u32 1.1754944e-38, %v5267
    %v5269 = vsel %vm5266, %v5268, %v5264
    %v5270 = vmul.f32 %v4976, %v5269
    %v5271 = vrcp.pop %v5063
    %v5272 = vmul.f32 %v5063, %v5271
    %v5273 = vsub.f32 1.0, %v5272
    %v5274 = vmul.f32 %v5271, %v5273
    %v5275 = vadd.f32 %v5271, %v5274
    %vm5276 = vweird.f32 %v5063
    %vm5277 = vweird.f32 %v5271
    %vm5278 = vmor %vm5276, %vm5277
    %v5279 = vsel %vm5278, %v5271, %v5275
    %v5280 = vand.u32 2147483647, %v5063
    %vm5281 = vcmp.eq.f32.partialorder %v5280, 8.507059e+37
    %v5282 = vand.u32 %v5063, 2147483648
    %v5283 = vor.u32 1.1754944e-38, %v5282
    %v5284 = vsel %vm5281, %v5283, %v5279
    %v5285 = vmul.f32 %v4978, %v5284
    %v5286 = vrcp.pop %v5066
    %v5287 = vmul.f32 %v5066, %v5286
    %v5288 = vsub.f32 1.0, %v5287
    %v5289 = vmul.f32 %v5286, %v5288
    %v5290 = vadd.f32 %v5286, %v5289
    %vm5291 = vweird.f32 %v5066
    %vm5292 = vweird.f32 %v5286
    %vm5293 = vmor %vm5291, %vm5292
    %v5294 = vsel %vm5293, %v5286, %v5290
    %v5295 = vand.u32 2147483647, %v5066
    %vm5296 = vcmp.eq.f32.partialorder %v5295, 8.507059e+37
    %v5297 = vand.u32 %v5066, 2147483648
    %v5298 = vor.u32 1.1754944e-38, %v5297
    %v5299 = vsel %vm5296, %v5298, %v5294
    %v5300 = vmul.f32 %v4980, %v5299
    %v5301 = vrcp.pop %v5069
    %v5302 = vmul.f32 %v5069, %v5301
    %v5303 = vsub.f32 1.0, %v5302
    %v5304 = vmul.f32 %v5301, %v5303
    %v5305 = vadd.f32 %v5301, %v5304
    %vm5306 = vweird.f32 %v5069
    %vm5307 = vweird.f32 %v5301
    %vm5308 = vmor %vm5306, %vm5307
    %v5309 = vsel %vm5308, %v5301, %v5305
    %v5310 = vand.u32 2147483647, %v5069
    %vm5311 = vcmp.eq.f32.partialorder %v5310, 8.507059e+37
    %v5312 = vand.u32 %v5069, 2147483648
    %v5313 = vor.u32 1.1754944e-38, %v5312
    %v5314 = vsel %vm5311, %v5313, %v5309
    %v5315 = vmul.f32 %v4982, %v5314
    %v5316 = vrcp.pop %v5072
    %v5317 = vmul.f32 %v5072, %v5316
    %v5318 = vsub.f32 1.0, %v5317
    %v5319 = vmul.f32 %v5316, %v5318
    %v5320 = vadd.f32 %v5316, %v5319
    %vm5321 = vweird.f32 %v5072
    %vm5322 = vweird.f32 %v5316
    %vm5323 = vmor %vm5321, %vm5322
    %v5324 = vsel %vm5323, %v5316, %v5320
    %v5325 = vand.u32 2147483647, %v5072
    %vm5326 = vcmp.eq.f32.partialorder %v5325, 8.507059e+37
    %v5327 = vand.u32 %v5072, 2147483648
    %v5328 = vor.u32 1.1754944e-38, %v5327
    %v5329 = vsel %vm5326, %v5328, %v5324
    %v5330 = vmul.f32 %v4984, %v5329
    %v5331 = vrcp.pop %v5075
    %v5332 = vmul.f32 %v5075, %v5331
    %v5333 = vsub.f32 1.0, %v5332
    %v5334 = vmul.f32 %v5331, %v5333
    %v5335 = vadd.f32 %v5331, %v5334
    %vm5336 = vweird.f32 %v5075
    %vm5337 = vweird.f32 %v5331
    %vm5338 = vmor %vm5336, %vm5337
    %v5339 = vsel %vm5338, %v5331, %v5335
    %v5340 = vand.u32 2147483647, %v5075
    %vm5341 = vcmp.eq.f32.partialorder %v5340, 8.507059e+37
    %v5342 = vand.u32 %v5075, 2147483648
    %v5343 = vor.u32 1.1754944e-38, %v5342
    %v5344 = vsel %vm5341, %v5343, %v5339
    %v5345 = vmul.f32 %v4986, %v5344
    %v5346 = vrcp.pop %v5078
    %v5347 = vmul.f32 %v5078, %v5346
    %v5348 = vsub.f32 1.0, %v5347
    %v5349 = vmul.f32 %v5346, %v5348
    %v5350 = vadd.f32 %v5346, %v5349
    %vm5351 = vweird.f32 %v5078
    %vm5352 = vweird.f32 %v5346
    %vm5353 = vmor %vm5351, %vm5352
    %v5354 = vsel %vm5353, %v5346, %v5350
    %v5355 = vand.u32 2147483647, %v5078
    %vm5356 = vcmp.eq.f32.partialorder %v5355, 8.507059e+37
    %v5357 = vand.u32 %v5078, 2147483648
    %v5358 = vor.u32 1.1754944e-38, %v5357
    %v5359 = vsel %vm5356, %v5358, %v5354
    %v5360 = vmul.f32 %v4988, %v5359
    %v5361 = vrcp.pop %v5081
    %v5362 = vmul.f32 %v5081, %v5361
    %v5363 = vsub.f32 1.0, %v5362
    %v5364 = vmul.f32 %v5361, %v5363
    %v5365 = vadd.f32 %v5361, %v5364
    %vm5366 = vweird.f32 %v5081
    %vm5367 = vweird.f32 %v5361
    %vm5368 = vmor %vm5366, %vm5367
    %v5369 = vsel %vm5368, %v5361, %v5365
    %v5370 = vand.u32 2147483647, %v5081
    %vm5371 = vcmp.eq.f32.partialorder %v5370, 8.507059e+37
    %v5372 = vand.u32 %v5081, 2147483648
    %v5373 = vor.u32 1.1754944e-38, %v5372
    %v5374 = vsel %vm5371, %v5373, %v5369
    %v5375 = vmul.f32 %v4990, %v5374
    %v5376 = vrcp.pop %v5084
    %v5377 = vmul.f32 %v5084, %v5376
    %v5378 = vsub.f32 1.0, %v5377
    %v5379 = vmul.f32 %v5376, %v5378
    %v5380 = vadd.f32 %v5376, %v5379
    %vm5381 = vweird.f32 %v5084
    %vm5382 = vweird.f32 %v5376
    %vm5383 = vmor %vm5381, %vm5382
    %v5384 = vsel %vm5383, %v5376, %v5380
    %v5385 = vand.u32 2147483647, %v5084
    %vm5386 = vcmp.eq.f32.partialorder %v5385, 8.507059e+37
    %v5387 = vand.u32 %v5084, 2147483648
    %v5388 = vor.u32 1.1754944e-38, %v5387
    %v5389 = vsel %vm5386, %v5388, %v5384
    %v5390 = vmul.f32 %v4992, %v5389
    %v5391 = vrcp.pop %v5087
    %v5392 = vmul.f32 %v5087, %v5391
    %v5393 = vsub.f32 1.0, %v5392
    %v5394 = vmul.f32 %v5391, %v5393
    %v5395 = vadd.f32 %v5391, %v5394
    %vm5396 = vweird.f32 %v5087
    %vm5397 = vweird.f32 %v5391
    %vm5398 = vmor %vm5396, %vm5397
    %v5399 = vsel %vm5398, %v5391, %v5395
    %v5400 = vand.u32 2147483647, %v5087
    %vm5401 = vcmp.eq.f32.partialorder %v5400, 8.507059e+37
    %v5402 = vand.u32 %v5087, 2147483648
    %v5403 = vor.u32 1.1754944e-38, %v5402
    %v5404 = vsel %vm5401, %v5403, %v5399
    %v5405 = vmul.f32 %v4994, %v5404
    %v5406 = vrcp.pop %v5090
    %v5407 = vmul.f32 %v5090, %v5406
    %v5408 = vsub.f32 1.0, %v5407
    %v5409 = vmul.f32 %v5406, %v5408
    %v5410 = vadd.f32 %v5406, %v5409
    %vm5411 = vweird.f32 %v5090
    %vm5412 = vweird.f32 %v5406
    %vm5413 = vmor %vm5411, %vm5412
    %v5414 = vsel %vm5413, %v5406, %v5410
    %v5415 = vand.u32 2147483647, %v5090
    %vm5416 = vcmp.eq.f32.partialorder %v5415, 8.507059e+37
    %v5417 = vand.u32 %v5090, 2147483648
    %v5418 = vor.u32 1.1754944e-38, %v5417
    %v5419 = vsel %vm5416, %v5418, %v5414
    %v5420 = vmul.f32 %v4996, %v5419
    %v5421 = vrcp.pop %v5093
    %v5422 = vmul.f32 %v5093, %v5421
    %v5423 = vsub.f32 1.0, %v5422
    %v5424 = vmul.f32 %v5421, %v5423
    %v5425 = vadd.f32 %v5421, %v5424
    %vm5426 = vweird.f32 %v5093
    %vm5427 = vweird.f32 %v5421
    %vm5428 = vmor %vm5426, %vm5427
    %v5429 = vsel %vm5428, %v5421, %v5425
    %v5430 = vand.u32 2147483647, %v5093
    %vm5431 = vcmp.eq.f32.partialorder %v5430, 8.507059e+37
    %v5432 = vand.u32 %v5093, 2147483648
    %v5433 = vor.u32 1.1754944e-38, %v5432
    %v5434 = vsel %vm5431, %v5433, %v5429
    %v5435 = vmul.f32 %v4998, %v5434
    %v5436 = vrcp.pop %v5096
    %v5437 = vmul.f32 %v5096, %v5436
    %v5438 = vsub.f32 1.0, %v5437
    %v5439 = vmul.f32 %v5436, %v5438
    %v5440 = vadd.f32 %v5436, %v5439
    %vm5441 = vweird.f32 %v5096
    %vm5442 = vweird.f32 %v5436
    %vm5443 = vmor %vm5441, %vm5442
    %v5444 = vsel %vm5443, %v5436, %v5440
    %v5445 = vand.u32 2147483647, %v5096
    %vm5446 = vcmp.eq.f32.partialorder %v5445, 8.507059e+37
    %v5447 = vand.u32 %v5096, 2147483648
    %v5448 = vor.u32 1.1754944e-38, %v5447
    %v5449 = vsel %vm5446, %v5448, %v5444
    %v5450 = vmul.f32 %v5000, %v5449
    %v5451 = vrcp.pop %v5099
    %v5452 = vmul.f32 %v5099, %v5451
    %v5453 = vsub.f32 1.0, %v5452
    %v5454 = vmul.f32 %v5451, %v5453
    %v5455 = vadd.f32 %v5451, %v5454
    %vm5456 = vweird.f32 %v5099
    %vm5457 = vweird.f32 %v5451
    %vm5458 = vmor %vm5456, %vm5457
    %v5459 = vsel %vm5458, %v5451, %v5455
    %v5460 = vand.u32 2147483647, %v5099
    %vm5461 = vcmp.eq.f32.partialorder %v5460, 8.507059e+37
    %v5462 = vand.u32 %v5099, 2147483648
    %v5463 = vor.u32 1.1754944e-38, %v5462
    %v5464 = vsel %vm5461, %v5463, %v5459
    %v5465 = vmul.f32 %v5002, %v5464
    %v5466 = vrcp.pop %v5102
    %v5467 = vmul.f32 %v5102, %v5466
    %v5468 = vsub.f32 1.0, %v5467
    %v5469 = vmul.f32 %v5466, %v5468
    %v5470 = vadd.f32 %v5466, %v5469
    %vm5471 = vweird.f32 %v5102
    %vm5472 = vweird.f32 %v5466
    %vm5473 = vmor %vm5471, %vm5472
    %v5474 = vsel %vm5473, %v5466, %v5470
    %v5475 = vand.u32 2147483647, %v5102
    %vm5476 = vcmp.eq.f32.partialorder %v5475, 8.507059e+37
    %v5477 = vand.u32 %v5102, 2147483648
    %v5478 = vor.u32 1.1754944e-38, %v5477
    %v5479 = vsel %vm5476, %v5478, %v5474
    %v5480 = vmul.f32 %v5004, %v5479
    %v5481 = vrcp.pop %v5105
    %v5482 = vmul.f32 %v5105, %v5481
    %v5483 = vsub.f32 1.0, %v5482
    %v5484 = vmul.f32 %v5481, %v5483
    %v5485 = vadd.f32 %v5481, %v5484
    %vm5486 = vweird.f32 %v5105
    %vm5487 = vweird.f32 %v5481
    %vm5488 = vmor %vm5486, %vm5487
    %v5489 = vsel %vm5488, %v5481, %v5485
    %v5490 = vand.u32 2147483647, %v5105
    %vm5491 = vcmp.eq.f32.partialorder %v5490, 8.507059e+37
    %v5492 = vand.u32 %v5105, 2147483648
    %v5493 = vor.u32 1.1754944e-38, %v5492
    %v5494 = vsel %vm5491, %v5493, %v5489
    %v5495 = vmul.f32 %v5006, %v5494
    %v5496 = vrcp.pop %v5108
    %v5497 = vmul.f32 %v5108, %v5496
    %v5498 = vsub.f32 1.0, %v5497
    %v5499 = vmul.f32 %v5496, %v5498
    %v5500 = vadd.f32 %v5496, %v5499
    %vm5501 = vweird.f32 %v5108
    %vm5502 = vweird.f32 %v5496
    %vm5503 = vmor %vm5501, %vm5502
    %v5504 = vsel %vm5503, %v5496, %v5500
    %v5505 = vand.u32 2147483647, %v5108
    %vm5506 = vcmp.eq.f32.partialorder %v5505, 8.507059e+37
    %v5507 = vand.u32 %v5108, 2147483648
    %v5508 = vor.u32 1.1754944e-38, %v5507
    %v5509 = vsel %vm5506, %v5508, %v5504
    %v5510 = vmul.f32 %v5008, %v5509
    %v5511 = vrcp.pop %v5111
    %v5512 = vmul.f32 %v5111, %v5511
    %v5513 = vsub.f32 1.0, %v5512
    %v5514 = vmul.f32 %v5511, %v5513
    %v5515 = vadd.f32 %v5511, %v5514
    %vm5516 = vweird.f32 %v5111
    %vm5517 = vweird.f32 %v5511
    %vm5518 = vmor %vm5516, %vm5517
    %v5519 = vsel %vm5518, %v5511, %v5515
    %v5520 = vand.u32 2147483647, %v5111
    %vm5521 = vcmp.eq.f32.partialorder %v5520, 8.507059e+37
    %v5522 = vand.u32 %v5111, 2147483648
    %v5523 = vor.u32 1.1754944e-38, %v5522
    %v5524 = vsel %vm5521, %v5523, %v5519
    %v5525 = vmul.f32 %v5010, %v5524
    %v5526 = vrcp.pop %v5114
    %v5527 = vmul.f32 %v5114, %v5526
    %v5528 = vsub.f32 1.0, %v5527
    %v5529 = vmul.f32 %v5526, %v5528
    %v5530 = vadd.f32 %v5526, %v5529
    %vm5531 = vweird.f32 %v5114
    %vm5532 = vweird.f32 %v5526
    %vm5533 = vmor %vm5531, %vm5532
    %v5534 = vsel %vm5533, %v5526, %v5530
    %v5535 = vand.u32 2147483647, %v5114
    %vm5536 = vcmp.eq.f32.partialorder %v5535, 8.507059e+37
    %v5537 = vand.u32 %v5114, 2147483648
    %v5538 = vor.u32 1.1754944e-38, %v5537
    %v5539 = vsel %vm5536, %v5538, %v5534
    %v5540 = vmul.f32 %v5012, %v5539
    %v5541 = vrcp.pop %v5117
    %v5542 = vmul.f32 %v5117, %v5541
    %v5543 = vsub.f32 1.0, %v5542
    %v5544 = vmul.f32 %v5541, %v5543
    %v5545 = vadd.f32 %v5541, %v5544
    %vm5546 = vweird.f32 %v5117
    %vm5547 = vweird.f32 %v5541
    %vm5548 = vmor %vm5546, %vm5547
    %v5549 = vsel %vm5548, %v5541, %v5545
    %v5550 = vand.u32 2147483647, %v5117
    %vm5551 = vcmp.eq.f32.partialorder %v5550, 8.507059e+37
    %v5552 = vand.u32 %v5117, 2147483648
    %v5553 = vor.u32 1.1754944e-38, %v5552
    %v5554 = vsel %vm5551, %v5553, %v5549
    %v5555 = vmul.f32 %v5014, %v5554
    %v5556 = vrcp.pop %v5120
    %v5557 = vmul.f32 %v5120, %v5556
    %v5558 = vsub.f32 1.0, %v5557
    %v5559 = vmul.f32 %v5556, %v5558
    %v5560 = vadd.f32 %v5556, %v5559
    %vm5561 = vweird.f32 %v5120
    %vm5562 = vweird.f32 %v5556
    %vm5563 = vmor %vm5561, %vm5562
    %v5564 = vsel %vm5563, %v5556, %v5560
    %v5565 = vand.u32 2147483647, %v5120
    %vm5566 = vcmp.eq.f32.partialorder %v5565, 8.507059e+37
    %v5567 = vand.u32 %v5120, 2147483648
    %v5568 = vor.u32 1.1754944e-38, %v5567
    %v5569 = vsel %vm5566, %v5568, %v5564
    %v5570 = vmul.f32 %v5016, %v5569
    %v5571 = vrcp.pop %v5123
    %v5572 = vmul.f32 %v5123, %v5571
    %v5573 = vsub.f32 1.0, %v5572
    %v5574 = vmul.f32 %v5571, %v5573
    %v5575 = vadd.f32 %v5571, %v5574
    %vm5576 = vweird.f32 %v5123
    %vm5577 = vweird.f32 %v5571
    %vm5578 = vmor %vm5576, %vm5577
    %v5579 = vsel %vm5578, %v5571, %v5575
    %v5580 = vand.u32 2147483647, %v5123
    %vm5581 = vcmp.eq.f32.partialorder %v5580, 8.507059e+37
    %v5582 = vand.u32 %v5123, 2147483648
    %v5583 = vor.u32 1.1754944e-38, %v5582
    %v5584 = vsel %vm5581, %v5583, %v5579
    %v5585 = vmul.f32 %v5018, %v5584
    %v5586 = vrcp.pop %v5126
    %v5587 = vmul.f32 %v5126, %v5586
    %v5588 = vsub.f32 1.0, %v5587
    %v5589 = vmul.f32 %v5586, %v5588
    %v5590 = vadd.f32 %v5586, %v5589
    %vm5591 = vweird.f32 %v5126
    %vm5592 = vweird.f32 %v5586
    %vm5593 = vmor %vm5591, %vm5592
    %v5594 = vsel %vm5593, %v5586, %v5590
    %v5595 = vand.u32 2147483647, %v5126
    %vm5596 = vcmp.eq.f32.partialorder %v5595, 8.507059e+37
    %v5597 = vand.u32 %v5126, 2147483648
    %v5598 = vor.u32 1.1754944e-38, %v5597
    %v5599 = vsel %vm5596, %v5598, %v5594
    %v5600 = vmul.f32 %v5020, %v5599
    %v5601 = vrcp.pop %v5129
    %v5602 = vmul.f32 %v5129, %v5601
    %v5603 = vsub.f32 1.0, %v5602
    %v5604 = vmul.f32 %v5601, %v5603
    %v5605 = vadd.f32 %v5601, %v5604
    %vm5606 = vweird.f32 %v5129
    %vm5607 = vweird.f32 %v5601
    %vm5608 = vmor %vm5606, %vm5607
    %v5609 = vsel %vm5608, %v5601, %v5605
    %v5610 = vand.u32 2147483647, %v5129
    %vm5611 = vcmp.eq.f32.partialorder %v5610, 8.507059e+37
    %v5612 = vand.u32 %v5129, 2147483648
    %v5613 = vor.u32 1.1754944e-38, %v5612
    %v5614 = vsel %vm5611, %v5613, %v5609
    %v5615 = vmul.f32 %v5022, %v5614
    %v5616 = vrcp.pop %v5132
    %v5617 = vmul.f32 %v5132, %v5616
    %v5618 = vsub.f32 1.0, %v5617
    %v5619 = vmul.f32 %v5616, %v5618
    %v5620 = vadd.f32 %v5616, %v5619
    %vm5621 = vweird.f32 %v5132
    %vm5622 = vweird.f32 %v5616
    %vm5623 = vmor %vm5621, %vm5622
    %v5624 = vsel %vm5623, %v5616, %v5620
    %v5625 = vand.u32 2147483647, %v5132
    %vm5626 = vcmp.eq.f32.partialorder %v5625, 8.507059e+37
    %v5627 = vand.u32 %v5132, 2147483648
    %v5628 = vor.u32 1.1754944e-38, %v5627
    %v5629 = vsel %vm5626, %v5628, %v5624
    %v5630 = vmul.f32 %v5024, %v5629
    %v5631 = vrcp.pop %v5135
    %v5632 = vmul.f32 %v5135, %v5631
    %v5633 = vsub.f32 1.0, %v5632
    %v5634 = vmul.f32 %v5631, %v5633
    %v5635 = vadd.f32 %v5631, %v5634
    %vm5636 = vweird.f32 %v5135
    %vm5637 = vweird.f32 %v5631
    %vm5638 = vmor %vm5636, %vm5637
    %v5639 = vsel %vm5638, %v5631, %v5635
    %v5640 = vand.u32 2147483647, %v5135
    %vm5641 = vcmp.eq.f32.partialorder %v5640, 8.507059e+37
    %v5642 = vand.u32 %v5135, 2147483648
    %v5643 = vor.u32 1.1754944e-38, %v5642
    %v5644 = vsel %vm5641, %v5643, %v5639
    %v5645 = vmul.f32 %v5026, %v5644
    %v5646 = vrcp.pop %v5138
    %v5647 = vmul.f32 %v5138, %v5646
    %v5648 = vsub.f32 1.0, %v5647
    %v5649 = vmul.f32 %v5646, %v5648
    %v5650 = vadd.f32 %v5646, %v5649
    %vm5651 = vweird.f32 %v5138
    %vm5652 = vweird.f32 %v5646
    %vm5653 = vmor %vm5651, %vm5652
    %v5654 = vsel %vm5653, %v5646, %v5650
    %v5655 = vand.u32 2147483647, %v5138
    %vm5656 = vcmp.eq.f32.partialorder %v5655, 8.507059e+37
    %v5657 = vand.u32 %v5138, 2147483648
    %v5658 = vor.u32 1.1754944e-38, %v5657
    %v5659 = vsel %vm5656, %v5658, %v5654
    %v5660 = vmul.f32 %v5028, %v5659
    %v5661 = vrcp.pop %v5141
    %v5662 = vmul.f32 %v5141, %v5661
    %v5663 = vsub.f32 1.0, %v5662
    %v5664 = vmul.f32 %v5661, %v5663
    %v5665 = vadd.f32 %v5661, %v5664
    %vm5666 = vweird.f32 %v5141
    %vm5667 = vweird.f32 %v5661
    %vm5668 = vmor %vm5666, %vm5667
    %v5669 = vsel %vm5668, %v5661, %v5665
    %v5670 = vand.u32 2147483647, %v5141
    %vm5671 = vcmp.eq.f32.partialorder %v5670, 8.507059e+37
    %v5672 = vand.u32 %v5141, 2147483648
    %v5673 = vor.u32 1.1754944e-38, %v5672
    %v5674 = vsel %vm5671, %v5673, %v5669
    %v5675 = vmul.f32 %v5030, %v5674
    %v5676 = vrcp.pop %v5144
    %v5677 = vmul.f32 %v5144, %v5676
    %v5678 = vsub.f32 1.0, %v5677
    %v5679 = vmul.f32 %v5676, %v5678
    %v5680 = vadd.f32 %v5676, %v5679
    %vm5681 = vweird.f32 %v5144
    %vm5682 = vweird.f32 %v5676
    %vm5683 = vmor %vm5681, %vm5682
    %v5684 = vsel %vm5683, %v5676, %v5680
    %v5685 = vand.u32 2147483647, %v5144
    %vm5686 = vcmp.eq.f32.partialorder %v5685, 8.507059e+37
    %v5687 = vand.u32 %v5144, 2147483648
    %v5688 = vor.u32 1.1754944e-38, %v5687
    %v5689 = vsel %vm5686, %v5688, %v5684
    %v5690 = vmul.f32 %v5032, %v5689
    %v5691 = vrcp.pop %v5147
    %v5692 = vmul.f32 %v5147, %v5691
    %v5693 = vsub.f32 1.0, %v5692
    %v5694 = vmul.f32 %v5691, %v5693
    %v5695 = vadd.f32 %v5691, %v5694
    %vm5696 = vweird.f32 %v5147
    %vm5697 = vweird.f32 %v5691
    %vm5698 = vmor %vm5696, %vm5697
    %v5699 = vsel %vm5698, %v5691, %v5695
    %v5700 = vand.u32 2147483647, %v5147
    %vm5701 = vcmp.eq.f32.partialorder %v5700, 8.507059e+37
    %v5702 = vand.u32 %v5147, 2147483648
    %v5703 = vor.u32 1.1754944e-38, %v5702
    %v5704 = vsel %vm5701, %v5703, %v5699
    %v5705 = vmul.f32 %v5034, %v5704
    %v5706 = vrcp.pop %v5150
    %v5707 = vmul.f32 %v5150, %v5706
    %v5708 = vsub.f32 1.0, %v5707
    %v5709 = vmul.f32 %v5706, %v5708
    %v5710 = vadd.f32 %v5706, %v5709
    %vm5711 = vweird.f32 %v5150
    %vm5712 = vweird.f32 %v5706
    %vm5713 = vmor %vm5711, %vm5712
    %v5714 = vsel %vm5713, %v5706, %v5710
    %v5715 = vand.u32 2147483647, %v5150
    %vm5716 = vcmp.eq.f32.partialorder %v5715, 8.507059e+37
    %v5717 = vand.u32 %v5150, 2147483648
    %v5718 = vor.u32 1.1754944e-38, %v5717
    %v5719 = vsel %vm5716, %v5718, %v5714
    %v5720 = vmul.f32 %v5036, %v5719
    %5721 = vst.msk [vmem:[%s9] sm:$0xff] %vm4808, %v5165
    %5722 = vst.msk [vmem:[%s9 + $0x8] sm:$0xff] %vm4808, %v5180
    %5723 = vst.msk [vmem:[%s9 + $0x10] sm:$0xff] %vm4808, %v5195
    %5724 = vst.msk [vmem:[%s9 + $0x18] sm:$0xff] %vm4808, %v5210
    %5725 = vst.msk [vmem:[%s9 + $0x20] sm:$0xff] %vm4808, %v5225
    %5726 = vst.msk [vmem:[%s9 + $0x28] sm:$0xff] %vm4808, %v5240
    %5727 = vst.msk [vmem:[%s9 + $0x30] sm:$0xff] %vm4808, %v5255
    %5728 = vst.msk [vmem:[%s9 + $0x38] sm:$0xff] %vm4808, %v5270
    %5729 = vst.msk [vmem:[%s9 + $0x40] sm:$0xff] %vm4808, %v5285
    %5730 = vst.msk [vmem:[%s9 + $0x48] sm:$0xff] %vm4808, %v5300
    %5731 = vst.msk [vmem:[%s9 + $0x50] sm:$0xff] %vm4808, %v5315
    %5732 = vst.msk [vmem:[%s9 + $0x58] sm:$0xff] %vm4808, %v5330
    %5733 = vst.msk [vmem:[%s9 + $0x60] sm:$0xff] %vm4808, %v5345
    %5734 = vst.msk [vmem:[%s9 + $0x68] sm:$0xff] %vm4808, %v5360
    %5735 = vst.msk [vmem:[%s9 + $0x70] sm:$0xff] %vm4808, %v5375
    %5736 = vst.msk [vmem:[%s9 + $0x78] sm:$0xff] %vm4808, %v5390
    %5737 = vst.msk [vmem:[%s9 + $0x80] sm:$0xff] %vm4808, %v5405
    %5738 = vst.msk [vmem:[%s9 + $0x88] sm:$0xff] %vm4808, %v5420
    %5739 = vst.msk [vmem:[%s9 + $0x90] sm:$0xff] %vm4808, %v5435
    %5740 = vst.msk [vmem:[%s9 + $0x98] sm:$0xff] %vm4808, %v5450
    %5741 = vst.msk [vmem:[%s9 + $0xa0] sm:$0xff] %vm4808, %v5465
    %5742 = vst.msk [vmem:[%s9 + $0xa8] sm:$0xff] %vm4808, %v5480
    %5743 = vst.msk [vmem:[%s9 + $0xb0] sm:$0xff] %vm4808, %v5495
    %5744 = vst.msk [vmem:[%s9 + $0xb8] sm:$0xff] %vm4808, %v5510
    %5745 = vst.msk [vmem:[%s9 + $0xc0] sm:$0xff] %vm4808, %v5525
    %5746 = vst.msk [vmem:[%s9 + $0xc8] sm:$0xff] %vm4808, %v5540
    %5747 = vst.msk [vmem:[%s9 + $0xd0] sm:$0xff] %vm4808, %v5555
    %5748 = vst.msk [vmem:[%s9 + $0xd8] sm:$0xff] %vm4808, %v5570
    %5749 = vst.msk [vmem:[%s9 + $0xe0] sm:$0xff] %vm4808, %v5585
    %5750 = vst.msk [vmem:[%s9 + $0xe8] sm:$0xff] %vm4808, %v5600
    %5751 = vst.msk [vmem:[%s9 + $0xf0] sm:$0xff] %vm4808, %v5615
    %5752 = vst.msk [vmem:[%s9 + $0xf8] sm:$0xff] %vm4808, %v5630
    %5753 = vst.msk [vmem:[%s9 + $0x100] sm:$0xff] %vm4808, %v5645
    %5754 = vst.msk [vmem:[%s9 + $0x108] sm:$0xff] %vm4808, %v5660
    %5755 = vst.msk [vmem:[%s9 + $0x110] sm:$0xff] %vm4808, %v5675
    %5756 = vst.msk [vmem:[%s9 + $0x118] sm:$0xff] %vm4808, %v5690
    %5757 = vst.msk [vmem:[%s9 + $0x120] sm:$0xff] %vm4808, %v5705
    %5758 = vst.msk [vmem:[%s9 + $0x128] sm:$0xff] %vm4808, %v5720
    // Predicated region
    $region42: #{tpu_custom_call.1} parent=1 // pred_check
      _
    $region43: #{tpu_custom_call.1} parent=1 // pred_check_branch
      %5760 = sbr.rel (0) target = $region45
    $region44: #{tpu_custom_call.1} parent=1 // pred_region
      _
    $region45: #{tpu_custom_call.1} parent=1 // pred_fallthru
      _
    // Predicated region
    $region46: #{tpu_custom_call.1} parent=1 // pred_check
      _
    $region47: #{tpu_custom_call.1} parent=1 // pred_check_branch
      %5762 = sbr.rel (0) target = $region49
    $region48: #{tpu_custom_call.1} parent=1 // pred_region
      _
    $region49: #{tpu_custom_call.1} parent=1 // pred_fallthru
      _
    %5763 = vsyncpa [#allocation3], 1

</llo_original>
